<compile_context>
chip_gen: v7x
topology: tpu7x:2x2x1
jax: 0.10.0
libtpu: 0.0.40
codegen_flags: <defaults>
</compile_context>

<pallas_src>
import math

import jax
import jax.numpy as jnp
from jax.experimental import pallas as pl
from jax.experimental.pallas import tpu as pltpu

INV_SQRT2 = 0.7071067811865476
_LANE = 128

# Abramowitz & Stegun 7.1.26 erf constants (|err| < 1.5e-7).
_A1, _A2, _A3, _A4, _A5 = 0.254829592, -0.284496736, 1.421413741, -1.453152027, 1.061405429
_P = 0.3275911


def _round_up(x, m):
    return (x + m - 1) // m * m


# ---------------------------------------------------------------- numerics --

_PRECISION_CACHE = None


def _matmul_precision():
    """lax.Precision.HIGHEST if the Mosaic dot lowering accepts the precision
    kwarg (pins f32 numerics across v5e/v6e/v7x), else None (backend default).
    Probed once with a tiny kernel so an unsupported kwarg cannot break the
    real kernels."""
    global _PRECISION_CACHE
    if _PRECISION_CACHE is None:
        def probe(a_ref, b_ref, o_ref):
            o_ref[...] = jnp.dot(a_ref[...], b_ref[...],
                                 preferred_element_type=jnp.float32,
                                 precision=jax.lax.Precision.HIGHEST)
        try:
            a = jnp.zeros((_LANE, _LANE), jnp.float32)
            jax.block_until_ready(
                pl.pallas_call(
                    probe,
                    out_shape=jax.ShapeDtypeStruct((_LANE, _LANE), jnp.float32),
                )(a, a))
            _PRECISION_CACHE = jax.lax.Precision.HIGHEST
        except Exception:  # precision kwarg unsupported on this jax version
            _PRECISION_CACHE = False
    return _PRECISION_CACHE or None


def _gelu_exact(y):
    """Exact (erf-based) GELU matching torch.nn.GELU() default.

    The reciprocal runs on the EUP (approx vrcp) and is refined with one
    Newton step on the VPU, so the epilogue has no VALU divide sequence."""
    x = y * INV_SQRT2
    ax = jnp.abs(x)
    ex = jnp.exp(-ax * ax)                        # EUP
    sgn = jnp.where(x >= 0.0, 1.0, -1.0)
    d = 1.0 + _P * ax
    t0 = pl.reciprocal(d, approx=True)            # EUP
    t = t0 * (2.0 - d * t0)                       # Newton refine -> ~f32 accuracy
    poly = ((((_A5 * t + _A4) * t + _A3) * t + _A2) * t + _A1) * t
    erf = sgn * (1.0 - poly * ex)
    return 0.5 * y * (1.0 + erf)


def _expansion_matrix(tm, s, dtype=jnp.float32):
    """(tm, tm >> s) 0/1 matrix E with E[r, j] = (r >> s == j).

    E @ x implements repeat_interleave(x, 2**s, axis=0) on a row tile exactly
    (single nonzero per output row).  Built ONCE in the wrapper and kept
    VMEM-resident via a constant index_map — the kernel no longer spends
    per-step VALU ops / VMEM churn rebuilding it from iotas."""
    k = 1 << s
    out_row = jax.lax.broadcasted_iota(jnp.int32, (tm, tm >> s), 0)
    in_row = jax.lax.broadcasted_iota(jnp.int32, (tm, tm >> s), 1)
    return ((out_row // k) == in_row).astype(dtype)


# ---------------------------------------------------------------- kernels ---

def _make_concat_kernel(num_scales, fp, prec):
    n_e = num_scales - 1

    def kernel(*refs):
        x_refs = refs[:num_scales]
        e_refs = refs[num_scales:num_scales + n_e]
        w_ref, b_ref, o_ref = refs[num_scales + n_e:num_scales + n_e + 3]

        # scale 0 at native resolution: (tm, Fp) @ (Fp, Fp)
        acc = jnp.dot(x_refs[0][...], w_ref[0:fp, :],
                      preferred_element_type=jnp.float32, precision=prec)
        # coarser scales: project at COARSE resolution, then expand rows with
        # the resident 0/1 matrix (MXU work per scale: (tm>>s)*Fp^2, not tm*Fp^2).
        for s in range(1, num_scales):
            y_s = jnp.dot(x_refs[s][...], w_ref[s * fp:(s + 1) * fp, :],
                          preferred_element_type=jnp.float32, precision=prec)
            acc = acc + jnp.dot(e_refs[s - 1][...], y_s,
                                preferred_element_type=jnp.float32, precision=prec)
        y = acc + b_ref[...].astype(jnp.float32)
        o_ref[...] = _gelu_exact(y).astype(o_ref.dtype)

    return kernel


def _make_weighted_kernel(num_scales, prec):
    n_e = num_scales - 1

    def kernel(*refs):
        w_ref = refs[0]                              # SMEM (num_scales,) softmax weights
        x_refs = refs[1:1 + num_scales]
        e_refs = refs[1 + num_scales:1 + num_scales + n_e]
        o_ref = refs[1 + num_scales + n_e]

        acc = w_ref[0] * x_refs[0][...].astype(jnp.float32)
        for s in range(1, num_scales):
            # scale at COARSE resolution (2**s fewer VPU multiplies), then
            # expand with the resident 0/1 matrix on the otherwise idle MXU.
            xs = w_ref[s] * x_refs[s][...].astype(jnp.float32)
            acc = acc + jnp.dot(e_refs[s - 1][...], xs,
                                preferred_element_type=jnp.float32, precision=prec)
        o_ref[...] = acc.astype(o_ref.dtype)

    return kernel


# ------------------------------------------------------------------- glue ---

def _pick_row_tile(rows, num_scales, max_rows=1024, min_steps=8, min_rows=256):
    """Pick the per-step row tile.

    Hard constraints: multiple of 8 * 2**(num_scales-1) (keeps every coarse
    block >= 8 sublanes and the >>s row map exact) and divides rows.
    Preferences (highest first): tiles >= min_rows AND >= min_steps grid steps
    with an even count (double-buffered pipelining + even v7x 2-TC split),
    then relax evenness, then relax the size floor, then the largest divisor."""
    base = 8 * (1 << (num_scales - 1))
    if rows % base != 0:
        raise ValueError(
            f"batch*seq_len={rows} must be divisible by {base} "
            f"(= 8 * 2**(num_scales-1)); no ragged-tail path is implemented")
    limit = max(min(max_rows, rows), base)
    cands = [t for t in range(base, limit + 1, base) if rows % t == 0]

    def steps(t):
        return rows // t

    for need_big, need_steps, need_even in (
            (True, True, True), (True, True, False),
            (False, True, True), (False, True, False),
            (True, False, False), (False, False, False)):
        sel = [t for t in cands
               if (not need_big or t >= min_rows)
               and (not need_steps or steps(t) >= min_steps)
               and (not need_even or steps(t) % 2 == 0)]
        if sel:
            return sel[-1]          # largest qualifying tile
    return cands[-1]


class TimeScaleFusion:
    """JAX/Pallas port of the PyTorch TimeScaleFusion module (forward only)."""

    def __init__(self, num_scales, feature_dim, method="concat", key=None,
                 row_tile=1024, vmem_limit_bytes=None):
        # row_tile: cap on rows per grid step.  The actual tile is chosen per
        # call so there are enough grid steps for pipelining / megacore while
        # staying lane-dense.  vmem_limit_bytes=None -> computed per call from
        # the actual block bytes.
        self.num_scales = num_scales
        self.feature_dim = feature_dim
        self.method = method
        self.row_tile = row_tile
        self.vmem_limit_bytes = vmem_limit_bytes
        if key is None:
            key = jax.random.PRNGKey(0)

        if method == "concat":
            # nn.Linear(feature_dim * num_scales, feature_dim).
            # Deterministic 0.02*normal init (not torch's kaiming-uniform).
            kw, kb = jax.random.split(key)
            self.w = 0.02 * jax.random.normal(
                kw, (feature_dim * num_scales, feature_dim), jnp.float32)
            self.b = 0.02 * jax.random.normal(kb, (1, feature_dim), jnp.float32)
        elif method == "weighted":
            # nn.Parameter(torch.ones(num_scales) / num_scales)
            self.weights = jnp.ones((num_scales,), jnp.float32) / num_scales
        elif method == "attention":
            # TODO(synk): the reference 'attention' path cats scales along dim=0 so
            # key/value batch = B*num_scales != query batch = B, which
            # nn.MultiheadAttention rejects for num_scales > 1; no semantics to port.
            raise NotImplementedError(
                "attention fusion is ill-defined in the reference module")
        else:
            raise ValueError(f"Unknown fusion method: {method}")

    # ------------------------------------------------------------------ fwd

    def __call__(self, inputs):
        if len(inputs) != self.num_scales:
            raise ValueError(f"Expected {self.num_scales} inputs, got {len(inputs)}")
        ref_input = inputs[0]
        batch, ref_seq_len, feat = ref_input.shape
        if feat != self.feature_dim:
            raise ValueError("feature_dim mismatch")
        rows = batch * ref_seq_len
        # Feature dim padded to a lane multiple so every load/store is an
        # unmasked 128-lane access; the output is sliced back below.
        fp = _round_up(feat, _LANE)

        # Per-scale flat 2-D views at native (coarse) resolution.  With
        # ref_seq_len divisible by 2**s, "repeat_interleave then truncate"
        # equals indexing input time t >> s, which the in-kernel expansion
        # implements; rows beyond ref_seq_len >> s are never used.
        xs2d = []
        for s, x in enumerate(inputs):
            if ref_seq_len % (1 << s) != 0:
                raise ValueError("ref seq_len must be divisible by 2**scale")
            need = ref_seq_len >> s
            if x.shape[1] < need:
                raise ValueError(f"scale {s} is too short to cover the reference length")
            x = x[:, :need, :]
            x2 = x.reshape(batch * need, feat)
            if fp != feat:
                x2 = jnp.pad(x2, ((0, 0), (0, fp - feat)))
            xs2d.append(x2)

        tm = _pick_row_tile(rows, self.num_scales, self.row_tile)
        grid = (rows // tm,)

        # Resident expansion matrices (built once per call, DMA'd once).
        e_mats = [_expansion_matrix(tm, s) for s in range(1, self.num_scales)]

        scale_specs = [pl.BlockSpec((tm >> s, fp), lambda i: (i, 0))
                       for s in range(self.num_scales)]
        e_specs = [pl.BlockSpec(e.shape, lambda i: (0, 0)) for e in e_mats]
        out_spec = pl.BlockSpec((tm, fp), lambda i: (i, 0))

        prec = _matmul_precision()

        def _cparams(extra_shapes=()):
            shapes = ([(tm >> s, fp) for s in range(self.num_scales)]
                      + [e.shape for e in e_mats] + [(tm, fp)] + list(extra_shapes))
            blk_bytes = sum(math.prod(s) for s in shapes) * 4
            vmem = self.vmem_limit_bytes
            if vmem is None:
                # double-buffered blocks + headroom for in-kernel f32 temporaries
                vmem = int(min(64 << 20, max(32 << 20, 2 * blk_bytes + (16 << 20))))
            return pltpu.CompilerParams(
                dimension_semantics=("parallel",),   # rows shard over v7x's 2 TCs
                vmem_limit_bytes=vmem)

        if self.method == "concat":
            # Per-scale (Fp, Fp) weight blocks stacked along rows -> (S*Fp, Fp).
            w_blocks = []
            for s in range(self.num_scales):
                ws = self.w[s * feat:(s + 1) * feat, :]
                if fp != feat:
                    ws = jnp.pad(ws, ((0, fp - feat), (0, fp - feat)))
                w_blocks.append(ws)
            w2 = jnp.concatenate(w_blocks, axis=0)
            b2 = self.b if fp == feat else jnp.pad(self.b, ((0, 0), (0, fp - feat)))

            kernel = _make_concat_kernel(self.num_scales, fp, prec)
            out = pl.pallas_call(
                kernel,
                out_shape=jax.ShapeDtypeStruct((rows, fp), ref_input.dtype),
                grid=grid,
                in_specs=scale_specs + e_specs + [
                    # Resident weight & bias (constant index_map -> DMA'd once).
                    # NOTE (v7x, 64 MiB VMEM): for very large S*Fp store the
                    # weight in bf16 or split K over a grid axis with a VMEM
                    # accumulator instead of keeping the full f32 weight resident.
                    pl.BlockSpec((self.num_scales * fp, fp), lambda i: (0, 0)),
                    pl.BlockSpec((1, fp), lambda i: (0, 0)),
                ],
                out_specs=out_spec,
                compiler_params=_cparams([(self.num_scales * fp, fp), (1, fp)]),
            )(*xs2d, *e_mats, w2, b2)
            if fp != feat:
                out = out[:, :feat]
            # Dropout(p=0.1): identity (eval mode).
            return out.reshape(batch, ref_seq_len, feat)

        # method == "weighted"
        wts = jax.nn.softmax(self.weights)            # tiny, glue
        kernel = _make_weighted_kernel(self.num_scales, prec)
        out = pl.pallas_call(
            kernel,
            out_shape=jax.ShapeDtypeStruct((rows, fp), ref_input.dtype),
            grid=grid,
            in_specs=[pl.BlockSpec(memory_space=pltpu.MemorySpace.SMEM)]
                     + scale_specs + e_specs,
            out_specs=out_spec,
            compiler_params=_cparams(),
        )(wts, *xs2d, *e_mats)
        if fp != feat:
            out = out[:, :feat]
        return out.reshape(batch, ref_seq_len, feat)


# ------------------------------------------------------------------- main ---

if __name__ == "__main__":
    key = jax.random.PRNGKey(0)
    # feature_dim = 128 -> lane-dense stores; rows = 4096 -> 8 x 512-row grid
    # steps (double-buffered pipeline, even split over v7x's two TensorCores).
    B, T, F, S = 4, 1024, 128, 3
    k_in, k_par, k_in2 = jax.random.split(key, 3)
    in_keys = jax.random.split(k_in, S)
    # inputs[i] has seq_len = T / 2**i, matching the module's time-scale convention
    inputs = [jax.random.normal(in_keys[i], (B, T // (2 ** i), F), jnp.float32)
              for i in range(S)]

    # reference upsample (mirrors the PyTorch repeat_interleave + truncate)
    ups = [inputs[0]] + [jnp.repeat(inputs[i], 2 ** i, axis=1)[:, :T, :]
                         for i in range(1, S)]

    # ---- 'concat' fusion (upsample + matmul + GELU fused in the kernel) ----
    fusion_c = TimeScaleFusion(S, F, method="concat", key=k_par)
    out_c = jax.block_until_ready(fusion_c(inputs))
    assert out_c.shape == (B, T, F)

    xc = jnp.concatenate(ups, axis=-1)
    y = jnp.dot(xc.reshape(-1, S * F), fusion_c.w,
                precision=jax.lax.Precision.HIGHEST).reshape(B, T, F) + fusion_c.b[0]
    ref_c = 0.5 * y * (1.0 + jax.scipy.special.erf(y * INV_SQRT2))
    assert jnp.allclose(out_c, ref_c, atol=2e-3, rtol=2e-3), "concat fusion mismatch"

    # ---- 'weighted' fusion (upsample + weighted sum fused in the kernel) ---
    fusion_w = TimeScaleFusion(S, F, method="weighted", key=k_par)
    # non-uniform weights so the check is sensitive to per-scale handling
    fusion_w.weights = jnp.array([0.6, -0.2, 0.3], jnp.float32)
    out_w = jax.block_until_ready(fusion_w(inputs))
    assert out_w.shape == (B, T, F)

    wts = jax.nn.softmax(fusion_w.weights)
    ref_w = sum(wts[i] * ups[i] for i in range(S))
    assert jnp.allclose(out_w, ref_w, atol=1e-2, rtol=1e-2), "weighted fusion mismatch"

    # ---- feature-dim padding path (F not a multiple of 128) ----------------
    B2, T2, F2 = 2, 64, 64
    in2_keys = jax.random.split(k_in2, S)
    inputs2 = [jax.random.normal(in2_keys[i], (B2, T2 // (2 ** i), F2), jnp.float32)
               for i in range(S)]
    fusion_w2 = TimeScaleFusion(S, F2, method="weighted")
    fusion_w2.weights = jnp.array([0.5, 0.1, -0.4], jnp.float32)
    out_w2 = jax.block_until_ready(fusion_w2(inputs2))
    assert out_w2.shape == (B2, T2, F2)

    ups2 = [inputs2[0]] + [jnp.repeat(inputs2[i], 2 ** i, axis=1)[:, :T2, :]
                           for i in range(1, S)]
    wts2 = jax.nn.softmax(fusion_w2.weights)
    ref_w2 = sum(wts2[i] * ups2[i] for i in range(S))
    assert jnp.allclose(out_w2, ref_w2, atol=1e-2, rtol=1e-2), "padded weighted mismatch"

    print("KERNEL_OK")
</pallas_src>

<mosaic_0001>
module attributes {stable_mosaic.version = 11 : i64} {
  func.func @probe(%arg0: memref<128x128xf32, #tpu.memory_space<vmem>>, %arg1: memref<128x128xf32, #tpu.memory_space<vmem>>, %arg2: memref<128x128xf32, #tpu.memory_space<vmem>>) attributes {dimension_semantics = [], scalar_prefetch = 0 : i64, scratch_operands = 0 : i64, tpu.core_type = #tpu.core_type<tc>} {
    %c0 = arith.constant 0 : index
    %c0_0 = arith.constant 0 : index
    %0 = vector.load %arg0[%c0, %c0_0] : memref<128x128xf32, #tpu.memory_space<vmem>>, vector<128x128xf32>
    %c0_1 = arith.constant 0 : index
    %c0_2 = arith.constant 0 : index
    %1 = vector.load %arg1[%c0_1, %c0_2] : memref<128x128xf32, #tpu.memory_space<vmem>>, vector<128x128xf32>
    %cst = arith.constant dense<0.000000e+00> : vector<128x128xf32>
    %2 = tpu.matmul %0, %1, %cst {dimension_numbers = #tpu.dot_dimension_numbers<[1], [0], [0], [1], [0, 0, 1, 1], [], []>, precision = #tpu.contract_precision<fp32>} : vector<128x128xf32>, vector<128x128xf32>, vector<128x128xf32> -> vector<128x128xf32>
    %c0_3 = arith.constant 0 : index
    %c0_4 = arith.constant 0 : index
    %3 = vector.load %arg2[%c0_3, %c0_4] : memref<128x128xf32, #tpu.memory_space<vmem>>, vector<128x128xf32>
    tpu.vector_store %arg2[%c0_3, %c0_4], %2 {strides = array<i32>} : memref<128x128xf32, #tpu.memory_space<vmem>>, vector<128x128xf32>,
    return
  }
}

module attributes {stable_mosaic.version = 11 : i64} {
  func.func @kernel(%arg0: i32, %arg1: memref<512x128xf32, #tpu.memory_space<vmem>>, %arg2: memref<256x128xf32, #tpu.memory_space<vmem>>, %arg3: memref<128x128xf32, #tpu.memory_space<vmem>>, %arg4: memref<512x256xf32, #tpu.memory_space<vmem>>, %arg5: memref<512x128xf32, #tpu.memory_space<vmem>>, %arg6: memref<384x128xf32, #tpu.memory_space<vmem>>, %arg7: memref<1x128xf32, #tpu.memory_space<vmem>>, %arg8: memref<512x128xf32, #tpu.memory_space<vmem>>) attributes {dimension_semantics = [#tpu.dimension_semantics<parallel>], iteration_bounds = array<i64: 8>, scalar_prefetch = 0 : i64, scratch_operands = 0 : i64, tpu.core_type = #tpu.core_type<tc>, window_params = [{transform_indices = @transform_0, window_bounds = array<i64: 512, 128>}, {transform_indices = @transform_1, window_bounds = array<i64: 256, 128>}, {transform_indices = @transform_2, window_bounds = array<i64: 128, 128>}, {pipeline_mode = #tpu.pipeline_mode<synchronous>, transform_indices = @transform_3, window_bounds = array<i64: 512, 256>}, {pipeline_mode = #tpu.pipeline_mode<synchronous>, transform_indices = @transform_4, window_bounds = array<i64: 512, 128>}, {pipeline_mode = #tpu.pipeline_mode<synchronous>, transform_indices = @transform_5, window_bounds = array<i64: 384, 128>}, {pipeline_mode = #tpu.pipeline_mode<synchronous>, transform_indices = @transform_6, window_bounds = array<i64: 1, 128>}, {transform_indices = @transform_7, window_bounds = array<i64: 512, 128>}]} {
    %c0 = arith.constant 0 : index
    %c0_0 = arith.constant 0 : index
    %0 = vector.load %arg1[%c0, %c0_0] : memref<512x128xf32, #tpu.memory_space<vmem>>, vector<512x128xf32>
    %c0_1 = arith.constant 0 : index
    %c0_2 = arith.constant 0 : index
    %1 = vector.load %arg6[%c0_1, %c0_2] : memref<384x128xf32, #tpu.memory_space<vmem>>, vector<128x128xf32>
    %cst = arith.constant dense<0.000000e+00> : vector<512x128xf32>
    %2 = tpu.matmul %0, %1, %cst {dimension_numbers = #tpu.dot_dimension_numbers<[1], [0], [0], [1], [0, 0, 1, 1], [], []>} : vector<512x128xf32>, vector<128x128xf32>, vector<512x128xf32> -> vector<512x128xf32>
    %c0_3 = arith.constant 0 : index
    %c0_4 = arith.constant 0 : index
    %3 = vector.load %arg2[%c0_3, %c0_4] : memref<256x128xf32, #tpu.memory_space<vmem>>, vector<256x128xf32>
    %c128 = arith.constant 128 : index
    %c0_5 = arith.constant 0 : index
    %4 = vector.load %arg6[%c128, %c0_5] : memref<384x128xf32, #tpu.memory_space<vmem>>, vector<128x128xf32>
    %cst_6 = arith.constant dense<0.000000e+00> : vector<256x128xf32>
    %5 = tpu.matmul %3, %4, %cst_6 {dimension_numbers = #tpu.dot_dimension_numbers<[1], [0], [0], [1], [0, 0, 1, 1], [], []>} : vector<256x128xf32>, vector<128x128xf32>, vector<256x128xf32> -> vector<256x128xf32>
    %c0_7 = arith.constant 0 : index
    %c0_8 = arith.constant 0 : index
    %6 = vector.load %arg4[%c0_7, %c0_8] : memref<512x256xf32, #tpu.memory_space<vmem>>, vector<512x256xf32>
    %cst_9 = arith.constant dense<0.000000e+00> : vector<512x128xf32>
    %7 = tpu.matmul %6, %5, %cst_9 {dimension_numbers = #tpu.dot_dimension_numbers<[1], [0], [0], [1], [0, 0, 1, 1], [], []>} : vector<512x256xf32>, vector<256x128xf32>, vector<512x128xf32> -> vector<512x128xf32>
    %8 = arith.addf %2, %7 : vector<512x128xf32>
    %c0_10 = arith.constant 0 : index
    %c0_11 = arith.constant 0 : index
    %9 = vector.load %arg3[%c0_10, %c0_11] : memref<128x128xf32, #tpu.memory_space<vmem>>, vector<128x128xf32>
    %c256 = arith.constant 256 : index
    %c0_12 = arith.constant 0 : index
    %10 = vector.load %arg6[%c256, %c0_12] : memref<384x128xf32, #tpu.memory_space<vmem>>, vector<128x128xf32>
    %cst_13 = arith.constant dense<0.000000e+00> : vector<128x128xf32>
    %11 = tpu.matmul %9, %10, %cst_13 {dimension_numbers = #tpu.dot_dimension_numbers<[1], [0], [0], [1], [0, 0, 1, 1], [], []>} : vector<128x128xf32>, vector<128x128xf32>, vector<128x128xf32> -> vector<128x128xf32>
    %c0_14 = arith.constant 0 : index
    %c0_15 = arith.constant 0 : index
    %12 = vector.load %arg5[%c0_14, %c0_15] : memref<512x128xf32, #tpu.memory_space<vmem>>, vector<512x128xf32>
    %cst_16 = arith.constant dense<0.000000e+00> : vector<512x128xf32>
    %13 = tpu.matmul %12, %11, %cst_16 {dimension_numbers = #tpu.dot_dimension_numbers<[1], [0], [0], [1], [0, 0, 1, 1], [], []>} : vector<512x128xf32>, vector<128x128xf32>, vector<512x128xf32> -> vector<512x128xf32>
    %14 = arith.addf %8, %13 : vector<512x128xf32>
    %c0_17 = arith.constant 0 : index
    %c0_18 = arith.constant 0 : index
    %15 = vector.load %arg7[%c0_17, %c0_18] : memref<1x128xf32, #tpu.memory_space<vmem>>, vector<1x128xf32>
    %16 = vector.broadcast %15 : vector<1x128xf32> to vector<512x128xf32>
    %17 = arith.addf %14, %16 : vector<512x128xf32>
    %cst_19 = arith.constant 0.707106769 : f32
    %18 = vector.broadcast %cst_19 : f32 to vector<512x128xf32>
    %19 = arith.mulf %17, %18 : vector<512x128xf32>
    %20 = math.absf %19 : vector<512x128xf32>
    %cst_20 = arith.constant 0.000000e+00 : f32
    %21 = vector.broadcast %cst_20 : f32 to vector<512x128xf32>
    %22 = arith.subf %21, %20 : vector<512x128xf32>
    %23 = arith.mulf %22, %20 : vector<512x128xf32>
    %24 = math.exp %23 : vector<512x128xf32>
    %cst_21 = arith.constant 0.000000e+00 : f32
    %25 = vector.broadcast %cst_21 : f32 to vector<512x128xf32>
    %26 = arith.cmpf oge, %19, %25 : vector<512x128xf32>
    %cst_22 = arith.constant 1.000000e+00 : f32
    %cst_23 = arith.constant -1.000000e+00 : f32
    %27 = vector.broadcast %cst_22 : f32 to vector<512x128xf32>
    %28 = vector.broadcast %cst_23 : f32 to vector<512x128xf32>
    %29 = arith.select %26, %27, %28 : vector<512x128xi1>, vector<512x128xf32>
    %cst_24 = arith.constant 0.327591091 : f32
    %30 = vector.broadcast %cst_24 : f32 to vector<512x128xf32>
    %31 = arith.mulf %30, %20 : vector<512x128xf32>
    %cst_25 = arith.constant 1.000000e+00 : f32
    %32 = vector.broadcast %cst_25 : f32 to vector<512x128xf32>
    %33 = arith.addf %32, %31 : vector<512x128xf32>
    %34 = tpu.reciprocal %33 {approx = true} : vector<512x128xf32> -> vector<512x128xf32>
    %35 = arith.mulf %33, %34 : vector<512x128xf32>
    %cst_26 = arith.constant 2.000000e+00 : f32
    %36 = vector.broadcast %cst_26 : f32 to vector<512x128xf32>
    %37 = arith.subf %36, %35 : vector<512x128xf32>
    %38 = arith.mulf %34, %37 : vector<512x128xf32>
    %cst_27 = arith.constant 1.06140542 : f32
    %39 = vector.broadcast %cst_27 : f32 to vector<512x128xf32>
    %40 = arith.mulf %39, %38 : vector<512x128xf32>
    %cst_28 = arith.constant -1.45315206 : f32
    %41 = vector.broadcast %cst_28 : f32 to vector<512x128xf32>
    %42 = arith.addf %40, %41 : vector<512x128xf32>
    %43 = arith.mulf %42, %38 : vector<512x128xf32>
    %cst_29 = arith.constant 1.42141378 : f32
    %44 = vector.broadcast %cst_29 : f32 to vector<512x128xf32>
    %45 = arith.addf %43, %44 : vector<512x128xf32>
    %46 = arith.mulf %45, %38 : vector<512x128xf32>
    %cst_30 = arith.constant -0.284496725 : f32
    %47 = vector.broadcast %cst_30 : f32 to vector<512x128xf32>
    %48 = arith.addf %46, %47 : vector<512x128xf32>
    %49 = arith.mulf %48, %38 : vector<512x128xf32>
    %cst_31 = arith.constant 0.254829586 : f32
    %50 = vector.broadcast %cst_31 : f32 to vector<512x128xf32>
    %51 = arith.addf %49, %50 : vector<512x128xf32>
    %52 = arith.mulf %51, %38 : vector<512x128xf32>
    %53 = arith.mulf %52, %24 : vector<512x128xf32>
    %cst_32 = arith.constant 1.000000e+00 : f32
    %54 = vector.broadcast %cst_32 : f32 to vector<512x128xf32>
    %55 = arith.subf %54, %53 : vector<512x128xf32>
    %56 = arith.mulf %29, %55 : vector<512x128xf32>
    %cst_33 = arith.constant 5.000000e-01 : f32
    %57 = vector.broadcast %cst_33 : f32 to vector<512x128xf32>
    %58 = arith.mulf %57, %17 : vector<512x128xf32>
    %cst_34 = arith.constant 1.000000e+00 : f32
    %59 = vector.broadcast %cst_34 : f32 to vector<512x128xf32>
    %60 = arith.addf %59, %56 : vector<512x128xf32>
    %61 = arith.mulf %58, %60 : vector<512x128xf32>
    %c0_35 = arith.constant 0 : index
    %c0_36 = arith.constant 0 : index
    %62 = vector.load %arg8[%c0_35, %c0_36] : memref<512x128xf32, #tpu.memory_space<vmem>>, vector<512x128xf32>
    tpu.vector_store %arg8[%c0_35, %c0_36], %61 {strides = array<i32>} : memref<512x128xf32, #tpu.memory_space<vmem>>, vector<512x128xf32>,
    return
  }
  func.func @transform_0(%arg0: i32) -> (i32, i32) {
    %c0_i32 = arith.constant 0 : i32
    %c0_i32_0 = arith.constant 0 : i32
    return %arg0, %c0_i32 : i32, i32
  }
  func.func @transform_1(%arg0: i32) -> (i32, i32) {
    %c0_i32 = arith.constant 0 : i32
    %c0_i32_0 = arith.constant 0 : i32
    return %arg0, %c0_i32 : i32, i32
  }
  func.func @transform_2(%arg0: i32) -> (i32, i32) {
    %c0_i32 = arith.constant 0 : i32
    %c0_i32_0 = arith.constant 0 : i32
    return %arg0, %c0_i32 : i32, i32
  }
  func.func @transform_3(%arg0: i32) -> (i32, i32) {
    %c0_i32 = arith.constant 0 : i32
    %c0_i32_0 = arith.constant 0 : i32
    %c0_i32_1 = arith.constant 0 : i32
    return %c0_i32, %c0_i32_0 : i32, i32
  }
  func.func @transform_4(%arg0: i32) -> (i32, i32) {
    %c0_i32 = arith.constant 0 : i32
    %c0_i32_0 = arith.constant 0 : i32
    %c0_i32_1 = arith.constant 0 : i32
    return %c0_i32, %c0_i32_0 : i32, i32
  }
  func.func @transform_5(%arg0: i32) -> (i32, i32) {
    %c0_i32 = arith.constant 0 : i32
    %c0_i32_0 = arith.constant 0 : i32
    %c0_i32_1 = arith.constant 0 : i32
    return %c0_i32, %c0_i32_0 : i32, i32
  }
  func.func @transform_6(%arg0: i32) -> (i32, i32) {
    %c0_i32 = arith.constant 0 : i32
    %c0_i32_0 = arith.constant 0 : i32
    %c0_i32_1 = arith.constant 0 : i32
    return %c0_i32, %c0_i32_0 : i32, i32
  }
  func.func @transform_7(%arg0: i32) -> (i32, i32) {
    %c0_i32 = arith.constant 0 : i32
    %c0_i32_0 = arith.constant 0 : i32
    return %arg0, %c0_i32 : i32, i32
  }
}

</mosaic_0001>

<llo_original>
// kernel: tpu_custom_call.1
$region0: #{tpu_custom_call.1}
  #allocation0 [shape = 'u32[]', space=smem, size = 0x4, offset = 0x4, fixed_abs, tag = 'smem constant byte address 0x4 - core index']
  #allocation1 [shape = 'u32[144,128]{1,0:T(1,128)}', space=vmem, size = 0x12000, scoped, tag = 'internal scratch']
  %s0 = inlined_call_operand.hbm [shape: f32[128,128], index: 0, kind: input, shape index: {}]
  %s1 = inlined_call_operand.hbm [shape: f32[128,128], index: 1, kind: input, shape index: {}]
  %s2 = inlined_call_operand.hbm [shape: f32[128,128], index: 2, kind: output, shape index: {}]
  %s3 = sld [smem:[#allocation0]]
  $region26: #{tpu_custom_call.1} parent=0
    _
  %s5 = ssub.s32 1, %s3
  %s6 = scalar_select 0, %s5, %s3
  $region1: #{tpu_custom_call.1} parent=0
    #allocation2 [shape = 'u8[65536]{0}', space=vmem, size = 0x10000, scoped, tag = 'input window, operand 0, single buffered']
    #allocation3 [shape = 's32[1]{0}', space=sflag, size = 0x4, scoped, tag = 'scoped memory for tpu_custom_call.1']
    #allocation4 [shape = 's32[1]{0}', space=sflag, size = 0x4, scoped, tag = 'scoped memory for tpu_custom_call.1']
    #allocation5 [shape = 'u8[65536]{0}', space=vmem, size = 0x10000, scoped, tag = 'input window, operand 1, single buffered']
    #allocation6 [shape = 's32[1]{0}', space=sflag, size = 0x4, scoped, tag = 'scoped memory for tpu_custom_call.1']
    #allocation7 [shape = 'u8[65536]{0}', space=vmem, size = 0x10000, scoped, tag = 'output window, operand 0, single buffered']
    %7 = vsyncpa [#allocation3], 0
    %8 = vsyncpa [#allocation6], 0
    %9 = vsyncpa [#allocation4], 0
    // Predicated region
    $region2: #{tpu_custom_call.1} parent=1 // pred_check
      _
    $region3: #{tpu_custom_call.1} parent=1 // pred_check_branch
      %11 = sbr.rel (0) target = $region5
    $region4: #{tpu_custom_call.1} parent=1 // pred_region
      %s13 = ssub.s32 2048, 2048
      %14 = vsyncadd [#allocation3], %s13
      %s15 = sshll.u32 [#allocation2], 4
      %s16 = int_to_ptr.vmem [resolvable:$true] %s15
      %21 = dma.hbm_to_vmem [thread:$0]  %s0, 2048, %s16, [#allocation3], 128, 128, 8
    $region5: #{tpu_custom_call.1} parent=1 // pred_fallthru
      _
    // Predicated region
    $region6: #{tpu_custom_call.1} parent=1 // pred_check
      _
    $region7: #{tpu_custom_call.1} parent=1 // pred_check_branch
      %23 = sbr.rel (0) target = $region9
    $region8: #{tpu_custom_call.1} parent=1 // pred_region
      %s25 = ssub.s32 2048, 2048
      %26 = vsyncadd [#allocation6], %s25
      %s27 = sshll.u32 [#allocation5], 4
      %s28 = int_to_ptr.vmem [resolvable:$true] %s27
      %33 = dma.hbm_to_vmem [thread:$0]  %s1, 2048, %s28, [#allocation6], 128, 128, 8
    $region9: #{tpu_custom_call.1} parent=1 // pred_fallthru
      _
    // Predicated region
    $region10: #{tpu_custom_call.1} parent=1 // pred_check
      _
    $region11: #{tpu_custom_call.1} parent=1 // pred_check_branch
      %35 = sbr.rel (0) target = $region13
    $region12: #{tpu_custom_call.1} parent=1 // pred_region
      %36 = dma.done [#allocation3], 2048
    $region13: #{tpu_custom_call.1} parent=1 // pred_fallthru
      _
    // Predicated region
    $region14: #{tpu_custom_call.1} parent=1 // pred_check
      _
    $region15: #{tpu_custom_call.1} parent=1 // pred_check_branch
      %38 = sbr.rel (0) target = $region17
    $region16: #{tpu_custom_call.1} parent=1 // pred_region
      %39 = dma.done [#allocation6], 2048
    $region17: #{tpu_custom_call.1} parent=1 // pred_fallthru
      _
    %v40 = vld [vmem:[#allocation2] sm:$0xff]
    %v41 = vld [vmem:[#allocation2 + $0x8] sm:$0xff]
    %v42 = vld [vmem:[#allocation2 + $0x10] sm:$0xff]
    %v43 = vld [vmem:[#allocation2 + $0x18] sm:$0xff]
    %v44 = vld [vmem:[#allocation2 + $0x20] sm:$0xff]
    %v45 = vld [vmem:[#allocation2 + $0x28] sm:$0xff]
    %v46 = vld [vmem:[#allocation2 + $0x30] sm:$0xff]
    %v47 = vld [vmem:[#allocation2 + $0x38] sm:$0xff]
    %v48 = vld [vmem:[#allocation2 + $0x40] sm:$0xff]
    %v49 = vld [vmem:[#allocation2 + $0x48] sm:$0xff]
    %v50 = vld [vmem:[#allocation2 + $0x50] sm:$0xff]
    %v51 = vld [vmem:[#allocation2 + $0x58] sm:$0xff]
    %v52 = vld [vmem:[#allocation2 + $0x60] sm:$0xff]
    %v53 = vld [vmem:[#allocation2 + $0x68] sm:$0xff]
    %v54 = vld [vmem:[#allocation2 + $0x70] sm:$0xff]
    %v55 = vld [vmem:[#allocation2 + $0x78] sm:$0xff]
    %v56 = vld [vmem:[#allocation5] sm:$0xff]
    %v57 = vld [vmem:[#allocation5 + $0x8] sm:$0xff]
    %v58 = vld [vmem:[#allocation5 + $0x10] sm:$0xff]
    %v59 = vld [vmem:[#allocation5 + $0x18] sm:$0xff]
    %v60 = vld [vmem:[#allocation5 + $0x20] sm:$0xff]
    %v61 = vld [vmem:[#allocation5 + $0x28] sm:$0xff]
    %v62 = vld [vmem:[#allocation5 + $0x30] sm:$0xff]
    %v63 = vld [vmem:[#allocation5 + $0x38] sm:$0xff]
    %v64 = vld [vmem:[#allocation5 + $0x40] sm:$0xff]
    %v65 = vld [vmem:[#allocation5 + $0x48] sm:$0xff]
    %v66 = vld [vmem:[#allocation5 + $0x50] sm:$0xff]
    %v67 = vld [vmem:[#allocation5 + $0x58] sm:$0xff]
    %v68 = vld [vmem:[#allocation5 + $0x60] sm:$0xff]
    %v69 = vld [vmem:[#allocation5 + $0x68] sm:$0xff]
    %v70 = vld [vmem:[#allocation5 + $0x70] sm:$0xff]
    %v71 = vld [vmem:[#allocation5 + $0x78] sm:$0xff]
    %72 = vmatprep.subr.mxu0 0.0
    %v73 = vand.u32 %v56, 4294901760
    %74 = vmatpush1.msra.mxu0 %v73
    %75 = vmatprep.subr.mxu0 0.0
    %v76 = vand.u32 %v57, 4294901760
    %77 = vmatpush1.msra.mxu0 %v76
    %78 = vmatprep.subr.mxu0 0.0
    %v79 = vand.u32 %v58, 4294901760
    %80 = vmatpush1.msra.mxu0 %v79
    %81 = vmatprep.subr.mxu0 0.0
    %v82 = vand.u32 %v59, 4294901760
    %83 = vmatpush1.msra.mxu0 %v82
    %84 = vmatprep.subr.mxu0 0.0
    %v85 = vand.u32 %v60, 4294901760
    %86 = vmatpush1.msra.mxu0 %v85
    %87 = vmatprep.subr.mxu0 0.0
    %v88 = vand.u32 %v61, 4294901760
    %89 = vmatpush1.msra.mxu0 %v88
    %90 = vmatprep.subr.mxu0 0.0
    %v91 = vand.u32 %v62, 4294901760
    %92 = vmatpush1.msra.mxu0 %v91
    %93 = vmatprep.subr.mxu0 0.0
    %v94 = vand.u32 %v63, 4294901760
    %95 = vmatpush1.msra.mxu0 %v94
    %96 = vmatprep.subr.mxu0 0.0
    %v97 = vand.u32 %v64, 4294901760
    %98 = vmatpush1.msra.mxu0 %v97
    %99 = vmatprep.subr.mxu0 0.0
    %v100 = vand.u32 %v65, 4294901760
    %101 = vmatpush1.msra.mxu0 %v100
    %102 = vmatprep.subr.mxu0 0.0
    %v103 = vand.u32 %v66, 4294901760
    %104 = vmatpush1.msra.mxu0 %v103
    %105 = vmatprep.subr.mxu0 0.0
    %v106 = vand.u32 %v67, 4294901760
    %107 = vmatpush1.msra.mxu0 %v106
    %108 = vmatprep.subr.mxu0 0.0
    %v109 = vand.u32 %v68, 4294901760
    %110 = vmatpush1.msra.mxu0 %v109
    %111 = vmatprep.subr.mxu0 0.0
    %v112 = vand.u32 %v69, 4294901760
    %113 = vmatpush1.msra.mxu0 %v112
    %114 = vmatprep.subr.mxu0 0.0
    %v115 = vand.u32 %v70, 4294901760
    %116 = vmatpush1.msra.mxu0 %v115
    %117 = vmatprep.subr.mxu0 0.0
    %v118 = vand.u32 %v71, 4294901760
    %119 = vmatpush1.msra.mxu0 %v118
    %120 = vmatprep.subr.mxu0 0.0
    %121 = vmatpush1.msra.mxu0 0.0
    %122 = vmatprep.subr.mxu0 0.0
    %123 = vmatpush1.msra.mxu0 0.0
    %124 = vmatprep.subr.mxu0 0.0
    %125 = vmatpush1.msra.mxu0 0.0
    %126 = vmatprep.subr.mxu0 0.0
    %127 = vmatpush1.msra.mxu0 0.0
    %128 = vmatprep.subr.mxu0 0.0
    %129 = vmatpush1.msra.mxu0 0.0
    %130 = vmatprep.subr.mxu0 0.0
    %131 = vmatpush1.msra.mxu0 0.0
    %132 = vmatprep.subr.mxu0 0.0
    %133 = vmatpush1.msra.mxu0 0.0
    %134 = vmatprep.subr.mxu0 0.0
    %135 = vmatpush1.msra.mxu0 0.0
    %136 = vmatprep.subr.mxu0 0.0
    %137 = vmatpush1.msra.mxu0 0.0
    %138 = vmatprep.subr.mxu0 0.0
    %139 = vmatpush1.msra.mxu0 0.0
    %140 = vmatprep.subr.mxu0 0.0
    %141 = vmatpush1.msra.mxu0 0.0
    %142 = vmatprep.subr.mxu0 0.0
    %143 = vmatpush1.msra.mxu0 0.0
    %144 = vmatprep.subr.mxu0 0.0
    %145 = vmatpush1.msra.mxu0 0.0
    %146 = vmatprep.subr.mxu0 0.0
    %147 = vmatpush1.msra.mxu0 0.0
    %148 = vmatprep.subr.mxu0 0.0
    %149 = vmatpush1.msra.mxu0 0.0
    %150 = vmatprep.subr.mxu0 0.0
    %151 = vmatpush1.msra.mxu0 0.0
    %152 = vmatprep.mubr.f32.mxu0 0.0
    %v153 = vand.u32 %v40, 4294901760
    %v154 = vsub.f32 %v40, %v153
    %v155 = vand.u32 %v154, 4294901760
    %v156 = vsub.f32 %v154, %v155
    %v157 = vand.u32 %v156, 4294901760
    %158 = vmatmul.mubr.f32.gmra.mrb[0].mxu0 %v157
    %v159 = vpop.f32.mrb[0].mxu0
    %v160 = vadd.f32 0.0, %v159
    %v161 = vpop.f32.mrb[0].mxu0
    %162 = vmatprep.mubr.f32.mxu0 0.0
    %v163 = vand.u32 %v41, 4294901760
    %v164 = vsub.f32 %v41, %v163
    %v165 = vand.u32 %v164, 4294901760
    %v166 = vsub.f32 %v164, %v165
    %v167 = vand.u32 %v166, 4294901760
    %168 = vmatmul.mubr.f32.gmra.mrb[0].mxu0 %v167
    %v169 = vpop.f32.mrb[0].mxu0
    %v170 = vadd.f32 0.0, %v169
    %v171 = vpop.f32.mrb[0].mxu0
    %172 = vmatprep.mubr.f32.mxu0 0.0
    %v173 = vand.u32 %v42, 4294901760
    %v174 = vsub.f32 %v42, %v173
    %v175 = vand.u32 %v174, 4294901760
    %v176 = vsub.f32 %v174, %v175
    %v177 = vand.u32 %v176, 4294901760
    %178 = vmatmul.mubr.f32.gmra.mrb[0].mxu0 %v177
    %v179 = vpop.f32.mrb[0].mxu0
    %v180 = vadd.f32 0.0, %v179
    %v181 = vpop.f32.mrb[0].mxu0
    %182 = vmatprep.mubr.f32.mxu0 0.0
    %v183 = vand.u32 %v43, 4294901760
    %v184 = vsub.f32 %v43, %v183
    %v185 = vand.u32 %v184, 4294901760
    %v186 = vsub.f32 %v184, %v185
    %v187 = vand.u32 %v186, 4294901760
    %188 = vmatmul.mubr.f32.gmra.mrb[0].mxu0 %v187
    %v189 = vpop.f32.mrb[0].mxu0
    %v190 = vadd.f32 0.0, %v189
    %v191 = vpop.f32.mrb[0].mxu0
    %192 = vmatprep.mubr.f32.mxu0 0.0
    %v193 = vand.u32 %v44, 4294901760
    %v194 = vsub.f32 %v44, %v193
    %v195 = vand.u32 %v194, 4294901760
    %v196 = vsub.f32 %v194, %v195
    %v197 = vand.u32 %v196, 4294901760
    %198 = vmatmul.mubr.f32.gmra.mrb[0].mxu0 %v197
    %v199 = vpop.f32.mrb[0].mxu0
    %v200 = vadd.f32 0.0, %v199
    %v201 = vpop.f32.mrb[0].mxu0
    %202 = vmatprep.mubr.f32.mxu0 0.0
    %v203 = vand.u32 %v45, 4294901760
    %v204 = vsub.f32 %v45, %v203
    %v205 = vand.u32 %v204, 4294901760
    %v206 = vsub.f32 %v204, %v205
    %v207 = vand.u32 %v206, 4294901760
    %208 = vmatmul.mubr.f32.gmra.mrb[0].mxu0 %v207
    %v209 = vpop.f32.mrb[0].mxu0
    %v210 = vadd.f32 0.0, %v209
    %v211 = vpop.f32.mrb[0].mxu0
    %212 = vmatprep.mubr.f32.mxu0 0.0
    %v213 = vand.u32 %v46, 4294901760
    %v214 = vsub.f32 %v46, %v213
    %v215 = vand.u32 %v214, 4294901760
    %v216 = vsub.f32 %v214, %v215
    %v217 = vand.u32 %v216, 4294901760
    %218 = vmatmul.mubr.f32.gmra.mrb[0].mxu0 %v217
    %v219 = vpop.f32.mrb[0].mxu0
    %v220 = vadd.f32 0.0, %v219
    %v221 = vpop.f32.mrb[0].mxu0
    %222 = vmatprep.mubr.f32.mxu0 0.0
    %v223 = vand.u32 %v47, 4294901760
    %v224 = vsub.f32 %v47, %v223
    %v225 = vand.u32 %v224, 4294901760
    %v226 = vsub.f32 %v224, %v225
    %v227 = vand.u32 %v226, 4294901760
    %228 = vmatmul.mubr.f32.gmra.mrb[0].mxu0 %v227
    %v229 = vpop.f32.mrb[0].mxu0
    %v230 = vadd.f32 0.0, %v229
    %v231 = vpop.f32.mrb[0].mxu0
    %232 = vmatprep.mubr.f32.mxu0 0.0
    %v233 = vand.u32 %v48, 4294901760
    %v234 = vsub.f32 %v48, %v233
    %v235 = vand.u32 %v234, 4294901760
    %v236 = vsub.f32 %v234, %v235
    %v237 = vand.u32 %v236, 4294901760
    %238 = vmatmul.mubr.f32.gmra.mrb[0].mxu0 %v237
    %v239 = vpop.f32.mrb[0].mxu0
    %v240 = vadd.f32 0.0, %v239
    %v241 = vpop.f32.mrb[0].mxu0
    %242 = vmatprep.mubr.f32.mxu0 0.0
    %v243 = vand.u32 %v49, 4294901760
    %v244 = vsub.f32 %v49, %v243
    %v245 = vand.u32 %v244, 4294901760
    %v246 = vsub.f32 %v244, %v245
    %v247 = vand.u32 %v246, 4294901760
    %248 = vmatmul.mubr.f32.gmra.mrb[0].mxu0 %v247
    %v249 = vpop.f32.mrb[0].mxu0
    %v250 = vadd.f32 0.0, %v249
    %v251 = vpop.f32.mrb[0].mxu0
    %252 = vmatprep.mubr.f32.mxu0 0.0
    %v253 = vand.u32 %v50, 4294901760
    %v254 = vsub.f32 %v50, %v253
    %v255 = vand.u32 %v254, 4294901760
    %v256 = vsub.f32 %v254, %v255
    %v257 = vand.u32 %v256, 4294901760
    %258 = vmatmul.mubr.f32.gmra.mrb[0].mxu0 %v257
    %v259 = vpop.f32.mrb[0].mxu0
    %v260 = vadd.f32 0.0, %v259
    %v261 = vpop.f32.mrb[0].mxu0
    %262 = vmatprep.mubr.f32.mxu0 0.0
    %v263 = vand.u32 %v51, 4294901760
    %v264 = vsub.f32 %v51, %v263
    %v265 = vand.u32 %v264, 4294901760
    %v266 = vsub.f32 %v264, %v265
    %v267 = vand.u32 %v266, 4294901760
    %268 = vmatmul.mubr.f32.gmra.mrb[0].mxu0 %v267
    %v269 = vpop.f32.mrb[0].mxu0
    %v270 = vadd.f32 0.0, %v269
    %v271 = vpop.f32.mrb[0].mxu0
    %272 = vmatprep.mubr.f32.mxu0 0.0
    %v273 = vand.u32 %v52, 4294901760
    %v274 = vsub.f32 %v52, %v273
    %v275 = vand.u32 %v274, 4294901760
    %v276 = vsub.f32 %v274, %v275
    %v277 = vand.u32 %v276, 4294901760
    %278 = vmatmul.mubr.f32.gmra.mrb[0].mxu0 %v277
    %v279 = vpop.f32.mrb[0].mxu0
    %v280 = vadd.f32 0.0, %v279
    %v281 = vpop.f32.mrb[0].mxu0
    %282 = vmatprep.mubr.f32.mxu0 0.0
    %v283 = vand.u32 %v53, 4294901760
    %v284 = vsub.f32 %v53, %v283
    %v285 = vand.u32 %v284, 4294901760
    %v286 = vsub.f32 %v284, %v285
    %v287 = vand.u32 %v286, 4294901760
    %288 = vmatmul.mubr.f32.gmra.mrb[0].mxu0 %v287
    %v289 = vpop.f32.mrb[0].mxu0
    %v290 = vadd.f32 0.0, %v289
    %v291 = vpop.f32.mrb[0].mxu0
    %292 = vmatprep.mubr.f32.mxu0 0.0
    %v293 = vand.u32 %v54, 4294901760
    %v294 = vsub.f32 %v54, %v293
    %v295 = vand.u32 %v294, 4294901760
    %v296 = vsub.f32 %v294, %v295
    %v297 = vand.u32 %v296, 4294901760
    %298 = vmatmul.mubr.f32.gmra.mrb[0].mxu0 %v297
    %v299 = vpop.f32.mrb[0].mxu0
    %v300 = vadd.f32 0.0, %v299
    %v301 = vpop.f32.mrb[0].mxu0
    %302 = vmatprep.mubr.f32.mxu0 0.0
    %v303 = vand.u32 %v55, 4294901760
    %v304 = vsub.f32 %v55, %v303
    %v305 = vand.u32 %v304, 4294901760
    %v306 = vsub.f32 %v304, %v305
    %v307 = vand.u32 %v306, 4294901760
    %308 = vmatmul.mubr.f32.gmra.mrb[0].mxu0 %v307
    %v309 = vpop.f32.mrb[0].mxu0
    %v310 = vadd.f32 0.0, %v309
    %v311 = vpop.f32.mrb[0].mxu0
    %312 = vdwg.mxu0
    %313 = vmatprep.subr.mxu0 0.0
    %v314 = vand.u32 %v56, 4294901760
    %v315 = vsub.f32 %v56, %v314
    %v316 = vand.u32 %v315, 4294901760
    %v317 = vsub.f32 %v315, %v316
    %v318 = vand.u32 %v317, 4294901760
    %319 = vmatpush1.msra.mxu0 %v318
    %320 = vmatprep.subr.mxu0 0.0
    %v321 = vand.u32 %v57, 4294901760
    %v322 = vsub.f32 %v57, %v321
    %v323 = vand.u32 %v322, 4294901760
    %v324 = vsub.f32 %v322, %v323
    %v325 = vand.u32 %v324, 4294901760
    %326 = vmatpush1.msra.mxu0 %v325
    %327 = vmatprep.subr.mxu0 0.0
    %v328 = vand.u32 %v58, 4294901760
    %v329 = vsub.f32 %v58, %v328
    %v330 = vand.u32 %v329, 4294901760
    %v331 = vsub.f32 %v329, %v330
    %v332 = vand.u32 %v331, 4294901760
    %333 = vmatpush1.msra.mxu0 %v332
    %334 = vmatprep.subr.mxu0 0.0
    %v335 = vand.u32 %v59, 4294901760
    %v336 = vsub.f32 %v59, %v335
    %v337 = vand.u32 %v336, 4294901760
    %v338 = vsub.f32 %v336, %v337
    %v339 = vand.u32 %v338, 4294901760
    %340 = vmatpush1.msra.mxu0 %v339
    %341 = vmatprep.subr.mxu0 0.0
    %v342 = vand.u32 %v60, 4294901760
    %v343 = vsub.f32 %v60, %v342
    %v344 = vand.u32 %v343, 4294901760
    %v345 = vsub.f32 %v343, %v344
    %v346 = vand.u32 %v345, 4294901760
    %347 = vmatpush1.msra.mxu0 %v346
    %348 = vmatprep.subr.mxu0 0.0
    %v349 = vand.u32 %v61, 4294901760
    %v350 = vsub.f32 %v61, %v349
    %v351 = vand.u32 %v350, 4294901760
    %v352 = vsub.f32 %v350, %v351
    %v353 = vand.u32 %v352, 4294901760
    %354 = vmatpush1.msra.mxu0 %v353
    %355 = vmatprep.subr.mxu0 0.0
    %v356 = vand.u32 %v62, 4294901760
    %v357 = vsub.f32 %v62, %v356
    %v358 = vand.u32 %v357, 4294901760
    %v359 = vsub.f32 %v357, %v358
    %v360 = vand.u32 %v359, 4294901760
    %361 = vmatpush1.msra.mxu0 %v360
    %362 = vmatprep.subr.mxu0 0.0
    %v363 = vand.u32 %v63, 4294901760
    %v364 = vsub.f32 %v63, %v363
    %v365 = vand.u32 %v364, 4294901760
    %v366 = vsub.f32 %v364, %v365
    %v367 = vand.u32 %v366, 4294901760
    %368 = vmatpush1.msra.mxu0 %v367
    %369 = vmatprep.subr.mxu0 0.0
    %v370 = vand.u32 %v64, 4294901760
    %v371 = vsub.f32 %v64, %v370
    %v372 = vand.u32 %v371, 4294901760
    %v373 = vsub.f32 %v371, %v372
    %v374 = vand.u32 %v373, 4294901760
    %375 = vmatpush1.msra.mxu0 %v374
    %376 = vmatprep.subr.mxu0 0.0
    %v377 = vand.u32 %v65, 4294901760
    %v378 = vsub.f32 %v65, %v377
    %v379 = vand.u32 %v378, 4294901760
    %v380 = vsub.f32 %v378, %v379
    %v381 = vand.u32 %v380, 4294901760
    %382 = vmatpush1.msra.mxu0 %v381
    %383 = vmatprep.subr.mxu0 0.0
    %v384 = vand.u32 %v66, 4294901760
    %v385 = vsub.f32 %v66, %v384
    %v386 = vand.u32 %v385, 4294901760
    %v387 = vsub.f32 %v385, %v386
    %v388 = vand.u32 %v387, 4294901760
    %389 = vmatpush1.msra.mxu0 %v388
    %390 = vmatprep.subr.mxu0 0.0
    %v391 = vand.u32 %v67, 4294901760
    %v392 = vsub.f32 %v67, %v391
    %v393 = vand.u32 %v392, 4294901760
    %v394 = vsub.f32 %v392, %v393
    %v395 = vand.u32 %v394, 4294901760
    %396 = vmatpush1.msra.mxu0 %v395
    %397 = vmatprep.subr.mxu0 0.0
    %v398 = vand.u32 %v68, 4294901760
    %v399 = vsub.f32 %v68, %v398
    %v400 = vand.u32 %v399, 4294901760
    %v401 = vsub.f32 %v399, %v400
    %v402 = vand.u32 %v401, 4294901760
    %403 = vmatpush1.msra.mxu0 %v402
    %404 = vmatprep.subr.mxu0 0.0
    %v405 = vand.u32 %v69, 4294901760
    %v406 = vsub.f32 %v69, %v405
    %v407 = vand.u32 %v406, 4294901760
    %v408 = vsub.f32 %v406, %v407
    %v409 = vand.u32 %v408, 4294901760
    %410 = vmatpush1.msra.mxu0 %v409
    %411 = vmatprep.subr.mxu0 0.0
    %v412 = vand.u32 %v70, 4294901760
    %v413 = vsub.f32 %v70, %v412
    %v414 = vand.u32 %v413, 4294901760
    %v415 = vsub.f32 %v413, %v414
    %v416 = vand.u32 %v415, 4294901760
    %417 = vmatpush1.msra.mxu0 %v416
    %418 = vmatprep.subr.mxu0 0.0
    %v419 = vand.u32 %v71, 4294901760
    %v420 = vsub.f32 %v71, %v419
    %v421 = vand.u32 %v420, 4294901760
    %v422 = vsub.f32 %v420, %v421
    %v423 = vand.u32 %v422, 4294901760
    %424 = vmatpush1.msra.mxu0 %v423
    %425 = vmatprep.subr.mxu0 0.0
    %426 = vmatpush1.msra.mxu0 0.0
    %427 = vmatprep.subr.mxu0 0.0
    %428 = vmatpush1.msra.mxu0 0.0
    %429 = vmatprep.subr.mxu0 0.0
    %430 = vmatpush1.msra.mxu0 0.0
    %431 = vmatprep.subr.mxu0 0.0
    %432 = vmatpush1.msra.mxu0 0.0
    %433 = vmatprep.subr.mxu0 0.0
    %434 = vmatpush1.msra.mxu0 0.0
    %435 = vmatprep.subr.mxu0 0.0
    %436 = vmatpush1.msra.mxu0 0.0
    %437 = vmatprep.subr.mxu0 0.0
    %438 = vmatpush1.msra.mxu0 0.0
    %439 = vmatprep.subr.mxu0 0.0
    %440 = vmatpush1.msra.mxu0 0.0
    %441 = vmatprep.subr.mxu0 0.0
    %442 = vmatpush1.msra.mxu0 0.0
    %443 = vmatprep.subr.mxu0 0.0
    %444 = vmatpush1.msra.mxu0 0.0
    %445 = vmatprep.subr.mxu0 0.0
    %446 = vmatpush1.msra.mxu0 0.0
    %447 = vmatprep.subr.mxu0 0.0
    %448 = vmatpush1.msra.mxu0 0.0
    %449 = vmatprep.subr.mxu0 0.0
    %450 = vmatpush1.msra.mxu0 0.0
    %451 = vmatprep.subr.mxu0 0.0
    %452 = vmatpush1.msra.mxu0 0.0
    %453 = vmatprep.subr.mxu0 0.0
    %454 = vmatpush1.msra.mxu0 0.0
    %455 = vmatprep.subr.mxu0 0.0
    %456 = vmatpush1.msra.mxu0 0.0
    %457 = vmatprep.mubr.f32.mxu0 0.0
    %v458 = vand.u32 %v40, 4294901760
    %459 = vmatmul.mubr.f32.gmra.mrb[0].mxu0 %v458
    %v460 = vpop.f32.mrb[0].mxu0
    %v461 = vadd.f32 %v160, %v460
    %v462 = vpop.f32.mrb[0].mxu0
    %463 = vmatprep.mubr.f32.mxu0 0.0
    %v464 = vand.u32 %v41, 4294901760
    %465 = vmatmul.mubr.f32.gmra.mrb[0].mxu0 %v464
    %v466 = vpop.f32.mrb[0].mxu0
    %v467 = vadd.f32 %v170, %v466
    %v468 = vpop.f32.mrb[0].mxu0
    %469 = vmatprep.mubr.f32.mxu0 0.0
    %v470 = vand.u32 %v42, 4294901760
    %471 = vmatmul.mubr.f32.gmra.mrb[0].mxu0 %v470
    %v472 = vpop.f32.mrb[0].mxu0
    %v473 = vadd.f32 %v180, %v472
    %v474 = vpop.f32.mrb[0].mxu0
    %475 = vmatprep.mubr.f32.mxu0 0.0
    %v476 = vand.u32 %v43, 4294901760
    %477 = vmatmul.mubr.f32.gmra.mrb[0].mxu0 %v476
    %v478 = vpop.f32.mrb[0].mxu0
    %v479 = vadd.f32 %v190, %v478
    %v480 = vpop.f32.mrb[0].mxu0
    %481 = vmatprep.mubr.f32.mxu0 0.0
    %v482 = vand.u32 %v44, 4294901760
    %483 = vmatmul.mubr.f32.gmra.mrb[0].mxu0 %v482
    %v484 = vpop.f32.mrb[0].mxu0
    %v485 = vadd.f32 %v200, %v484
    %v486 = vpop.f32.mrb[0].mxu0
    %487 = vmatprep.mubr.f32.mxu0 0.0
    %v488 = vand.u32 %v45, 4294901760
    %489 = vmatmul.mubr.f32.gmra.mrb[0].mxu0 %v488
    %v490 = vpop.f32.mrb[0].mxu0
    %v491 = vadd.f32 %v210, %v490
    %v492 = vpop.f32.mrb[0].mxu0
    %493 = vmatprep.mubr.f32.mxu0 0.0
    %v494 = vand.u32 %v46, 4294901760
    %495 = vmatmul.mubr.f32.gmra.mrb[0].mxu0 %v494
    %v496 = vpop.f32.mrb[0].mxu0
    %v497 = vadd.f32 %v220, %v496
    %v498 = vpop.f32.mrb[0].mxu0
    %499 = vmatprep.mubr.f32.mxu0 0.0
    %v500 = vand.u32 %v47, 4294901760
    %501 = vmatmul.mubr.f32.gmra.mrb[0].mxu0 %v500
    %v502 = vpop.f32.mrb[0].mxu0
    %v503 = vadd.f32 %v230, %v502
    %v504 = vpop.f32.mrb[0].mxu0
    %505 = vmatprep.mubr.f32.mxu0 0.0
    %v506 = vand.u32 %v48, 4294901760
    %507 = vmatmul.mubr.f32.gmra.mrb[0].mxu0 %v506
    %v508 = vpop.f32.mrb[0].mxu0
    %v509 = vadd.f32 %v240, %v508
    %v510 = vpop.f32.mrb[0].mxu0
    %511 = vmatprep.mubr.f32.mxu0 0.0
    %v512 = vand.u32 %v49, 4294901760
    %513 = vmatmul.mubr.f32.gmra.mrb[0].mxu0 %v512
    %v514 = vpop.f32.mrb[0].mxu0
    %v515 = vadd.f32 %v250, %v514
    %v516 = vpop.f32.mrb[0].mxu0
    %517 = vmatprep.mubr.f32.mxu0 0.0
    %v518 = vand.u32 %v50, 4294901760
    %519 = vmatmul.mubr.f32.gmra.mrb[0].mxu0 %v518
    %v520 = vpop.f32.mrb[0].mxu0
    %v521 = vadd.f32 %v260, %v520
    %v522 = vpop.f32.mrb[0].mxu0
    %523 = vmatprep.mubr.f32.mxu0 0.0
    %v524 = vand.u32 %v51, 4294901760
    %525 = vmatmul.mubr.f32.gmra.mrb[0].mxu0 %v524
    %v526 = vpop.f32.mrb[0].mxu0
    %v527 = vadd.f32 %v270, %v526
    %v528 = vpop.f32.mrb[0].mxu0
    %529 = vmatprep.mubr.f32.mxu0 0.0
    %v530 = vand.u32 %v52, 4294901760
    %531 = vmatmul.mubr.f32.gmra.mrb[0].mxu0 %v530
    %v532 = vpop.f32.mrb[0].mxu0
    %v533 = vadd.f32 %v280, %v532
    %v534 = vpop.f32.mrb[0].mxu0
    %535 = vmatprep.mubr.f32.mxu0 0.0
    %v536 = vand.u32 %v53, 4294901760
    %537 = vmatmul.mubr.f32.gmra.mrb[0].mxu0 %v536
    %v538 = vpop.f32.mrb[0].mxu0
    %v539 = vadd.f32 %v290, %v538
    %v540 = vpop.f32.mrb[0].mxu0
    %541 = vmatprep.mubr.f32.mxu0 0.0
    %v542 = vand.u32 %v54, 4294901760
    %543 = vmatmul.mubr.f32.gmra.mrb[0].mxu0 %v542
    %v544 = vpop.f32.mrb[0].mxu0
    %v545 = vadd.f32 %v300, %v544
    %v546 = vpop.f32.mrb[0].mxu0
    %547 = vmatprep.mubr.f32.mxu0 0.0
    %v548 = vand.u32 %v55, 4294901760
    %549 = vmatmul.mubr.f32.gmra.mrb[0].mxu0 %v548
    %v550 = vpop.f32.mrb[0].mxu0
    %v551 = vadd.f32 %v310, %v550
    %v552 = vpop.f32.mrb[0].mxu0
    %553 = vdwg.mxu0
    %554 = vmatprep.subr.mxu0 0.0
    %v555 = vand.u32 %v56, 4294901760
    %v556 = vsub.f32 %v56, %v555
    %557 = vmatpush1.msra.mxu0 %v556
    %558 = vmatprep.subr.mxu0 0.0
    %v559 = vand.u32 %v57, 4294901760
    %v560 = vsub.f32 %v57, %v559
    %561 = vmatpush1.msra.mxu0 %v560
    %562 = vmatprep.subr.mxu0 0.0
    %v563 = vand.u32 %v58, 4294901760
    %v564 = vsub.f32 %v58, %v563
    %565 = vmatpush1.msra.mxu0 %v564
    %566 = vmatprep.subr.mxu0 0.0
    %v567 = vand.u32 %v59, 4294901760
    %v568 = vsub.f32 %v59, %v567
    %569 = vmatpush1.msra.mxu0 %v568
    %570 = vmatprep.subr.mxu0 0.0
    %v571 = vand.u32 %v60, 4294901760
    %v572 = vsub.f32 %v60, %v571
    %573 = vmatpush1.msra.mxu0 %v572
    %574 = vmatprep.subr.mxu0 0.0
    %v575 = vand.u32 %v61, 4294901760
    %v576 = vsub.f32 %v61, %v575
    %577 = vmatpush1.msra.mxu0 %v576
    %578 = vmatprep.subr.mxu0 0.0
    %v579 = vand.u32 %v62, 4294901760
    %v580 = vsub.f32 %v62, %v579
    %581 = vmatpush1.msra.mxu0 %v580
    %582 = vmatprep.subr.mxu0 0.0
    %v583 = vand.u32 %v63, 4294901760
    %v584 = vsub.f32 %v63, %v583
    %585 = vmatpush1.msra.mxu0 %v584
    %586 = vmatprep.subr.mxu0 0.0
    %v587 = vand.u32 %v64, 4294901760
    %v588 = vsub.f32 %v64, %v587
    %589 = vmatpush1.msra.mxu0 %v588
    %590 = vmatprep.subr.mxu0 0.0
    %v591 = vand.u32 %v65, 4294901760
    %v592 = vsub.f32 %v65, %v591
    %593 = vmatpush1.msra.mxu0 %v592
    %594 = vmatprep.subr.mxu0 0.0
    %v595 = vand.u32 %v66, 4294901760
    %v596 = vsub.f32 %v66, %v595
    %597 = vmatpush1.msra.mxu0 %v596
    %598 = vmatprep.subr.mxu0 0.0
    %v599 = vand.u32 %v67, 4294901760
    %v600 = vsub.f32 %v67, %v599
    %601 = vmatpush1.msra.mxu0 %v600
    %602 = vmatprep.subr.mxu0 0.0
    %v603 = vand.u32 %v68, 4294901760
    %v604 = vsub.f32 %v68, %v603
    %605 = vmatpush1.msra.mxu0 %v604
    %606 = vmatprep.subr.mxu0 0.0
    %v607 = vand.u32 %v69, 4294901760
    %v608 = vsub.f32 %v69, %v607
    %609 = vmatpush1.msra.mxu0 %v608
    %610 = vmatprep.subr.mxu0 0.0
    %v611 = vand.u32 %v70, 4294901760
    %v612 = vsub.f32 %v70, %v611
    %613 = vmatpush1.msra.mxu0 %v612
    %614 = vmatprep.subr.mxu0 0.0
    %v615 = vand.u32 %v71, 4294901760
    %v616 = vsub.f32 %v71, %v615
    %617 = vmatpush1.msra.mxu0 %v616
    %618 = vmatprep.subr.mxu0 0.0
    %619 = vmatpush1.msra.mxu0 0.0
    %620 = vmatprep.subr.mxu0 0.0
    %621 = vmatpush1.msra.mxu0 0.0
    %622 = vmatprep.subr.mxu0 0.0
    %623 = vmatpush1.msra.mxu0 0.0
    %624 = vmatprep.subr.mxu0 0.0
    %625 = vmatpush1.msra.mxu0 0.0
    %626 = vmatprep.subr.mxu0 0.0
    %627 = vmatpush1.msra.mxu0 0.0
    %628 = vmatprep.subr.mxu0 0.0
    %629 = vmatpush1.msra.mxu0 0.0
    %630 = vmatprep.subr.mxu0 0.0
    %631 = vmatpush1.msra.mxu0 0.0
    %632 = vmatprep.subr.mxu0 0.0
    %633 = vmatpush1.msra.mxu0 0.0
    %634 = vmatprep.subr.mxu0 0.0
    %635 = vmatpush1.msra.mxu0 0.0
    %636 = vmatprep.subr.mxu0 0.0
    %637 = vmatpush1.msra.mxu0 0.0
    %638 = vmatprep.subr.mxu0 0.0
    %639 = vmatpush1.msra.mxu0 0.0
    %640 = vmatprep.subr.mxu0 0.0
    %641 = vmatpush1.msra.mxu0 0.0
    %642 = vmatprep.subr.mxu0 0.0
    %643 = vmatpush1.msra.mxu0 0.0
    %644 = vmatprep.subr.mxu0 0.0
    %645 = vmatpush1.msra.mxu0 0.0
    %646 = vmatprep.subr.mxu0 0.0
    %647 = vmatpush1.msra.mxu0 0.0
    %648 = vmatprep.subr.mxu0 0.0
    %649 = vmatpush1.msra.mxu0 0.0
    %650 = vmatprep.mubr.f32.mxu0 0.0
    %v651 = vand.u32 %v40, 4294901760
    %v652 = vsub.f32 %v40, %v651
    %653 = vmatmul.mubr.f32.gmra.mrb[0].mxu0 %v652
    %v654 = vpop.f32.mrb[0].mxu0
    %v655 = vadd.f32 %v461, %v654
    %v656 = vpop.f32.mrb[0].mxu0
    %657 = vmatprep.mubr.f32.mxu0 0.0
    %v658 = vand.u32 %v41, 4294901760
    %v659 = vsub.f32 %v41, %v658
    %660 = vmatmul.mubr.f32.gmra.mrb[0].mxu0 %v659
    %v661 = vpop.f32.mrb[0].mxu0
    %v662 = vadd.f32 %v467, %v661
    %v663 = vpop.f32.mrb[0].mxu0
    %664 = vmatprep.mubr.f32.mxu0 0.0
    %v665 = vand.u32 %v42, 4294901760
    %v666 = vsub.f32 %v42, %v665
    %667 = vmatmul.mubr.f32.gmra.mrb[0].mxu0 %v666
    %v668 = vpop.f32.mrb[0].mxu0
    %v669 = vadd.f32 %v473, %v668
    %v670 = vpop.f32.mrb[0].mxu0
    %671 = vmatprep.mubr.f32.mxu0 0.0
    %v672 = vand.u32 %v43, 4294901760
    %v673 = vsub.f32 %v43, %v672
    %674 = vmatmul.mubr.f32.gmra.mrb[0].mxu0 %v673
    %v675 = vpop.f32.mrb[0].mxu0
    %v676 = vadd.f32 %v479, %v675
    %v677 = vpop.f32.mrb[0].mxu0
    %678 = vmatprep.mubr.f32.mxu0 0.0
    %v679 = vand.u32 %v44, 4294901760
    %v680 = vsub.f32 %v44, %v679
    %681 = vmatmul.mubr.f32.gmra.mrb[0].mxu0 %v680
    %v682 = vpop.f32.mrb[0].mxu0
    %v683 = vadd.f32 %v485, %v682
    %v684 = vpop.f32.mrb[0].mxu0
    %685 = vmatprep.mubr.f32.mxu0 0.0
    %v686 = vand.u32 %v45, 4294901760
    %v687 = vsub.f32 %v45, %v686
    %688 = vmatmul.mubr.f32.gmra.mrb[0].mxu0 %v687
    %v689 = vpop.f32.mrb[0].mxu0
    %v690 = vadd.f32 %v491, %v689
    %v691 = vpop.f32.mrb[0].mxu0
    %692 = vmatprep.mubr.f32.mxu0 0.0
    %v693 = vand.u32 %v46, 4294901760
    %v694 = vsub.f32 %v46, %v693
    %695 = vmatmul.mubr.f32.gmra.mrb[0].mxu0 %v694
    %v696 = vpop.f32.mrb[0].mxu0
    %v697 = vadd.f32 %v497, %v696
    %v698 = vpop.f32.mrb[0].mxu0
    %699 = vmatprep.mubr.f32.mxu0 0.0
    %v700 = vand.u32 %v47, 4294901760
    %v701 = vsub.f32 %v47, %v700
    %702 = vmatmul.mubr.f32.gmra.mrb[0].mxu0 %v701
    %v703 = vpop.f32.mrb[0].mxu0
    %v704 = vadd.f32 %v503, %v703
    %v705 = vpop.f32.mrb[0].mxu0
    %706 = vmatprep.mubr.f32.mxu0 0.0
    %v707 = vand.u32 %v48, 4294901760
    %v708 = vsub.f32 %v48, %v707
    %709 = vmatmul.mubr.f32.gmra.mrb[0].mxu0 %v708
    %v710 = vpop.f32.mrb[0].mxu0
    %v711 = vadd.f32 %v509, %v710
    %v712 = vpop.f32.mrb[0].mxu0
    %713 = vmatprep.mubr.f32.mxu0 0.0
    %v714 = vand.u32 %v49, 4294901760
    %v715 = vsub.f32 %v49, %v714
    %716 = vmatmul.mubr.f32.gmra.mrb[0].mxu0 %v715
    %v717 = vpop.f32.mrb[0].mxu0
    %v718 = vadd.f32 %v515, %v717
    %v719 = vpop.f32.mrb[0].mxu0
    %720 = vmatprep.mubr.f32.mxu0 0.0
    %v721 = vand.u32 %v50, 4294901760
    %v722 = vsub.f32 %v50, %v721
    %723 = vmatmul.mubr.f32.gmra.mrb[0].mxu0 %v722
    %v724 = vpop.f32.mrb[0].mxu0
    %v725 = vadd.f32 %v521, %v724
    %v726 = vpop.f32.mrb[0].mxu0
    %727 = vmatprep.mubr.f32.mxu0 0.0
    %v728 = vand.u32 %v51, 4294901760
    %v729 = vsub.f32 %v51, %v728
    %730 = vmatmul.mubr.f32.gmra.mrb[0].mxu0 %v729
    %v731 = vpop.f32.mrb[0].mxu0
    %v732 = vadd.f32 %v527, %v731
    %v733 = vpop.f32.mrb[0].mxu0
    %734 = vmatprep.mubr.f32.mxu0 0.0
    %v735 = vand.u32 %v52, 4294901760
    %v736 = vsub.f32 %v52, %v735
    %737 = vmatmul.mubr.f32.gmra.mrb[0].mxu0 %v736
    %v738 = vpop.f32.mrb[0].mxu0
    %v739 = vadd.f32 %v533, %v738
    %v740 = vpop.f32.mrb[0].mxu0
    %741 = vmatprep.mubr.f32.mxu0 0.0
    %v742 = vand.u32 %v53, 4294901760
    %v743 = vsub.f32 %v53, %v742
    %744 = vmatmul.mubr.f32.gmra.mrb[0].mxu0 %v743
    %v745 = vpop.f32.mrb[0].mxu0
    %v746 = vadd.f32 %v539, %v745
    %v747 = vpop.f32.mrb[0].mxu0
    %748 = vmatprep.mubr.f32.mxu0 0.0
    %v749 = vand.u32 %v54, 4294901760
    %v750 = vsub.f32 %v54, %v749
    %751 = vmatmul.mubr.f32.gmra.mrb[0].mxu0 %v750
    %v752 = vpop.f32.mrb[0].mxu0
    %v753 = vadd.f32 %v545, %v752
    %v754 = vpop.f32.mrb[0].mxu0
    %755 = vmatprep.mubr.f32.mxu0 0.0
    %v756 = vand.u32 %v55, 4294901760
    %v757 = vsub.f32 %v55, %v756
    %758 = vmatmul.mubr.f32.gmra.mrb[0].mxu0 %v757
    %v759 = vpop.f32.mrb[0].mxu0
    %v760 = vadd.f32 %v551, %v759
    %v761 = vpop.f32.mrb[0].mxu0
    %762 = vdwg.mxu0
    %763 = vmatprep.subr.mxu0 0.0
    %v764 = vand.u32 %v56, 4294901760
    %765 = vmatpush1.msra.mxu0 %v764
    %766 = vmatprep.subr.mxu0 0.0
    %v767 = vand.u32 %v57, 4294901760
    %768 = vmatpush1.msra.mxu0 %v767
    %769 = vmatprep.subr.mxu0 0.0
    %v770 = vand.u32 %v58, 4294901760
    %771 = vmatpush1.msra.mxu0 %v770
    %772 = vmatprep.subr.mxu0 0.0
    %v773 = vand.u32 %v59, 4294901760
    %774 = vmatpush1.msra.mxu0 %v773
    %775 = vmatprep.subr.mxu0 0.0
    %v776 = vand.u32 %v60, 4294901760
    %777 = vmatpush1.msra.mxu0 %v776
    %778 = vmatprep.subr.mxu0 0.0
    %v779 = vand.u32 %v61, 4294901760
    %780 = vmatpush1.msra.mxu0 %v779
    %781 = vmatprep.subr.mxu0 0.0
    %v782 = vand.u32 %v62, 4294901760
    %783 = vmatpush1.msra.mxu0 %v782
    %784 = vmatprep.subr.mxu0 0.0
    %v785 = vand.u32 %v63, 4294901760
    %786 = vmatpush1.msra.mxu0 %v785
    %787 = vmatprep.subr.mxu0 0.0
    %v788 = vand.u32 %v64, 4294901760
    %789 = vmatpush1.msra.mxu0 %v788
    %790 = vmatprep.subr.mxu0 0.0
    %v791 = vand.u32 %v65, 4294901760
    %792 = vmatpush1.msra.mxu0 %v791
    %793 = vmatprep.subr.mxu0 0.0
    %v794 = vand.u32 %v66, 4294901760
    %795 = vmatpush1.msra.mxu0 %v794
    %796 = vmatprep.subr.mxu0 0.0
    %v797 = vand.u32 %v67, 4294901760
    %798 = vmatpush1.msra.mxu0 %v797
    %799 = vmatprep.subr.mxu0 0.0
    %v800 = vand.u32 %v68, 4294901760
    %801 = vmatpush1.msra.mxu0 %v800
    %802 = vmatprep.subr.mxu0 0.0
    %v803 = vand.u32 %v69, 4294901760
    %804 = vmatpush1.msra.mxu0 %v803
    %805 = vmatprep.subr.mxu0 0.0
    %v806 = vand.u32 %v70, 4294901760
    %807 = vmatpush1.msra.mxu0 %v806
    %808 = vmatprep.subr.mxu0 0.0
    %v809 = vand.u32 %v71, 4294901760
    %810 = vmatpush1.msra.mxu0 %v809
    %811 = vmatprep.subr.mxu0 0.0
    %812 = vmatpush1.msra.mxu0 0.0
    %813 = vmatprep.subr.mxu0 0.0
    %814 = vmatpush1.msra.mxu0 0.0
    %815 = vmatprep.subr.mxu0 0.0
    %816 = vmatpush1.msra.mxu0 0.0
    %817 = vmatprep.subr.mxu0 0.0
    %818 = vmatpush1.msra.mxu0 0.0
    %819 = vmatprep.subr.mxu0 0.0
    %820 = vmatpush1.msra.mxu0 0.0
    %821 = vmatprep.subr.mxu0 0.0
    %822 = vmatpush1.msra.mxu0 0.0
    %823 = vmatprep.subr.mxu0 0.0
    %824 = vmatpush1.msra.mxu0 0.0
    %825 = vmatprep.subr.mxu0 0.0
    %826 = vmatpush1.msra.mxu0 0.0
    %827 = vmatprep.subr.mxu0 0.0
    %828 = vmatpush1.msra.mxu0 0.0
    %829 = vmatprep.subr.mxu0 0.0
    %830 = vmatpush1.msra.mxu0 0.0
    %831 = vmatprep.subr.mxu0 0.0
    %832 = vmatpush1.msra.mxu0 0.0
    %833 = vmatprep.subr.mxu0 0.0
    %834 = vmatpush1.msra.mxu0 0.0
    %835 = vmatprep.subr.mxu0 0.0
    %836 = vmatpush1.msra.mxu0 0.0
    %837 = vmatprep.subr.mxu0 0.0
    %838 = vmatpush1.msra.mxu0 0.0
    %839 = vmatprep.subr.mxu0 0.0
    %840 = vmatpush1.msra.mxu0 0.0
    %841 = vmatprep.subr.mxu0 0.0
    %842 = vmatpush1.msra.mxu0 0.0
    %843 = vmatprep.mubr.f32.mxu0 0.0
    %v844 = vand.u32 %v40, 4294901760
    %v845 = vsub.f32 %v40, %v844
    %v846 = vand.u32 %v845, 4294901760
    %847 = vmatmul.mubr.f32.gmra.mrb[0].mxu0 %v846
    %v848 = vpop.f32.mrb[0].mxu0
    %v849 = vadd.f32 %v655, %v848
    %v850 = vpop.f32.mrb[0].mxu0
    %851 = vmatprep.mubr.f32.mxu0 0.0
    %v852 = vand.u32 %v41, 4294901760
    %v853 = vsub.f32 %v41, %v852
    %v854 = vand.u32 %v853, 4294901760
    %855 = vmatmul.mubr.f32.gmra.mrb[0].mxu0 %v854
    %v856 = vpop.f32.mrb[0].mxu0
    %v857 = vadd.f32 %v662, %v856
    %v858 = vpop.f32.mrb[0].mxu0
    %859 = vmatprep.mubr.f32.mxu0 0.0
    %v860 = vand.u32 %v42, 4294901760
    %v861 = vsub.f32 %v42, %v860
    %v862 = vand.u32 %v861, 4294901760
    %863 = vmatmul.mubr.f32.gmra.mrb[0].mxu0 %v862
    %v864 = vpop.f32.mrb[0].mxu0
    %v865 = vadd.f32 %v669, %v864
    %v866 = vpop.f32.mrb[0].mxu0
    %867 = vmatprep.mubr.f32.mxu0 0.0
    %v868 = vand.u32 %v43, 4294901760
    %v869 = vsub.f32 %v43, %v868
    %v870 = vand.u32 %v869, 4294901760
    %871 = vmatmul.mubr.f32.gmra.mrb[0].mxu0 %v870
    %v872 = vpop.f32.mrb[0].mxu0
    %v873 = vadd.f32 %v676, %v872
    %v874 = vpop.f32.mrb[0].mxu0
    %875 = vmatprep.mubr.f32.mxu0 0.0
    %v876 = vand.u32 %v44, 4294901760
    %v877 = vsub.f32 %v44, %v876
    %v878 = vand.u32 %v877, 4294901760
    %879 = vmatmul.mubr.f32.gmra.mrb[0].mxu0 %v878
    %v880 = vpop.f32.mrb[0].mxu0
    %v881 = vadd.f32 %v683, %v880
    %v882 = vpop.f32.mrb[0].mxu0
    %883 = vmatprep.mubr.f32.mxu0 0.0
    %v884 = vand.u32 %v45, 4294901760
    %v885 = vsub.f32 %v45, %v884
    %v886 = vand.u32 %v885, 4294901760
    %887 = vmatmul.mubr.f32.gmra.mrb[0].mxu0 %v886
    %v888 = vpop.f32.mrb[0].mxu0
    %v889 = vadd.f32 %v690, %v888
    %v890 = vpop.f32.mrb[0].mxu0
    %891 = vmatprep.mubr.f32.mxu0 0.0
    %v892 = vand.u32 %v46, 4294901760
    %v893 = vsub.f32 %v46, %v892
    %v894 = vand.u32 %v893, 4294901760
    %895 = vmatmul.mubr.f32.gmra.mrb[0].mxu0 %v894
    %v896 = vpop.f32.mrb[0].mxu0
    %v897 = vadd.f32 %v697, %v896
    %v898 = vpop.f32.mrb[0].mxu0
    %899 = vmatprep.mubr.f32.mxu0 0.0
    %v900 = vand.u32 %v47, 4294901760
    %v901 = vsub.f32 %v47, %v900
    %v902 = vand.u32 %v901, 4294901760
    %903 = vmatmul.mubr.f32.gmra.mrb[0].mxu0 %v902
    %v904 = vpop.f32.mrb[0].mxu0
    %v905 = vadd.f32 %v704, %v904
    %v906 = vpop.f32.mrb[0].mxu0
    %907 = vmatprep.mubr.f32.mxu0 0.0
    %v908 = vand.u32 %v48, 4294901760
    %v909 = vsub.f32 %v48, %v908
    %v910 = vand.u32 %v909, 4294901760
    %911 = vmatmul.mubr.f32.gmra.mrb[0].mxu0 %v910
    %v912 = vpop.f32.mrb[0].mxu0
    %v913 = vadd.f32 %v711, %v912
    %v914 = vpop.f32.mrb[0].mxu0
    %915 = vmatprep.mubr.f32.mxu0 0.0
    %v916 = vand.u32 %v49, 4294901760
    %v917 = vsub.f32 %v49, %v916
    %v918 = vand.u32 %v917, 4294901760
    %919 = vmatmul.mubr.f32.gmra.mrb[0].mxu0 %v918
    %v920 = vpop.f32.mrb[0].mxu0
    %v921 = vadd.f32 %v718, %v920
    %v922 = vpop.f32.mrb[0].mxu0
    %923 = vmatprep.mubr.f32.mxu0 0.0
    %v924 = vand.u32 %v50, 4294901760
    %v925 = vsub.f32 %v50, %v924
    %v926 = vand.u32 %v925, 4294901760
    %927 = vmatmul.mubr.f32.gmra.mrb[0].mxu0 %v926
    %v928 = vpop.f32.mrb[0].mxu0
    %v929 = vadd.f32 %v725, %v928
    %v930 = vpop.f32.mrb[0].mxu0
    %931 = vmatprep.mubr.f32.mxu0 0.0
    %v932 = vand.u32 %v51, 4294901760
    %v933 = vsub.f32 %v51, %v932
    %v934 = vand.u32 %v933, 4294901760
    %935 = vmatmul.mubr.f32.gmra.mrb[0].mxu0 %v934
    %v936 = vpop.f32.mrb[0].mxu0
    %v937 = vadd.f32 %v732, %v936
    %v938 = vpop.f32.mrb[0].mxu0
    %939 = vmatprep.mubr.f32.mxu0 0.0
    %v940 = vand.u32 %v52, 4294901760
    %v941 = vsub.f32 %v52, %v940
    %v942 = vand.u32 %v941, 4294901760
    %943 = vmatmul.mubr.f32.gmra.mrb[0].mxu0 %v942
    %v944 = vpop.f32.mrb[0].mxu0
    %v945 = vadd.f32 %v739, %v944
    %v946 = vpop.f32.mrb[0].mxu0
    %947 = vmatprep.mubr.f32.mxu0 0.0
    %v948 = vand.u32 %v53, 4294901760
    %v949 = vsub.f32 %v53, %v948
    %v950 = vand.u32 %v949, 4294901760
    %951 = vmatmul.mubr.f32.gmra.mrb[0].mxu0 %v950
    %v952 = vpop.f32.mrb[0].mxu0
    %v953 = vadd.f32 %v746, %v952
    %v954 = vpop.f32.mrb[0].mxu0
    %955 = vmatprep.mubr.f32.mxu0 0.0
    %v956 = vand.u32 %v54, 4294901760
    %v957 = vsub.f32 %v54, %v956
    %v958 = vand.u32 %v957, 4294901760
    %959 = vmatmul.mubr.f32.gmra.mrb[0].mxu0 %v958
    %v960 = vpop.f32.mrb[0].mxu0
    %v961 = vadd.f32 %v753, %v960
    %v962 = vpop.f32.mrb[0].mxu0
    %963 = vmatprep.mubr.f32.mxu0 0.0
    %v964 = vand.u32 %v55, 4294901760
    %v965 = vsub.f32 %v55, %v964
    %v966 = vand.u32 %v965, 4294901760
    %967 = vmatmul.mubr.f32.gmra.mrb[0].mxu0 %v966
    %v968 = vpop.f32.mrb[0].mxu0
    %v969 = vadd.f32 %v760, %v968
    %v970 = vpop.f32.mrb[0].mxu0
    %971 = vdwg.mxu0
    %972 = vmatprep.subr.mxu0 0.0
    %v973 = vand.u32 %v56, 4294901760
    %v974 = vsub.f32 %v56, %v973
    %v975 = vand.u32 %v974, 4294901760
    %976 = vmatpush1.msra.mxu0 %v975
    %977 = vmatprep.subr.mxu0 0.0
    %v978 = vand.u32 %v57, 4294901760
    %v979 = vsub.f32 %v57, %v978
    %v980 = vand.u32 %v979, 4294901760
    %981 = vmatpush1.msra.mxu0 %v980
    %982 = vmatprep.subr.mxu0 0.0
    %v983 = vand.u32 %v58, 4294901760
    %v984 = vsub.f32 %v58, %v983
    %v985 = vand.u32 %v984, 4294901760
    %986 = vmatpush1.msra.mxu0 %v985
    %987 = vmatprep.subr.mxu0 0.0
    %v988 = vand.u32 %v59, 4294901760
    %v989 = vsub.f32 %v59, %v988
    %v990 = vand.u32 %v989, 4294901760
    %991 = vmatpush1.msra.mxu0 %v990
    %992 = vmatprep.subr.mxu0 0.0
    %v993 = vand.u32 %v60, 4294901760
    %v994 = vsub.f32 %v60, %v993
    %v995 = vand.u32 %v994, 4294901760
    %996 = vmatpush1.msra.mxu0 %v995
    %997 = vmatprep.subr.mxu0 0.0
    %v998 = vand.u32 %v61, 4294901760
    %v999 = vsub.f32 %v61, %v998
    %v1000 = vand.u32 %v999, 4294901760
    %1001 = vmatpush1.msra.mxu0 %v1000
    %1002 = vmatprep.subr.mxu0 0.0
    %v1003 = vand.u32 %v62, 4294901760
    %v1004 = vsub.f32 %v62, %v1003
    %v1005 = vand.u32 %v1004, 4294901760
    %1006 = vmatpush1.msra.mxu0 %v1005
    %1007 = vmatprep.subr.mxu0 0.0
    %v1008 = vand.u32 %v63, 4294901760
    %v1009 = vsub.f32 %v63, %v1008
    %v1010 = vand.u32 %v1009, 4294901760
    %1011 = vmatpush1.msra.mxu0 %v1010
    %1012 = vmatprep.subr.mxu0 0.0
    %v1013 = vand.u32 %v64, 4294901760
    %v1014 = vsub.f32 %v64, %v1013
    %v1015 = vand.u32 %v1014, 4294901760
    %1016 = vmatpush1.msra.mxu0 %v1015
    %1017 = vmatprep.subr.mxu0 0.0
    %v1018 = vand.u32 %v65, 4294901760
    %v1019 = vsub.f32 %v65, %v1018
    %v1020 = vand.u32 %v1019, 4294901760
    %1021 = vmatpush1.msra.mxu0 %v1020
    %1022 = vmatprep.subr.mxu0 0.0
    %v1023 = vand.u32 %v66, 4294901760
    %v1024 = vsub.f32 %v66, %v1023
    %v1025 = vand.u32 %v1024, 4294901760
    %1026 = vmatpush1.msra.mxu0 %v1025
    %1027 = vmatprep.subr.mxu0 0.0
    %v1028 = vand.u32 %v67, 4294901760
    %v1029 = vsub.f32 %v67, %v1028
    %v1030 = vand.u32 %v1029, 4294901760
    %1031 = vmatpush1.msra.mxu0 %v1030
    %1032 = vmatprep.subr.mxu0 0.0
    %v1033 = vand.u32 %v68, 4294901760
    %v1034 = vsub.f32 %v68, %v1033
    %v1035 = vand.u32 %v1034, 4294901760
    %1036 = vmatpush1.msra.mxu0 %v1035
    %1037 = vmatprep.subr.mxu0 0.0
    %v1038 = vand.u32 %v69, 4294901760
    %v1039 = vsub.f32 %v69, %v1038
    %v1040 = vand.u32 %v1039, 4294901760
    %1041 = vmatpush1.msra.mxu0 %v1040
    %1042 = vmatprep.subr.mxu0 0.0
    %v1043 = vand.u32 %v70, 4294901760
    %v1044 = vsub.f32 %v70, %v1043
    %v1045 = vand.u32 %v1044, 4294901760
    %1046 = vmatpush1.msra.mxu0 %v1045
    %1047 = vmatprep.subr.mxu0 0.0
    %v1048 = vand.u32 %v71, 4294901760
    %v1049 = vsub.f32 %v71, %v1048
    %v1050 = vand.u32 %v1049, 4294901760
    %1051 = vmatpush1.msra.mxu0 %v1050
    %1052 = vmatprep.subr.mxu0 0.0
    %1053 = vmatpush1.msra.mxu0 0.0
    %1054 = vmatprep.subr.mxu0 0.0
    %1055 = vmatpush1.msra.mxu0 0.0
    %1056 = vmatprep.subr.mxu0 0.0
    %1057 = vmatpush1.msra.mxu0 0.0
    %1058 = vmatprep.subr.mxu0 0.0
    %1059 = vmatpush1.msra.mxu0 0.0
    %1060 = vmatprep.subr.mxu0 0.0
    %1061 = vmatpush1.msra.mxu0 0.0
    %1062 = vmatprep.subr.mxu0 0.0
    %1063 = vmatpush1.msra.mxu0 0.0
    %1064 = vmatprep.subr.mxu0 0.0
    %1065 = vmatpush1.msra.mxu0 0.0
    %1066 = vmatprep.subr.mxu0 0.0
    %1067 = vmatpush1.msra.mxu0 0.0
    %1068 = vmatprep.subr.mxu0 0.0
    %1069 = vmatpush1.msra.mxu0 0.0
    %1070 = vmatprep.subr.mxu0 0.0
    %1071 = vmatpush1.msra.mxu0 0.0
    %1072 = vmatprep.subr.mxu0 0.0
    %1073 = vmatpush1.msra.mxu0 0.0
    %1074 = vmatprep.subr.mxu0 0.0
    %1075 = vmatpush1.msra.mxu0 0.0
    %1076 = vmatprep.subr.mxu0 0.0
    %1077 = vmatpush1.msra.mxu0 0.0
    %1078 = vmatprep.subr.mxu0 0.0
    %1079 = vmatpush1.msra.mxu0 0.0
    %1080 = vmatprep.subr.mxu0 0.0
    %1081 = vmatpush1.msra.mxu0 0.0
    %1082 = vmatprep.subr.mxu0 0.0
    %1083 = vmatpush1.msra.mxu0 0.0
    %1084 = vmatprep.mubr.f32.mxu0 0.0
    %v1085 = vand.u32 %v40, 4294901760
    %1086 = vmatmul.mubr.f32.gmra.mrb[0].mxu0 %v1085
    %v1087 = vpop.f32.mrb[0].mxu0
    %v1088 = vadd.f32 %v849, %v1087
    %v1089 = vpop.f32.mrb[0].mxu0
    %1090 = vmatprep.mubr.f32.mxu0 0.0
    %v1091 = vand.u32 %v41, 4294901760
    %1092 = vmatmul.mubr.f32.gmra.mrb[0].mxu0 %v1091
    %v1093 = vpop.f32.mrb[0].mxu0
    %v1094 = vadd.f32 %v857, %v1093
    %v1095 = vpop.f32.mrb[0].mxu0
    %1096 = vmatprep.mubr.f32.mxu0 0.0
    %v1097 = vand.u32 %v42, 4294901760
    %1098 = vmatmul.mubr.f32.gmra.mrb[0].mxu0 %v1097
    %v1099 = vpop.f32.mrb[0].mxu0
    %v1100 = vadd.f32 %v865, %v1099
    %v1101 = vpop.f32.mrb[0].mxu0
    %1102 = vmatprep.mubr.f32.mxu0 0.0
    %v1103 = vand.u32 %v43, 4294901760
    %1104 = vmatmul.mubr.f32.gmra.mrb[0].mxu0 %v1103
    %v1105 = vpop.f32.mrb[0].mxu0
    %v1106 = vadd.f32 %v873, %v1105
    %v1107 = vpop.f32.mrb[0].mxu0
    %1108 = vmatprep.mubr.f32.mxu0 0.0
    %v1109 = vand.u32 %v44, 4294901760
    %1110 = vmatmul.mubr.f32.gmra.mrb[0].mxu0 %v1109
    %v1111 = vpop.f32.mrb[0].mxu0
    %v1112 = vadd.f32 %v881, %v1111
    %v1113 = vpop.f32.mrb[0].mxu0
    %1114 = vmatprep.mubr.f32.mxu0 0.0
    %v1115 = vand.u32 %v45, 4294901760
    %1116 = vmatmul.mubr.f32.gmra.mrb[0].mxu0 %v1115
    %v1117 = vpop.f32.mrb[0].mxu0
    %v1118 = vadd.f32 %v889, %v1117
    %v1119 = vpop.f32.mrb[0].mxu0
    %1120 = vmatprep.mubr.f32.mxu0 0.0
    %v1121 = vand.u32 %v46, 4294901760
    %1122 = vmatmul.mubr.f32.gmra.mrb[0].mxu0 %v1121
    %v1123 = vpop.f32.mrb[0].mxu0
    %v1124 = vadd.f32 %v897, %v1123
    %v1125 = vpop.f32.mrb[0].mxu0
    %1126 = vmatprep.mubr.f32.mxu0 0.0
    %v1127 = vand.u32 %v47, 4294901760
    %1128 = vmatmul.mubr.f32.gmra.mrb[0].mxu0 %v1127
    %v1129 = vpop.f32.mrb[0].mxu0
    %v1130 = vadd.f32 %v905, %v1129
    %v1131 = vpop.f32.mrb[0].mxu0
    %1132 = vmatprep.mubr.f32.mxu0 0.0
    %v1133 = vand.u32 %v48, 4294901760
    %1134 = vmatmul.mubr.f32.gmra.mrb[0].mxu0 %v1133
    %v1135 = vpop.f32.mrb[0].mxu0
    %v1136 = vadd.f32 %v913, %v1135
    %v1137 = vpop.f32.mrb[0].mxu0
    %1138 = vmatprep.mubr.f32.mxu0 0.0
    %v1139 = vand.u32 %v49, 4294901760
    %1140 = vmatmul.mubr.f32.gmra.mrb[0].mxu0 %v1139
    %v1141 = vpop.f32.mrb[0].mxu0
    %v1142 = vadd.f32 %v921, %v1141
    %v1143 = vpop.f32.mrb[0].mxu0
    %1144 = vmatprep.mubr.f32.mxu0 0.0
    %v1145 = vand.u32 %v50, 4294901760
    %1146 = vmatmul.mubr.f32.gmra.mrb[0].mxu0 %v1145
    %v1147 = vpop.f32.mrb[0].mxu0
    %v1148 = vadd.f32 %v929, %v1147
    %v1149 = vpop.f32.mrb[0].mxu0
    %1150 = vmatprep.mubr.f32.mxu0 0.0
    %v1151 = vand.u32 %v51, 4294901760
    %1152 = vmatmul.mubr.f32.gmra.mrb[0].mxu0 %v1151
    %v1153 = vpop.f32.mrb[0].mxu0
    %v1154 = vadd.f32 %v937, %v1153
    %v1155 = vpop.f32.mrb[0].mxu0
    %1156 = vmatprep.mubr.f32.mxu0 0.0
    %v1157 = vand.u32 %v52, 4294901760
    %1158 = vmatmul.mubr.f32.gmra.mrb[0].mxu0 %v1157
    %v1159 = vpop.f32.mrb[0].mxu0
    %v1160 = vadd.f32 %v945, %v1159
    %v1161 = vpop.f32.mrb[0].mxu0
    %1162 = vmatprep.mubr.f32.mxu0 0.0
    %v1163 = vand.u32 %v53, 4294901760
    %1164 = vmatmul.mubr.f32.gmra.mrb[0].mxu0 %v1163
    %v1165 = vpop.f32.mrb[0].mxu0
    %v1166 = vadd.f32 %v953, %v1165
    %v1167 = vpop.f32.mrb[0].mxu0
    %1168 = vmatprep.mubr.f32.mxu0 0.0
    %v1169 = vand.u32 %v54, 4294901760
    %1170 = vmatmul.mubr.f32.gmra.mrb[0].mxu0 %v1169
    %v1171 = vpop.f32.mrb[0].mxu0
    %v1172 = vadd.f32 %v961, %v1171
    %v1173 = vpop.f32.mrb[0].mxu0
    %1174 = vmatprep.mubr.f32.mxu0 0.0
    %v1175 = vand.u32 %v55, 4294901760
    %1176 = vmatmul.mubr.f32.gmra.mrb[0].mxu0 %v1175
    %v1177 = vpop.f32.mrb[0].mxu0
    %v1178 = vadd.f32 %v969, %v1177
    %v1179 = vpop.f32.mrb[0].mxu0
    %1180 = vdwg.mxu0
    %1181 = vmatprep.subr.mxu0 0.0
    %v1182 = vand.u32 %v56, 4294901760
    %1183 = vmatpush1.msra.mxu0 %v1182
    %1184 = vmatprep.subr.mxu0 0.0
    %v1185 = vand.u32 %v57, 4294901760
    %1186 = vmatpush1.msra.mxu0 %v1185
    %1187 = vmatprep.subr.mxu0 0.0
    %v1188 = vand.u32 %v58, 4294901760
    %1189 = vmatpush1.msra.mxu0 %v1188
    %1190 = vmatprep.subr.mxu0 0.0
    %v1191 = vand.u32 %v59, 4294901760
    %1192 = vmatpush1.msra.mxu0 %v1191
    %1193 = vmatprep.subr.mxu0 0.0
    %v1194 = vand.u32 %v60, 4294901760
    %1195 = vmatpush1.msra.mxu0 %v1194
    %1196 = vmatprep.subr.mxu0 0.0
    %v1197 = vand.u32 %v61, 4294901760
    %1198 = vmatpush1.msra.mxu0 %v1197
    %1199 = vmatprep.subr.mxu0 0.0
    %v1200 = vand.u32 %v62, 4294901760
    %1201 = vmatpush1.msra.mxu0 %v1200
    %1202 = vmatprep.subr.mxu0 0.0
    %v1203 = vand.u32 %v63, 4294901760
    %1204 = vmatpush1.msra.mxu0 %v1203
    %1205 = vmatprep.subr.mxu0 0.0
    %v1206 = vand.u32 %v64, 4294901760
    %1207 = vmatpush1.msra.mxu0 %v1206
    %1208 = vmatprep.subr.mxu0 0.0
    %v1209 = vand.u32 %v65, 4294901760
    %1210 = vmatpush1.msra.mxu0 %v1209
    %1211 = vmatprep.subr.mxu0 0.0
    %v1212 = vand.u32 %v66, 4294901760
    %1213 = vmatpush1.msra.mxu0 %v1212
    %1214 = vmatprep.subr.mxu0 0.0
    %v1215 = vand.u32 %v67, 4294901760
    %1216 = vmatpush1.msra.mxu0 %v1215
    %1217 = vmatprep.subr.mxu0 0.0
    %v1218 = vand.u32 %v68, 4294901760
    %1219 = vmatpush1.msra.mxu0 %v1218
    %1220 = vmatprep.subr.mxu0 0.0
    %v1221 = vand.u32 %v69, 4294901760
    %1222 = vmatpush1.msra.mxu0 %v1221
    %1223 = vmatprep.subr.mxu0 0.0
    %v1224 = vand.u32 %v70, 4294901760
    %1225 = vmatpush1.msra.mxu0 %v1224
    %1226 = vmatprep.subr.mxu0 0.0
    %v1227 = vand.u32 %v71, 4294901760
    %1228 = vmatpush1.msra.mxu0 %v1227
    %1229 = vmatprep.subr.mxu0 0.0
    %1230 = vmatpush1.msra.mxu0 0.0
    %1231 = vmatprep.subr.mxu0 0.0
    %1232 = vmatpush1.msra.mxu0 0.0
    %1233 = vmatprep.subr.mxu0 0.0
    %1234 = vmatpush1.msra.mxu0 0.0
    %1235 = vmatprep.subr.mxu0 0.0
    %1236 = vmatpush1.msra.mxu0 0.0
    %1237 = vmatprep.subr.mxu0 0.0
    %1238 = vmatpush1.msra.mxu0 0.0
    %1239 = vmatprep.subr.mxu0 0.0
    %1240 = vmatpush1.msra.mxu0 0.0
    %1241 = vmatprep.subr.mxu0 0.0
    %1242 = vmatpush1.msra.mxu0 0.0
    %1243 = vmatprep.subr.mxu0 0.0
    %1244 = vmatpush1.msra.mxu0 0.0
    %1245 = vmatprep.subr.mxu0 0.0
    %1246 = vmatpush1.msra.mxu0 0.0
    %1247 = vmatprep.subr.mxu0 0.0
    %1248 = vmatpush1.msra.mxu0 0.0
    %1249 = vmatprep.subr.mxu0 0.0
    %1250 = vmatpush1.msra.mxu0 0.0
    %1251 = vmatprep.subr.mxu0 0.0
    %1252 = vmatpush1.msra.mxu0 0.0
    %1253 = vmatprep.subr.mxu0 0.0
    %1254 = vmatpush1.msra.mxu0 0.0
    %1255 = vmatprep.subr.mxu0 0.0
    %1256 = vmatpush1.msra.mxu0 0.0
    %1257 = vmatprep.subr.mxu0 0.0
    %1258 = vmatpush1.msra.mxu0 0.0
    %1259 = vmatprep.subr.mxu0 0.0
    %1260 = vmatpush1.msra.mxu0 0.0
    %1261 = vmatprep.mubr.f32.mxu0 0.0
    %v1262 = vand.u32 %v40, 4294901760
    %1263 = vmatmul.mubr.f32.gmra.mrb[0].mxu0 %v1262
    %v1264 = vpop.f32.mrb[0].mxu0
    %v1265 = vadd.f32 %v1088, %v1264
    %v1266 = vpop.f32.mrb[0].mxu0
    %1267 = vmatprep.mubr.f32.mxu0 0.0
    %v1268 = vand.u32 %v41, 4294901760
    %1269 = vmatmul.mubr.f32.gmra.mrb[0].mxu0 %v1268
    %v1270 = vpop.f32.mrb[0].mxu0
    %v1271 = vadd.f32 %v1094, %v1270
    %v1272 = vpop.f32.mrb[0].mxu0
    %1273 = vmatprep.mubr.f32.mxu0 0.0
    %v1274 = vand.u32 %v42, 4294901760
    %1275 = vmatmul.mubr.f32.gmra.mrb[0].mxu0 %v1274
    %v1276 = vpop.f32.mrb[0].mxu0
    %v1277 = vadd.f32 %v1100, %v1276
    %v1278 = vpop.f32.mrb[0].mxu0
    %1279 = vmatprep.mubr.f32.mxu0 0.0
    %v1280 = vand.u32 %v43, 4294901760
    %1281 = vmatmul.mubr.f32.gmra.mrb[0].mxu0 %v1280
    %v1282 = vpop.f32.mrb[0].mxu0
    %v1283 = vadd.f32 %v1106, %v1282
    %v1284 = vpop.f32.mrb[0].mxu0
    %1285 = vmatprep.mubr.f32.mxu0 0.0
    %v1286 = vand.u32 %v44, 4294901760
    %1287 = vmatmul.mubr.f32.gmra.mrb[0].mxu0 %v1286
    %v1288 = vpop.f32.mrb[0].mxu0
    %v1289 = vadd.f32 %v1112, %v1288
    %v1290 = vpop.f32.mrb[0].mxu0
    %1291 = vmatprep.mubr.f32.mxu0 0.0
    %v1292 = vand.u32 %v45, 4294901760
    %1293 = vmatmul.mubr.f32.gmra.mrb[0].mxu0 %v1292
    %v1294 = vpop.f32.mrb[0].mxu0
    %v1295 = vadd.f32 %v1118, %v1294
    %v1296 = vpop.f32.mrb[0].mxu0
    %1297 = vmatprep.mubr.f32.mxu0 0.0
    %v1298 = vand.u32 %v46, 4294901760
    %1299 = vmatmul.mubr.f32.gmra.mrb[0].mxu0 %v1298
    %v1300 = vpop.f32.mrb[0].mxu0
    %v1301 = vadd.f32 %v1124, %v1300
    %v1302 = vpop.f32.mrb[0].mxu0
    %1303 = vmatprep.mubr.f32.mxu0 0.0
    %v1304 = vand.u32 %v47, 4294901760
    %1305 = vmatmul.mubr.f32.gmra.mrb[0].mxu0 %v1304
    %v1306 = vpop.f32.mrb[0].mxu0
    %v1307 = vadd.f32 %v1130, %v1306
    %v1308 = vpop.f32.mrb[0].mxu0
    %1309 = vmatprep.mubr.f32.mxu0 0.0
    %v1310 = vand.u32 %v48, 4294901760
    %1311 = vmatmul.mubr.f32.gmra.mrb[0].mxu0 %v1310
    %v1312 = vpop.f32.mrb[0].mxu0
    %v1313 = vadd.f32 %v1136, %v1312
    %v1314 = vpop.f32.mrb[0].mxu0
    %1315 = vmatprep.mubr.f32.mxu0 0.0
    %v1316 = vand.u32 %v49, 4294901760
    %1317 = vmatmul.mubr.f32.gmra.mrb[0].mxu0 %v1316
    %v1318 = vpop.f32.mrb[0].mxu0
    %v1319 = vadd.f32 %v1142, %v1318
    %v1320 = vpop.f32.mrb[0].mxu0
    %1321 = vmatprep.mubr.f32.mxu0 0.0
    %v1322 = vand.u32 %v50, 4294901760
    %1323 = vmatmul.mubr.f32.gmra.mrb[0].mxu0 %v1322
    %v1324 = vpop.f32.mrb[0].mxu0
    %v1325 = vadd.f32 %v1148, %v1324
    %v1326 = vpop.f32.mrb[0].mxu0
    %1327 = vmatprep.mubr.f32.mxu0 0.0
    %v1328 = vand.u32 %v51, 4294901760
    %1329 = vmatmul.mubr.f32.gmra.mrb[0].mxu0 %v1328
    %v1330 = vpop.f32.mrb[0].mxu0
    %v1331 = vadd.f32 %v1154, %v1330
    %v1332 = vpop.f32.mrb[0].mxu0
    %1333 = vmatprep.mubr.f32.mxu0 0.0
    %v1334 = vand.u32 %v52, 4294901760
    %1335 = vmatmul.mubr.f32.gmra.mrb[0].mxu0 %v1334
    %v1336 = vpop.f32.mrb[0].mxu0
    %v1337 = vadd.f32 %v1160, %v1336
    %v1338 = vpop.f32.mrb[0].mxu0
    %1339 = vmatprep.mubr.f32.mxu0 0.0
    %v1340 = vand.u32 %v53, 4294901760
    %1341 = vmatmul.mubr.f32.gmra.mrb[0].mxu0 %v1340
    %v1342 = vpop.f32.mrb[0].mxu0
    %v1343 = vadd.f32 %v1166, %v1342
    %v1344 = vpop.f32.mrb[0].mxu0
    %1345 = vmatprep.mubr.f32.mxu0 0.0
    %v1346 = vand.u32 %v54, 4294901760
    %1347 = vmatmul.mubr.f32.gmra.mrb[0].mxu0 %v1346
    %v1348 = vpop.f32.mrb[0].mxu0
    %v1349 = vadd.f32 %v1172, %v1348
    %v1350 = vpop.f32.mrb[0].mxu0
    %1351 = vmatprep.mubr.f32.mxu0 0.0
    %v1352 = vand.u32 %v55, 4294901760
    %1353 = vmatmul.mubr.f32.gmra.mrb[0].mxu0 %v1352
    %v1354 = vpop.f32.mrb[0].mxu0
    %v1355 = vadd.f32 %v1178, %v1354
    %v1356 = vpop.f32.mrb[0].mxu0
    %1357 = vdwg.mxu0
    %1358 = vst [vmem:[#allocation7] sm:$0xff] %v1265
    %1359 = vst [vmem:[#allocation7 + $0x8] sm:$0xff] %v1271
    %1360 = vst [vmem:[#allocation7 + $0x10] sm:$0xff] %v1277
    %1361 = vst [vmem:[#allocation7 + $0x18] sm:$0xff] %v1283
    %1362 = vst [vmem:[#allocation7 + $0x20] sm:$0xff] %v1289
    %1363 = vst [vmem:[#allocation7 + $0x28] sm:$0xff] %v1295
    %1364 = vst [vmem:[#allocation7 + $0x30] sm:$0xff] %v1301
    %1365 = vst [vmem:[#allocation7 + $0x38] sm:$0xff] %v1307
    %1366 = vst [vmem:[#allocation7 + $0x40] sm:$0xff] %v1313
    %1367 = vst [vmem:[#allocation7 + $0x48] sm:$0xff] %v1319
    %1368 = vst [vmem:[#allocation7 + $0x50] sm:$0xff] %v1325
    %1369 = vst [vmem:[#allocation7 + $0x58] sm:$0xff] %v1331
    %1370 = vst [vmem:[#allocation7 + $0x60] sm:$0xff] %v1337
    %1371 = vst [vmem:[#allocation7 + $0x68] sm:$0xff] %v1343
    %1372 = vst [vmem:[#allocation7 + $0x70] sm:$0xff] %v1349
    %1373 = vst [vmem:[#allocation7 + $0x78] sm:$0xff] %v1355
    // Predicated region
    $region18: #{tpu_custom_call.1} parent=1 // pred_check
      _
    $region19: #{tpu_custom_call.1} parent=1 // pred_check_branch
      %1375 = sbr.rel (0) target = $region21
    $region20: #{tpu_custom_call.1} parent=1 // pred_region
      %s1377 = ssub.s32 2048, 2048
      %1378 = vsyncadd [#allocation4], %s1377
      %s1379 = sshll.u32 [#allocation7], 4
      %s1380 = int_to_ptr.vmem [resolvable:$true] %s1379
      %1385 = dma.vmem_to_hbm [thread:$0]  %s1380, 2048, %s2, [#allocation4], 128, 128, 8
    $region21: #{tpu_custom_call.1} parent=1 // pred_fallthru
      _
    // Predicated region
    $region22: #{tpu_custom_call.1} parent=1 // pred_check
      _
    $region23: #{tpu_custom_call.1} parent=1 // pred_check_branch
      %1387 = sbr.rel (0) target = $region25
    $region24: #{tpu_custom_call.1} parent=1 // pred_region
      %1388 = dma.done [#allocation4], 2048
    $region25: #{tpu_custom_call.1} parent=1 // pred_fallthru
      _
    %1389 = vsyncpa [#allocation3], 1
    %1390 = vsyncpa [#allocation6], 1
    %1391 = vsyncpa [#allocation4], 1

// kernel: tpu_custom_call.1
$region0: #{tpu_custom_call.1}
  #allocation0 [shape = 'u32[]', space=smem, size = 0x4, offset = 0x4, fixed_abs, tag = 'smem constant byte address 0x4 - core index']
  #allocation1 [shape = 'u32[144,128]{1,0:T(1,128)}', space=vmem, size = 0x12000, scoped, tag = 'internal scratch']
  %s0 = inlined_call_operand.hbm [shape: f32[4096,128], index: 0, kind: input, shape index: {}]
  %s1 = inlined_call_operand.hbm [shape: f32[2048,128], index: 1, kind: input, shape index: {}]
  %s2 = inlined_call_operand.hbm [shape: f32[1024,128], index: 2, kind: input, shape index: {}]
  %s3 = inlined_call_operand.hbm [shape: f32[512,256], index: 3, kind: input, shape index: {}]
  %s4 = inlined_call_operand.hbm [shape: f32[512,128], index: 4, kind: input, shape index: {}]
  %s5 = inlined_call_operand.hbm [shape: f32[384,128], index: 5, kind: input, shape index: {}]
  %s6 = inlined_call_operand.hbm [shape: f32[1,128], index: 6, kind: input, shape index: {}]
  %s7 = inlined_call_operand.hbm [shape: f32[4096,128], index: 7, kind: output, shape index: {}]
  %s8 = sld [smem:[#allocation0]]
  $region89: #{tpu_custom_call.1} parent=0
    _
  %s10 = ssub.s32 1, %s8
  %s11 = scalar_select 0, %s10, %s8
  $region1: #{tpu_custom_call.1} parent=0
    #allocation2 [shape = 'u8[524288]{0}', space=vmem, size = 0x80000, scoped, tag = 'input window, operand 0']
    #allocation3 [shape = 's32[2]{0}', space=sflag, size = 0x8, scoped, tag = 'scoped memory for tpu_custom_call.1']
    #allocation4 [shape = 's32[2]{0}', space=sflag, size = 0x8, scoped, tag = 'scoped memory for tpu_custom_call.1']
    #allocation5 [shape = 'u8[262144]{0}', space=vmem, size = 0x40000, scoped, tag = 'input window, operand 1']
    #allocation6 [shape = 's32[2]{0}', space=sflag, size = 0x8, scoped, tag = 'scoped memory for tpu_custom_call.1']
    #allocation7 [shape = 'u8[131072]{0}', space=vmem, size = 0x20000, scoped, tag = 'input window, operand 2']
    #allocation8 [shape = 'u8[524288]{0}', space=vmem, size = 0x80000, scoped, tag = 'input window, operand 3, single buffered']
    #allocation9 [shape = 's32[1]{0}', space=sflag, size = 0x4, scoped, tag = 'scoped memory for tpu_custom_call.1']
    #allocation10 [shape = 'u8[262144]{0}', space=vmem, size = 0x40000, scoped, tag = 'input window, operand 4, single buffered']
    #allocation11 [shape = 'u8[196608]{0}', space=vmem, size = 0x30000, scoped, tag = 'input window, operand 5, single buffered']
    #allocation12 [shape = 's32[1]{0}', space=sflag, size = 0x4, scoped, tag = 'scoped memory for tpu_custom_call.1']
    #allocation13 [shape = 'u8[512]{0}', space=vmem, size = 0x400, scoped, tag = 'input window, operand 6, single buffered']
    #allocation14 [shape = 'u8[524288]{0}', space=vmem, size = 0x80000, scoped, tag = 'output window, operand 0']
    %12 = vsyncpa [#allocation3], 0
    %s13 = scalar_lea.sflag [#allocation3], 1
    %14 = vsyncpa %s13, 0
    %15 = vsyncpa [#allocation6], 0
    %s16 = scalar_lea.sflag [#allocation6], 1
    %17 = vsyncpa %s16, 0
    %18 = vsyncpa [#allocation9], 0
    %19 = vsyncpa [#allocation12], 0
    %20 = vsyncpa [#allocation4], 0
    %s21 = scalar_lea.sflag [#allocation4], 1
    %22 = vsyncpa %s21, 0
    loop: start=0, step=1, limit=10
    $region2: #{tpu_custom_call.1} parent=1 // loop_pre_header
      _
    $region3: #{tpu_custom_call.1} parent=1 // loop_header
      %s24 = sphi 0, %s28
      %p25 = scmp.ge.s32.totalorder %s24, 10
      %s34 = sphi 0, %s36
      %s37 = sphi 0, %s34
      %s38 = sphi 0, %s37
      %s54 = sphi 0, %s38
      %s60 = sphi 0, %s62
      %s63 = sphi 0, %s60
      %s64 = sphi 0, %s63
      %s80 = sphi 0, %s64
      %s86 = sphi 0, %s88
      %s89 = sphi 0, %s86
      %s90 = sphi 0, %s89
      %s106 = sphi 0, %s90
      %s110 = sphi 0, %s110
      %s112 = sphi 0, %s110
      %s113 = sphi 0, %s112
      %s127 = sphi 0, %s113
      %s131 = sphi 0, %s131
      %s133 = sphi 0, %s131
      %s134 = sphi 0, %s133
      %s148 = sphi 0, %s134
      %s152 = sphi 0, %s152
      %s154 = sphi 0, %s152
      %s155 = sphi 0, %s154
      %s169 = sphi 0, %s155
      %s173 = sphi 0, %s173
      %s175 = sphi 0, %s173
      %s176 = sphi 0, %s175
      %s190 = sphi 0, %s176
      %s196 = sphi 0, %s198
      %s199 = sphi 0, %s196
      %s200 = sphi 0, %s199
      %s216 = sphi 0, %s200
    $region4: #{tpu_custom_call.1} parent=1 // loop_header_branch
      %27 = sbr.rel (%p25) target = $region8
    $region5: #{tpu_custom_call.1} parent=1 // loop_body
      %s29 = ssub.s32 %s24, 1
      %s30 = ssub.s32 %s24, 2
      %s31 = sadd.s32 %s24, 1
      %s32 = ssub.s32 %s24, %s31
      %p33 = scmp.eq.s32.totalorder %s32, 0
      %s35 = sadd.s32 %s34, 1
      %s36 = scalar_select %p33, %s34, %s35
      %p39 = pneg %p33
      %p40 = scmp.eq.s32.totalorder %s24, 7
      %p41 = por %p39, %p40
      %p42 = scmp.ne.s32.totalorder %s34, %s37
      %p43 = scmp.eq.s32.totalorder %s24, 0
      %p44 = por %p42, %p43
      %p45 = scmp.ne.s32.totalorder %s34, %s37
      %p46 = scmp.eq.s32.totalorder %s29, 7
      %p47 = por %p45, %p46
      %p48 = scmp.ne.s32.totalorder %s37, %s38
      %p49 = scmp.eq.s32.totalorder %s29, 0
      %p50 = por %p48, %p49
      %p51 = scmp.ne.s32.totalorder %s37, %s38
      %p52 = scmp.eq.s32.totalorder %s30, 7
      %p53 = por %p51, %p52
      %p55 = scmp.ne.s32.totalorder %s38, %s54
      %p56 = scmp.eq.s32.totalorder %s30, 0
      %p57 = por %p55, %p56
      %s58 = ssub.s32 %s24, %s31
      %p59 = scmp.eq.s32.totalorder %s58, 0
      %s61 = sadd.s32 %s60, 1
      %s62 = scalar_select %p59, %s60, %s61
      %p65 = pneg %p59
      %p66 = scmp.eq.s32.totalorder %s24, 7
      %p67 = por %p65, %p66
      %p68 = scmp.ne.s32.totalorder %s60, %s63
      %p69 = scmp.eq.s32.totalorder %s24, 0
      %p70 = por %p68, %p69
      %p71 = scmp.ne.s32.totalorder %s60, %s63
      %p72 = scmp.eq.s32.totalorder %s29, 7
      %p73 = por %p71, %p72
      %p74 = scmp.ne.s32.totalorder %s63, %s64
      %p75 = scmp.eq.s32.totalorder %s29, 0
      %p76 = por %p74, %p75
      %p77 = scmp.ne.s32.totalorder %s63, %s64
      %p78 = scmp.eq.s32.totalorder %s30, 7
      %p79 = por %p77, %p78
      %p81 = scmp.ne.s32.totalorder %s64, %s80
      %p82 = scmp.eq.s32.totalorder %s30, 0
      %p83 = por %p81, %p82
      %s84 = ssub.s32 %s24, %s31
      %p85 = scmp.eq.s32.totalorder %s84, 0
      %s87 = sadd.s32 %s86, 1
      %s88 = scalar_select %p85, %s86, %s87
      %p91 = pneg %p85
      %p92 = scmp.eq.s32.totalorder %s24, 7
      %p93 = por %p91, %p92
      %p94 = scmp.ne.s32.totalorder %s86, %s89
      %p95 = scmp.eq.s32.totalorder %s24, 0
      %p96 = por %p94, %p95
      %p97 = scmp.ne.s32.totalorder %s86, %s89
      %p98 = scmp.eq.s32.totalorder %s29, 7
      %p99 = por %p97, %p98
      %p100 = scmp.ne.s32.totalorder %s89, %s90
      %p101 = scmp.eq.s32.totalorder %s29, 0
      %p102 = por %p100, %p101
      %p103 = scmp.ne.s32.totalorder %s89, %s90
      %p104 = scmp.eq.s32.totalorder %s30, 7
      %p105 = por %p103, %p104
      %p107 = scmp.ne.s32.totalorder %s90, %s106
      %p108 = scmp.eq.s32.totalorder %s30, 0
      %p109 = por %p107, %p108
      %s111 = sadd.s32 %s110, 1
      %p114 = scmp.eq.s32.totalorder %s24, 7
      %p115 = scmp.ne.s32.totalorder %s110, %s112
      %p116 = scmp.eq.s32.totalorder %s24, 0
      %p117 = por %p115, %p116
      %p118 = scmp.ne.s32.totalorder %s110, %s112
      %p119 = scmp.eq.s32.totalorder %s29, 7
      %p120 = por %p118, %p119
      %p121 = scmp.ne.s32.totalorder %s112, %s113
      %p122 = scmp.eq.s32.totalorder %s29, 0
      %p123 = por %p121, %p122
      %p124 = scmp.ne.s32.totalorder %s112, %s113
      %p125 = scmp.eq.s32.totalorder %s30, 7
      %p126 = por %p124, %p125
      %p128 = scmp.ne.s32.totalorder %s113, %s127
      %p129 = scmp.eq.s32.totalorder %s30, 0
      %p130 = por %p128, %p129
      %s132 = sadd.s32 %s131, 1
      %p135 = scmp.eq.s32.totalorder %s24, 7
      %p136 = scmp.ne.s32.totalorder %s131, %s133
      %p137 = scmp.eq.s32.totalorder %s24, 0
      %p138 = por %p136, %p137
      %p139 = scmp.ne.s32.totalorder %s131, %s133
      %p140 = scmp.eq.s32.totalorder %s29, 7
      %p141 = por %p139, %p140
      %p142 = scmp.ne.s32.totalorder %s133, %s134
      %p143 = scmp.eq.s32.totalorder %s29, 0
      %p144 = por %p142, %p143
      %p145 = scmp.ne.s32.totalorder %s133, %s134
      %p146 = scmp.eq.s32.totalorder %s30, 7
      %p147 = por %p145, %p146
      %p149 = scmp.ne.s32.totalorder %s134, %s148
      %p150 = scmp.eq.s32.totalorder %s30, 0
      %p151 = por %p149, %p150
      %s153 = sadd.s32 %s152, 1
      %p156 = scmp.eq.s32.totalorder %s24, 7
      %p157 = scmp.ne.s32.totalorder %s152, %s154
      %p158 = scmp.eq.s32.totalorder %s24, 0
      %p159 = por %p157, %p158
      %p160 = scmp.ne.s32.totalorder %s152, %s154
      %p161 = scmp.eq.s32.totalorder %s29, 7
      %p162 = por %p160, %p161
      %p163 = scmp.ne.s32.totalorder %s154, %s155
      %p164 = scmp.eq.s32.totalorder %s29, 0
      %p165 = por %p163, %p164
      %p166 = scmp.ne.s32.totalorder %s154, %s155
      %p167 = scmp.eq.s32.totalorder %s30, 7
      %p168 = por %p166, %p167
      %p170 = scmp.ne.s32.totalorder %s155, %s169
      %p171 = scmp.eq.s32.totalorder %s30, 0
      %p172 = por %p170, %p171
      %s174 = sadd.s32 %s173, 1
      %p177 = scmp.eq.s32.totalorder %s24, 7
      %p178 = scmp.ne.s32.totalorder %s173, %s175
      %p179 = scmp.eq.s32.totalorder %s24, 0
      %p180 = por %p178, %p179
      %p181 = scmp.ne.s32.totalorder %s173, %s175
      %p182 = scmp.eq.s32.totalorder %s29, 7
      %p183 = por %p181, %p182
      %p184 = scmp.ne.s32.totalorder %s175, %s176
      %p185 = scmp.eq.s32.totalorder %s29, 0
      %p186 = por %p184, %p185
      %p187 = scmp.ne.s32.totalorder %s175, %s176
      %p188 = scmp.eq.s32.totalorder %s30, 7
      %p189 = por %p187, %p188
      %p191 = scmp.ne.s32.totalorder %s176, %s190
      %p192 = scmp.eq.s32.totalorder %s30, 0
      %p193 = por %p191, %p192
      %s194 = ssub.s32 %s24, %s31
      %p195 = scmp.eq.s32.totalorder %s194, 0
      %s197 = sadd.s32 %s196, 1
      %s198 = scalar_select %p195, %s196, %s197
      %p201 = pneg %p195
      %p202 = scmp.eq.s32.totalorder %s24, 7
      %p203 = por %p201, %p202
      %p204 = scmp.ne.s32.totalorder %s196, %s199
      %p205 = scmp.eq.s32.totalorder %s24, 0
      %p206 = por %p204, %p205
      %p207 = scmp.ne.s32.totalorder %s196, %s199
      %p208 = scmp.eq.s32.totalorder %s29, 7
      %p209 = por %p207, %p208
      %p210 = scmp.ne.s32.totalorder %s199, %s200
      %p211 = scmp.eq.s32.totalorder %s29, 0
      %p212 = por %p210, %p211
      %p213 = scmp.ne.s32.totalorder %s199, %s200
      %p214 = scmp.eq.s32.totalorder %s30, 7
      %p215 = por %p213, %p214
      %p217 = scmp.ne.s32.totalorder %s200, %s216
      %p218 = scmp.eq.s32.totalorder %s30, 0
      %p219 = por %p217, %p218
      %p220 = scmp.le.s32.totalorder 1, %s24
      %p221 = scmp.lt.s32.totalorder %s24, 9
      %p222 = pnand %p220, %p221
      %p223 = pneg %p222
      // Predicated region
      $region9: #{tpu_custom_call.1} parent=5 // pred_check
        _
      $region10: #{tpu_custom_call.1} parent=5 // pred_check_branch
        %225 = sbr.rel (%p222) target = $region12
      $region11: #{tpu_custom_call.1} parent=5 // pred_region
        %s226 = ssub.s32 %s24, 1
        // Predicated region
        $region13: #{tpu_custom_call.1} parent=11 // pred_check
          %p227 = pneg %p123
        $region14: #{tpu_custom_call.1} parent=11 // pred_check_branch
          %229 = sbr.rel (%p227) target = $region16
        $region15: #{tpu_custom_call.1} parent=11 // pred_region
          %s231 = ssub.s32 16384, 16384
          %232 = vsyncadd [#allocation9], %s231
          %s233 = sshll.u32 [#allocation8], 4
          %s234 = int_to_ptr.vmem [resolvable:$true] %s233
          %239 = dma.hbm_to_vmem [thread:$0]  %s3, 16384, %s234, [#allocation9], 256, 256, 16
        $region16: #{tpu_custom_call.1} parent=11 // pred_fallthru
          _
        // Predicated region
        $region17: #{tpu_custom_call.1} parent=11 // pred_check
          %p240 = pneg %p144
        $region18: #{tpu_custom_call.1} parent=11 // pred_check_branch
          %242 = sbr.rel (%p240) target = $region20
        $region19: #{tpu_custom_call.1} parent=11 // pred_region
          %s244 = ssub.s32 8192, 8192
          %245 = vsyncadd [#allocation9], %s244
          %s246 = sshll.u32 [#allocation10], 4
          %s247 = int_to_ptr.vmem [resolvable:$true] %s246
          %252 = dma.hbm_to_vmem [thread:$0]  %s4, 8192, %s247, [#allocation9], 128, 128, 8
        $region20: #{tpu_custom_call.1} parent=11 // pred_fallthru
          _
        // Predicated region
        $region21: #{tpu_custom_call.1} parent=11 // pred_check
          %p253 = pneg %p165
        $region22: #{tpu_custom_call.1} parent=11 // pred_check_branch
          %255 = sbr.rel (%p253) target = $region24
        $region23: #{tpu_custom_call.1} parent=11 // pred_region
          %s257 = ssub.s32 6144, 6144
          %258 = vsyncadd [#allocation12], %s257
          %s259 = sshll.u32 [#allocation11], 4
          %s260 = int_to_ptr.vmem [resolvable:$true] %s259
          %265 = dma.hbm_to_vmem [thread:$0]  %s5, 6144, %s260, [#allocation12], 128, 128, 8
        $region24: #{tpu_custom_call.1} parent=11 // pred_fallthru
          _
        // Predicated region
        $region25: #{tpu_custom_call.1} parent=11 // pred_check
          %p266 = pneg %p186
        $region26: #{tpu_custom_call.1} parent=11 // pred_check_branch
          %268 = sbr.rel (%p266) target = $region28
        $region27: #{tpu_custom_call.1} parent=11 // pred_region
          %s270 = ssub.s32 16, 16
          %271 = vsyncadd [#allocation12], %s270
          %s273 = sshll.u32 [#allocation13], 4
          %s274 = int_to_ptr.vmem [resolvable:$true] %s273
          %276 = dma.hbm_to_vmem [thread:$0]  %s6, 16, %s274, [#allocation12]
        $region28: #{tpu_custom_call.1} parent=11 // pred_fallthru
          _
      $region12: #{tpu_custom_call.1} parent=5 // pred_fallthru
        _
      %p277 = scmp.lt.s32.totalorder %s24, 8
      // Predicated region
      $region29: #{tpu_custom_call.1} parent=5 // pred_check
        %p278 = pneg %p277
      $region30: #{tpu_custom_call.1} parent=5 // pred_check_branch
        %280 = sbr.rel (%p278) target = $region32
      $region31: #{tpu_custom_call.1} parent=5 // pred_region
        // Predicated region
        $region33: #{tpu_custom_call.1} parent=31 // pred_check
          %p281 = pneg %p44
        $region34: #{tpu_custom_call.1} parent=31 // pred_check_branch
          %283 = sbr.rel (%p281) target = $region36
        $region35: #{tpu_custom_call.1} parent=31 // pred_region
          %s284 = sand.u32 %s34, 1
          %s285 = scalar_lea.sflag [#allocation3], %s284
          %s286 = sand.u32 %s34, 1
          %s287 = smul.addr %s286, 512
          %s288 = scalar_lea.vmem [#allocation2], %s287
          %s289 = smul.u32 64, %s24
          %s291 = ssub.s32 8192, 8192
          %292 = vsyncadd %s285, %s291
          %s293 = smul.addr %s289, 128
          %s294 = scalar_lea.hbm %s0, %s293
          %s295 = sshll.u32 %s288, 4
          %s296 = int_to_ptr.vmem [resolvable:$true] %s295
          %301 = dma.hbm_to_vmem [thread:$0]  %s294, 8192, %s296, %s285, 128, 128, 8
        $region36: #{tpu_custom_call.1} parent=31 // pred_fallthru
          _
        // Predicated region
        $region37: #{tpu_custom_call.1} parent=31 // pred_check
          %p302 = pneg %p70
        $region38: #{tpu_custom_call.1} parent=31 // pred_check_branch
          %304 = sbr.rel (%p302) target = $region40
        $region39: #{tpu_custom_call.1} parent=31 // pred_region
          %s305 = sand.u32 %s24, 1
          %s306 = scalar_lea.sflag [#allocation6], %s305
          %s307 = sand.u32 %s60, 1
          %s308 = smul.addr %s307, 256
          %s309 = scalar_lea.vmem [#allocation5], %s308
          %s310 = smul.u32 32, %s24
          %s312 = ssub.s32 4096, 4096
          %313 = vsyncadd %s306, %s312
          %s314 = smul.addr %s310, 128
          %s315 = scalar_lea.hbm %s1, %s314
          %s316 = sshll.u32 %s309, 4
          %s317 = int_to_ptr.vmem [resolvable:$true] %s316
          %322 = dma.hbm_to_vmem [thread:$0]  %s315, 4096, %s317, %s306, 128, 128, 8
        $region40: #{tpu_custom_call.1} parent=31 // pred_fallthru
          _
        // Predicated region
        $region41: #{tpu_custom_call.1} parent=31 // pred_check
          %p323 = pneg %p96
        $region42: #{tpu_custom_call.1} parent=31 // pred_check_branch
          %325 = sbr.rel (%p323) target = $region44
        $region43: #{tpu_custom_call.1} parent=31 // pred_region
          %s326 = sand.u32 %s24, 1
          %s327 = scalar_lea.sflag [#allocation6], %s326
          %s328 = sand.u32 %s86, 1
          %s329 = smul.addr %s328, 128
          %s330 = scalar_lea.vmem [#allocation7], %s329
          %s331 = smul.u32 16, %s24
          %s333 = ssub.s32 2048, 2048
          %334 = vsyncadd %s327, %s333
          %s335 = smul.addr %s331, 128
          %s336 = scalar_lea.hbm %s2, %s335
          %s337 = sshll.u32 %s330, 4
          %s338 = int_to_ptr.vmem [resolvable:$true] %s337
          %343 = dma.hbm_to_vmem [thread:$0]  %s336, 2048, %s338, %s327, 128, 128, 8
        $region44: #{tpu_custom_call.1} parent=31 // pred_fallthru
          _
      $region32: #{tpu_custom_call.1} parent=5 // pred_fallthru
        _
      %p344 = scmp.le.s32.totalorder 1, %s24
      %p345 = scmp.lt.s32.totalorder %s24, 9
      %p346 = pnand %p344, %p345
      %p347 = pneg %p346
      // Predicated region
      $region45: #{tpu_custom_call.1} parent=5 // pred_check
        _
      $region46: #{tpu_custom_call.1} parent=5 // pred_check_branch
        %349 = sbr.rel (%p346) target = $region48
      $region47: #{tpu_custom_call.1} parent=5 // pred_region
        %s350 = ssub.s32 %s24, 1
        %s351 = sand.u32 %s37, 1
        %s352 = scalar_lea.sflag [#allocation3], %s351
        %s353 = sand.u32 %s37, 1
        %s354 = smul.addr %s353, 512
        %s355 = scalar_lea.vmem [#allocation2], %s354
        // Predicated region
        $region49: #{tpu_custom_call.1} parent=47 // pred_check
          %p356 = pneg %p50
        $region50: #{tpu_custom_call.1} parent=47 // pred_check_branch
          %358 = sbr.rel (%p356) target = $region52
        $region51: #{tpu_custom_call.1} parent=47 // pred_region
          %359 = dma.done %s352, 8192
        $region52: #{tpu_custom_call.1} parent=47 // pred_fallthru
          _
        %s360 = sand.u32 %s29, 1
        %s361 = scalar_lea.sflag [#allocation6], %s360
        %s362 = sand.u32 %s63, 1
        %s363 = smul.addr %s362, 256
        %s364 = scalar_lea.vmem [#allocation5], %s363
        // Predicated region
        $region53: #{tpu_custom_call.1} parent=47 // pred_check
          %p365 = pneg %p76
        $region54: #{tpu_custom_call.1} parent=47 // pred_check_branch
          %367 = sbr.rel (%p365) target = $region56
        $region55: #{tpu_custom_call.1} parent=47 // pred_region
          %368 = dma.done %s361, 4096
        $region56: #{tpu_custom_call.1} parent=47 // pred_fallthru
          _
        %s369 = sand.u32 %s29, 1
        %s370 = scalar_lea.sflag [#allocation6], %s369
        %s371 = sand.u32 %s89, 1
        %s372 = smul.addr %s371, 128
        %s373 = scalar_lea.vmem [#allocation7], %s372
        // Predicated region
        $region57: #{tpu_custom_call.1} parent=47 // pred_check
          %p374 = pneg %p102
        $region58: #{tpu_custom_call.1} parent=47 // pred_check_branch
          %376 = sbr.rel (%p374) target = $region60
        $region59: #{tpu_custom_call.1} parent=47 // pred_region
          %377 = dma.done %s370, 2048
        $region60: #{tpu_custom_call.1} parent=47 // pred_fallthru
          _
        // Predicated region
        $region61: #{tpu_custom_call.1} parent=47 // pred_check
          %p378 = pneg %p123
        $region62: #{tpu_custom_call.1} parent=47 // pred_check_branch
          %380 = sbr.rel (%p378) target = $region64
        $region63: #{tpu_custom_call.1} parent=47 // pred_region
          %381 = dma.done [#allocation9], 16384
        $region64: #{tpu_custom_call.1} parent=47 // pred_fallthru
          _
        // Predicated region
        $region65: #{tpu_custom_call.1} parent=47 // pred_check
          %p382 = pneg %p144
        $region66: #{tpu_custom_call.1} parent=47 // pred_check_branch
          %384 = sbr.rel (%p382) target = $region68
        $region67: #{tpu_custom_call.1} parent=47 // pred_region
          %385 = dma.done [#allocation9], 8192
        $region68: #{tpu_custom_call.1} parent=47 // pred_fallthru
          _
        // Predicated region
        $region69: #{tpu_custom_call.1} parent=47 // pred_check
          %p386 = pneg %p165
        $region70: #{tpu_custom_call.1} parent=47 // pred_check_branch
          %388 = sbr.rel (%p386) target = $region72
        $region71: #{tpu_custom_call.1} parent=47 // pred_region
          %389 = dma.done [#allocation12], 6144
        $region72: #{tpu_custom_call.1} parent=47 // pred_fallthru
          _
        // Predicated region
        $region73: #{tpu_custom_call.1} parent=47 // pred_check
          %p390 = pneg %p186
        $region74: #{tpu_custom_call.1} parent=47 // pred_check_branch
          %392 = sbr.rel (%p390) target = $region76
        $region75: #{tpu_custom_call.1} parent=47 // pred_region
          %393 = dma.done [#allocation12], 16
        $region76: #{tpu_custom_call.1} parent=47 // pred_fallthru
          _
        %s394 = sand.u32 %s37, 1
        %s395 = scalar_lea.sflag [#allocation3], %s394
        %s396 = sand.u32 %s37, 1
        %s397 = smul.addr %s396, 512
        %s398 = scalar_lea.vmem [#allocation2], %s397
        %p399 = pneg %p50
        %p400 = pneg %p47
        %s401 = sand.u32 %s29, 1
        %s402 = scalar_lea.sflag [#allocation6], %s401
        %s403 = sand.u32 %s63, 1
        %s404 = smul.addr %s403, 256
        %s405 = scalar_lea.vmem [#allocation5], %s404
        %p406 = pneg %p76
        %p407 = pneg %p73
        %s408 = sand.u32 %s29, 1
        %s409 = scalar_lea.sflag [#allocation6], %s408
        %s410 = sand.u32 %s89, 1
        %s411 = smul.addr %s410, 128
        %s412 = scalar_lea.vmem [#allocation7], %s411
        %p413 = pneg %p102
        %p414 = pneg %p99
        %p415 = pneg %p123
        %p416 = pneg %p120
        %p417 = pneg %p144
        %p418 = pneg %p141
        %p419 = pneg %p165
        %p420 = pneg %p162
        %p421 = pneg %p186
        %p422 = pneg %p183
        %p423 = pneg %p212
        %p424 = pneg %p209
        %s425 = sand.u32 %s199, 1
        %s426 = scalar_lea.sflag [#allocation4], %s425
        %s427 = sand.u32 %s199, 1
        %s428 = smul.addr %s427, 512
        %s429 = scalar_lea.vmem [#allocation14], %s428
        %s430 = smul.u32 64, %s29
        %s431 = smul.u32 32, %s29
        %s432 = smul.u32 16, %s29
        %s433 = smul.u32 64, %s29
        %v434 = vld [vmem:[%s355] sm:$0xff]
        %v435 = vld [vmem:[%s355 + $0x8] sm:$0xff]
        %v436 = vld [vmem:[%s355 + $0x10] sm:$0xff]
        %v437 = vld [vmem:[%s355 + $0x18] sm:$0xff]
        %v438 = vld [vmem:[%s355 + $0x20] sm:$0xff]
        %v439 = vld [vmem:[%s355 + $0x28] sm:$0xff]
        %v440 = vld [vmem:[%s355 + $0x30] sm:$0xff]
        %v441 = vld [vmem:[%s355 + $0x38] sm:$0xff]
        %v442 = vld [vmem:[%s355 + $0x40] sm:$0xff]
        %v443 = vld [vmem:[%s355 + $0x48] sm:$0xff]
        %v444 = vld [vmem:[%s355 + $0x50] sm:$0xff]
        %v445 = vld [vmem:[%s355 + $0x58] sm:$0xff]
        %v446 = vld [vmem:[%s355 + $0x60] sm:$0xff]
        %v447 = vld [vmem:[%s355 + $0x68] sm:$0xff]
        %v448 = vld [vmem:[%s355 + $0x70] sm:$0xff]
        %v449 = vld [vmem:[%s355 + $0x78] sm:$0xff]
        %v450 = vld [vmem:[%s355 + $0x80] sm:$0xff]
        %v451 = vld [vmem:[%s355 + $0x88] sm:$0xff]
        %v452 = vld [vmem:[%s355 + $0x90] sm:$0xff]
        %v453 = vld [vmem:[%s355 + $0x98] sm:$0xff]
        %v454 = vld [vmem:[%s355 + $0xa0] sm:$0xff]
        %v455 = vld [vmem:[%s355 + $0xa8] sm:$0xff]
        %v456 = vld [vmem:[%s355 + $0xb0] sm:$0xff]
        %v457 = vld [vmem:[%s355 + $0xb8] sm:$0xff]
        %v458 = vld [vmem:[%s355 + $0xc0] sm:$0xff]
        %v459 = vld [vmem:[%s355 + $0xc8] sm:$0xff]
        %v460 = vld [vmem:[%s355 + $0xd0] sm:$0xff]
        %v461 = vld [vmem:[%s355 + $0xd8] sm:$0xff]
        %v462 = vld [vmem:[%s355 + $0xe0] sm:$0xff]
        %v463 = vld [vmem:[%s355 + $0xe8] sm:$0xff]
        %v464 = vld [vmem:[%s355 + $0xf0] sm:$0xff]
        %v465 = vld [vmem:[%s355 + $0xf8] sm:$0xff]
        %v466 = vld [vmem:[%s355 + $0x100] sm:$0xff]
        %v467 = vld [vmem:[%s355 + $0x108] sm:$0xff]
        %v468 = vld [vmem:[%s355 + $0x110] sm:$0xff]
        %v469 = vld [vmem:[%s355 + $0x118] sm:$0xff]
        %v470 = vld [vmem:[%s355 + $0x120] sm:$0xff]
        %v471 = vld [vmem:[%s355 + $0x128] sm:$0xff]
        %v472 = vld [vmem:[%s355 + $0x130] sm:$0xff]
        %v473 = vld [vmem:[%s355 + $0x138] sm:$0xff]
        %v474 = vld [vmem:[%s355 + $0x140] sm:$0xff]
        %v475 = vld [vmem:[%s355 + $0x148] sm:$0xff]
        %v476 = vld [vmem:[%s355 + $0x150] sm:$0xff]
        %v477 = vld [vmem:[%s355 + $0x158] sm:$0xff]
        %v478 = vld [vmem:[%s355 + $0x160] sm:$0xff]
        %v479 = vld [vmem:[%s355 + $0x168] sm:$0xff]
        %v480 = vld [vmem:[%s355 + $0x170] sm:$0xff]
        %v481 = vld [vmem:[%s355 + $0x178] sm:$0xff]
        %v482 = vld [vmem:[%s355 + $0x180] sm:$0xff]
        %v483 = vld [vmem:[%s355 + $0x188] sm:$0xff]
        %v484 = vld [vmem:[%s355 + $0x190] sm:$0xff]
        %v485 = vld [vmem:[%s355 + $0x198] sm:$0xff]
        %v486 = vld [vmem:[%s355 + $0x1a0] sm:$0xff]
        %v487 = vld [vmem:[%s355 + $0x1a8] sm:$0xff]
        %v488 = vld [vmem:[%s355 + $0x1b0] sm:$0xff]
        %v489 = vld [vmem:[%s355 + $0x1b8] sm:$0xff]
        %v490 = vld [vmem:[%s355 + $0x1c0] sm:$0xff]
        %v491 = vld [vmem:[%s355 + $0x1c8] sm:$0xff]
        %v492 = vld [vmem:[%s355 + $0x1d0] sm:$0xff]
        %v493 = vld [vmem:[%s355 + $0x1d8] sm:$0xff]
        %v494 = vld [vmem:[%s355 + $0x1e0] sm:$0xff]
        %v495 = vld [vmem:[%s355 + $0x1e8] sm:$0xff]
        %v496 = vld [vmem:[%s355 + $0x1f0] sm:$0xff]
        %v497 = vld [vmem:[%s355 + $0x1f8] sm:$0xff]
        %v498 = vld [vmem:[#allocation11] sm:$0xff]
        %v499 = vld [vmem:[#allocation11 + $0x8] sm:$0xff]
        %v500 = vld [vmem:[#allocation11 + $0x10] sm:$0xff]
        %v501 = vld [vmem:[#allocation11 + $0x18] sm:$0xff]
        %v502 = vld [vmem:[#allocation11 + $0x20] sm:$0xff]
        %v503 = vld [vmem:[#allocation11 + $0x28] sm:$0xff]
        %v504 = vld [vmem:[#allocation11 + $0x30] sm:$0xff]
        %v505 = vld [vmem:[#allocation11 + $0x38] sm:$0xff]
        %v506 = vld [vmem:[#allocation11 + $0x40] sm:$0xff]
        %v507 = vld [vmem:[#allocation11 + $0x48] sm:$0xff]
        %v508 = vld [vmem:[#allocation11 + $0x50] sm:$0xff]
        %v509 = vld [vmem:[#allocation11 + $0x58] sm:$0xff]
        %v510 = vld [vmem:[#allocation11 + $0x60] sm:$0xff]
        %v511 = vld [vmem:[#allocation11 + $0x68] sm:$0xff]
        %v512 = vld [vmem:[#allocation11 + $0x70] sm:$0xff]
        %v513 = vld [vmem:[#allocation11 + $0x78] sm:$0xff]
        %v514 = vld [vmem:[%s364] sm:$0xff]
        %v515 = vld [vmem:[%s364 + $0x8] sm:$0xff]
        %v516 = vld [vmem:[%s364 + $0x10] sm:$0xff]
        %v517 = vld [vmem:[%s364 + $0x18] sm:$0xff]
        %v518 = vld [vmem:[%s364 + $0x20] sm:$0xff]
        %v519 = vld [vmem:[%s364 + $0x28] sm:$0xff]
        %v520 = vld [vmem:[%s364 + $0x30] sm:$0xff]
        %v521 = vld [vmem:[%s364 + $0x38] sm:$0xff]
        %v522 = vld [vmem:[%s364 + $0x40] sm:$0xff]
        %v523 = vld [vmem:[%s364 + $0x48] sm:$0xff]
        %v524 = vld [vmem:[%s364 + $0x50] sm:$0xff]
        %v525 = vld [vmem:[%s364 + $0x58] sm:$0xff]
        %v526 = vld [vmem:[%s364 + $0x60] sm:$0xff]
        %v527 = vld [vmem:[%s364 + $0x68] sm:$0xff]
        %v528 = vld [vmem:[%s364 + $0x70] sm:$0xff]
        %v529 = vld [vmem:[%s364 + $0x78] sm:$0xff]
        %v530 = vld [vmem:[%s364 + $0x80] sm:$0xff]
        %v531 = vld [vmem:[%s364 + $0x88] sm:$0xff]
        %v532 = vld [vmem:[%s364 + $0x90] sm:$0xff]
        %v533 = vld [vmem:[%s364 + $0x98] sm:$0xff]
        %v534 = vld [vmem:[%s364 + $0xa0] sm:$0xff]
        %v535 = vld [vmem:[%s364 + $0xa8] sm:$0xff]
        %v536 = vld [vmem:[%s364 + $0xb0] sm:$0xff]
        %v537 = vld [vmem:[%s364 + $0xb8] sm:$0xff]
        %v538 = vld [vmem:[%s364 + $0xc0] sm:$0xff]
        %v539 = vld [vmem:[%s364 + $0xc8] sm:$0xff]
        %v540 = vld [vmem:[%s364 + $0xd0] sm:$0xff]
        %v541 = vld [vmem:[%s364 + $0xd8] sm:$0xff]
        %v542 = vld [vmem:[%s364 + $0xe0] sm:$0xff]
        %v543 = vld [vmem:[%s364 + $0xe8] sm:$0xff]
        %v544 = vld [vmem:[%s364 + $0xf0] sm:$0xff]
        %v545 = vld [vmem:[%s364 + $0xf8] sm:$0xff]
        %v546 = vld [vmem:[#allocation11 + $0x80] sm:$0xff]
        %v547 = vld [vmem:[#allocation11 + $0x88] sm:$0xff]
        %v548 = vld [vmem:[#allocation11 + $0x90] sm:$0xff]
        %v549 = vld [vmem:[#allocation11 + $0x98] sm:$0xff]
        %v550 = vld [vmem:[#allocation11 + $0xa0] sm:$0xff]
        %v551 = vld [vmem:[#allocation11 + $0xa8] sm:$0xff]
        %v552 = vld [vmem:[#allocation11 + $0xb0] sm:$0xff]
        %v553 = vld [vmem:[#allocation11 + $0xb8] sm:$0xff]
        %v554 = vld [vmem:[#allocation11 + $0xc0] sm:$0xff]
        %v555 = vld [vmem:[#allocation11 + $0xc8] sm:$0xff]
        %v556 = vld [vmem:[#allocation11 + $0xd0] sm:$0xff]
        %v557 = vld [vmem:[#allocation11 + $0xd8] sm:$0xff]
        %v558 = vld [vmem:[#allocation11 + $0xe0] sm:$0xff]
        %v559 = vld [vmem:[#allocation11 + $0xe8] sm:$0xff]
        %v560 = vld [vmem:[#allocation11 + $0xf0] sm:$0xff]
        %v561 = vld [vmem:[#allocation11 + $0xf8] sm:$0xff]
        %562 = vmatprep.subr.mxu0 0.0
        %563 = vmatpush1.msra.mxu0 %v546
        %564 = vmatprep.subr.mxu0 0.0
        %565 = vmatpush1.msra.mxu0 %v547
        %566 = vmatprep.subr.mxu0 0.0
        %567 = vmatpush1.msra.mxu0 %v548
        %568 = vmatprep.subr.mxu0 0.0
        %569 = vmatpush1.msra.mxu0 %v549
        %570 = vmatprep.subr.mxu0 0.0
        %571 = vmatpush1.msra.mxu0 %v550
        %572 = vmatprep.subr.mxu0 0.0
        %573 = vmatpush1.msra.mxu0 %v551
        %574 = vmatprep.subr.mxu0 0.0
        %575 = vmatpush1.msra.mxu0 %v552
        %576 = vmatprep.subr.mxu0 0.0
        %577 = vmatpush1.msra.mxu0 %v553
        %578 = vmatprep.subr.mxu0 0.0
        %579 = vmatpush1.msra.mxu0 %v554
        %580 = vmatprep.subr.mxu0 0.0
        %581 = vmatpush1.msra.mxu0 %v555
        %582 = vmatprep.subr.mxu0 0.0
        %583 = vmatpush1.msra.mxu0 %v556
        %584 = vmatprep.subr.mxu0 0.0
        %585 = vmatpush1.msra.mxu0 %v557
        %586 = vmatprep.subr.mxu0 0.0
        %587 = vmatpush1.msra.mxu0 %v558
        %588 = vmatprep.subr.mxu0 0.0
        %589 = vmatpush1.msra.mxu0 %v559
        %590 = vmatprep.subr.mxu0 0.0
        %591 = vmatpush1.msra.mxu0 %v560
        %592 = vmatprep.subr.mxu0 0.0
        %593 = vmatpush1.msra.mxu0 %v561
        %594 = vmatprep.subr.mxu0 0.0
        %595 = vmatpush1.msra.mxu0 0.0
        %596 = vmatprep.subr.mxu0 0.0
        %597 = vmatpush1.msra.mxu0 0.0
        %598 = vmatprep.subr.mxu0 0.0
        %599 = vmatpush1.msra.mxu0 0.0
        %600 = vmatprep.subr.mxu0 0.0
        %601 = vmatpush1.msra.mxu0 0.0
        %602 = vmatprep.subr.mxu0 0.0
        %603 = vmatpush1.msra.mxu0 0.0
        %604 = vmatprep.subr.mxu0 0.0
        %605 = vmatpush1.msra.mxu0 0.0
        %606 = vmatprep.subr.mxu0 0.0
        %607 = vmatpush1.msra.mxu0 0.0
        %608 = vmatprep.subr.mxu0 0.0
        %609 = vmatpush1.msra.mxu0 0.0
        %610 = vmatprep.subr.mxu0 0.0
        %611 = vmatpush1.msra.mxu0 0.0
        %612 = vmatprep.subr.mxu0 0.0
        %613 = vmatpush1.msra.mxu0 0.0
        %614 = vmatprep.subr.mxu0 0.0
        %615 = vmatpush1.msra.mxu0 0.0
        %616 = vmatprep.subr.mxu0 0.0
        %617 = vmatpush1.msra.mxu0 0.0
        %618 = vmatprep.subr.mxu0 0.0
        %619 = vmatpush1.msra.mxu0 0.0
        %620 = vmatprep.subr.mxu0 0.0
        %621 = vmatpush1.msra.mxu0 0.0
        %622 = vmatprep.subr.mxu0 0.0
        %623 = vmatpush1.msra.mxu0 0.0
        %624 = vmatprep.subr.mxu0 0.0
        %625 = vmatpush1.msra.mxu0 0.0
        %626 = vmatprep.mubr.f32.mxu0 0.0
        %627 = vmatmul.mubr.f32.gmra.mrb[0].mxu0 %v514
        %v628 = vpop.f32.mrb[0].mxu0
        %v629 = vadd.f32 0.0, %v628
        %v630 = vpop.f32.mrb[0].mxu0
        %631 = vmatprep.mubr.f32.mxu0 0.0
        %632 = vmatmul.mubr.f32.gmra.mrb[0].mxu0 %v515
        %v633 = vpop.f32.mrb[0].mxu0
        %v634 = vadd.f32 0.0, %v633
        %v635 = vpop.f32.mrb[0].mxu0
        %636 = vmatprep.mubr.f32.mxu0 0.0
        %637 = vmatmul.mubr.f32.gmra.mrb[0].mxu0 %v516
        %v638 = vpop.f32.mrb[0].mxu0
        %v639 = vadd.f32 0.0, %v638
        %v640 = vpop.f32.mrb[0].mxu0
        %641 = vmatprep.mubr.f32.mxu0 0.0
        %642 = vmatmul.mubr.f32.gmra.mrb[0].mxu0 %v517
        %v643 = vpop.f32.mrb[0].mxu0
        %v644 = vadd.f32 0.0, %v643
        %v645 = vpop.f32.mrb[0].mxu0
        %646 = vmatprep.mubr.f32.mxu0 0.0
        %647 = vmatmul.mubr.f32.gmra.mrb[0].mxu0 %v518
        %v648 = vpop.f32.mrb[0].mxu0
        %v649 = vadd.f32 0.0, %v648
        %v650 = vpop.f32.mrb[0].mxu0
        %651 = vmatprep.mubr.f32.mxu0 0.0
        %652 = vmatmul.mubr.f32.gmra.mrb[0].mxu0 %v519
        %v653 = vpop.f32.mrb[0].mxu0
        %v654 = vadd.f32 0.0, %v653
        %v655 = vpop.f32.mrb[0].mxu0
        %656 = vmatprep.mubr.f32.mxu0 0.0
        %657 = vmatmul.mubr.f32.gmra.mrb[0].mxu0 %v520
        %v658 = vpop.f32.mrb[0].mxu0
        %v659 = vadd.f32 0.0, %v658
        %v660 = vpop.f32.mrb[0].mxu0
        %661 = vmatprep.mubr.f32.mxu0 0.0
        %662 = vmatmul.mubr.f32.gmra.mrb[0].mxu0 %v521
        %v663 = vpop.f32.mrb[0].mxu0
        %v664 = vadd.f32 0.0, %v663
        %v665 = vpop.f32.mrb[0].mxu0
        %666 = vmatprep.mubr.f32.mxu0 0.0
        %667 = vmatmul.mubr.f32.gmra.mrb[0].mxu0 %v522
        %v668 = vpop.f32.mrb[0].mxu0
        %v669 = vadd.f32 0.0, %v668
        %v670 = vpop.f32.mrb[0].mxu0
        %671 = vmatprep.mubr.f32.mxu0 0.0
        %672 = vmatmul.mubr.f32.gmra.mrb[0].mxu0 %v523
        %v673 = vpop.f32.mrb[0].mxu0
        %v674 = vadd.f32 0.0, %v673
        %v675 = vpop.f32.mrb[0].mxu0
        %676 = vmatprep.mubr.f32.mxu0 0.0
        %677 = vmatmul.mubr.f32.gmra.mrb[0].mxu0 %v524
        %v678 = vpop.f32.mrb[0].mxu0
        %v679 = vadd.f32 0.0, %v678
        %v680 = vpop.f32.mrb[0].mxu0
        %681 = vmatprep.mubr.f32.mxu0 0.0
        %682 = vmatmul.mubr.f32.gmra.mrb[0].mxu0 %v525
        %v683 = vpop.f32.mrb[0].mxu0
        %v684 = vadd.f32 0.0, %v683
        %v685 = vpop.f32.mrb[0].mxu0
        %686 = vmatprep.mubr.f32.mxu0 0.0
        %687 = vmatmul.mubr.f32.gmra.mrb[0].mxu0 %v526
        %v688 = vpop.f32.mrb[0].mxu0
        %v689 = vadd.f32 0.0, %v688
        %v690 = vpop.f32.mrb[0].mxu0
        %691 = vmatprep.mubr.f32.mxu0 0.0
        %692 = vmatmul.mubr.f32.gmra.mrb[0].mxu0 %v527
        %v693 = vpop.f32.mrb[0].mxu0
        %v694 = vadd.f32 0.0, %v693
        %v695 = vpop.f32.mrb[0].mxu0
        %696 = vmatprep.mubr.f32.mxu0 0.0
        %697 = vmatmul.mubr.f32.gmra.mrb[0].mxu0 %v528
        %v698 = vpop.f32.mrb[0].mxu0
        %v699 = vadd.f32 0.0, %v698
        %v700 = vpop.f32.mrb[0].mxu0
        %701 = vmatprep.mubr.f32.mxu0 0.0
        %702 = vmatmul.mubr.f32.gmra.mrb[0].mxu0 %v529
        %v703 = vpop.f32.mrb[0].mxu0
        %v704 = vadd.f32 0.0, %v703
        %v705 = vpop.f32.mrb[0].mxu0
        %706 = vmatprep.mubr.f32.mxu0 0.0
        %707 = vmatmul.mubr.f32.gmra.mrb[0].mxu0 %v530
        %v708 = vpop.f32.mrb[0].mxu0
        %v709 = vadd.f32 0.0, %v708
        %v710 = vpop.f32.mrb[0].mxu0
        %711 = vmatprep.mubr.f32.mxu0 0.0
        %712 = vmatmul.mubr.f32.gmra.mrb[0].mxu0 %v531
        %v713 = vpop.f32.mrb[0].mxu0
        %v714 = vadd.f32 0.0, %v713
        %v715 = vpop.f32.mrb[0].mxu0
        %716 = vmatprep.mubr.f32.mxu0 0.0
        %717 = vmatmul.mubr.f32.gmra.mrb[0].mxu0 %v532
        %v718 = vpop.f32.mrb[0].mxu0
        %v719 = vadd.f32 0.0, %v718
        %v720 = vpop.f32.mrb[0].mxu0
        %721 = vmatprep.mubr.f32.mxu0 0.0
        %722 = vmatmul.mubr.f32.gmra.mrb[0].mxu0 %v533
        %v723 = vpop.f32.mrb[0].mxu0
        %v724 = vadd.f32 0.0, %v723
        %v725 = vpop.f32.mrb[0].mxu0
        %726 = vmatprep.mubr.f32.mxu0 0.0
        %727 = vmatmul.mubr.f32.gmra.mrb[0].mxu0 %v534
        %v728 = vpop.f32.mrb[0].mxu0
        %v729 = vadd.f32 0.0, %v728
        %v730 = vpop.f32.mrb[0].mxu0
        %731 = vmatprep.mubr.f32.mxu0 0.0
        %732 = vmatmul.mubr.f32.gmra.mrb[0].mxu0 %v535
        %v733 = vpop.f32.mrb[0].mxu0
        %v734 = vadd.f32 0.0, %v733
        %v735 = vpop.f32.mrb[0].mxu0
        %736 = vmatprep.mubr.f32.mxu0 0.0
        %737 = vmatmul.mubr.f32.gmra.mrb[0].mxu0 %v536
        %v738 = vpop.f32.mrb[0].mxu0
        %v739 = vadd.f32 0.0, %v738
        %v740 = vpop.f32.mrb[0].mxu0
        %741 = vmatprep.mubr.f32.mxu0 0.0
        %742 = vmatmul.mubr.f32.gmra.mrb[0].mxu0 %v537
        %v743 = vpop.f32.mrb[0].mxu0
        %v744 = vadd.f32 0.0, %v743
        %v745 = vpop.f32.mrb[0].mxu0
        %746 = vmatprep.mubr.f32.mxu0 0.0
        %747 = vmatmul.mubr.f32.gmra.mrb[0].mxu0 %v538
        %v748 = vpop.f32.mrb[0].mxu0
        %v749 = vadd.f32 0.0, %v748
        %v750 = vpop.f32.mrb[0].mxu0
        %751 = vmatprep.mubr.f32.mxu0 0.0
        %752 = vmatmul.mubr.f32.gmra.mrb[0].mxu0 %v539
        %v753 = vpop.f32.mrb[0].mxu0
        %v754 = vadd.f32 0.0, %v753
        %v755 = vpop.f32.mrb[0].mxu0
        %756 = vmatprep.mubr.f32.mxu0 0.0
        %757 = vmatmul.mubr.f32.gmra.mrb[0].mxu0 %v540
        %v758 = vpop.f32.mrb[0].mxu0
        %v759 = vadd.f32 0.0, %v758
        %v760 = vpop.f32.mrb[0].mxu0
        %761 = vmatprep.mubr.f32.mxu0 0.0
        %762 = vmatmul.mubr.f32.gmra.mrb[0].mxu0 %v541
        %v763 = vpop.f32.mrb[0].mxu0
        %v764 = vadd.f32 0.0, %v763
        %v765 = vpop.f32.mrb[0].mxu0
        %766 = vmatprep.mubr.f32.mxu0 0.0
        %767 = vmatmul.mubr.f32.gmra.mrb[0].mxu0 %v542
        %v768 = vpop.f32.mrb[0].mxu0
        %v769 = vadd.f32 0.0, %v768
        %v770 = vpop.f32.mrb[0].mxu0
        %771 = vmatprep.mubr.f32.mxu0 0.0
        %772 = vmatmul.mubr.f32.gmra.mrb[0].mxu0 %v543
        %v773 = vpop.f32.mrb[0].mxu0
        %v774 = vadd.f32 0.0, %v773
        %v775 = vpop.f32.mrb[0].mxu0
        %776 = vmatprep.mubr.f32.mxu0 0.0
        %777 = vmatmul.mubr.f32.gmra.mrb[0].mxu0 %v544
        %v778 = vpop.f32.mrb[0].mxu0
        %v779 = vadd.f32 0.0, %v778
        %v780 = vpop.f32.mrb[0].mxu0
        %781 = vmatprep.mubr.f32.mxu0 0.0
        %782 = vmatmul.mubr.f32.gmra.mrb[0].mxu0 %v545
        %v783 = vpop.f32.mrb[0].mxu0
        %v784 = vadd.f32 0.0, %v783
        %v785 = vpop.f32.mrb[0].mxu0
        %786 = vdwg.mxu0
        %v787 = vld [vmem:[#allocation8] sm:$0xff]
        %v788 = vld [vmem:[#allocation8 + $0x8] sm:$0xff]
        %v789 = vld [vmem:[#allocation8 + $0x10] sm:$0xff]
        %v790 = vld [vmem:[#allocation8 + $0x18] sm:$0xff]
        %v791 = vld [vmem:[#allocation8 + $0x20] sm:$0xff]
        %v792 = vld [vmem:[#allocation8 + $0x28] sm:$0xff]
        %v793 = vld [vmem:[#allocation8 + $0x30] sm:$0xff]
        %v794 = vld [vmem:[#allocation8 + $0x38] sm:$0xff]
        %v795 = vld [vmem:[#allocation8 + $0x40] sm:$0xff]
        %v796 = vld [vmem:[#allocation8 + $0x48] sm:$0xff]
        %v797 = vld [vmem:[#allocation8 + $0x50] sm:$0xff]
        %v798 = vld [vmem:[#allocation8 + $0x58] sm:$0xff]
        %v799 = vld [vmem:[#allocation8 + $0x60] sm:$0xff]
        %v800 = vld [vmem:[#allocation8 + $0x68] sm:$0xff]
        %v801 = vld [vmem:[#allocation8 + $0x70] sm:$0xff]
        %v802 = vld [vmem:[#allocation8 + $0x78] sm:$0xff]
        %v803 = vld [vmem:[#allocation8 + $0x80] sm:$0xff]
        %v804 = vld [vmem:[#allocation8 + $0x88] sm:$0xff]
        %v805 = vld [vmem:[#allocation8 + $0x90] sm:$0xff]
        %v806 = vld [vmem:[#allocation8 + $0x98] sm:$0xff]
        %v807 = vld [vmem:[#allocation8 + $0xa0] sm:$0xff]
        %v808 = vld [vmem:[#allocation8 + $0xa8] sm:$0xff]
        %v809 = vld [vmem:[#allocation8 + $0xb0] sm:$0xff]
        %v810 = vld [vmem:[#allocation8 + $0xb8] sm:$0xff]
        %v811 = vld [vmem:[#allocation8 + $0xc0] sm:$0xff]
        %v812 = vld [vmem:[#allocation8 + $0xc8] sm:$0xff]
        %v813 = vld [vmem:[#allocation8 + $0xd0] sm:$0xff]
        %v814 = vld [vmem:[#allocation8 + $0xd8] sm:$0xff]
        %v815 = vld [vmem:[#allocation8 + $0xe0] sm:$0xff]
        %v816 = vld [vmem:[#allocation8 + $0xe8] sm:$0xff]
        %v817 = vld [vmem:[#allocation8 + $0xf0] sm:$0xff]
        %v818 = vld [vmem:[#allocation8 + $0xf8] sm:$0xff]
        %v819 = vld [vmem:[#allocation8 + $0x100] sm:$0xff]
        %v820 = vld [vmem:[#allocation8 + $0x108] sm:$0xff]
        %v821 = vld [vmem:[#allocation8 + $0x110] sm:$0xff]
        %v822 = vld [vmem:[#allocation8 + $0x118] sm:$0xff]
        %v823 = vld [vmem:[#allocation8 + $0x120] sm:$0xff]
        %v824 = vld [vmem:[#allocation8 + $0x128] sm:$0xff]
        %v825 = vld [vmem:[#allocation8 + $0x130] sm:$0xff]
        %v826 = vld [vmem:[#allocation8 + $0x138] sm:$0xff]
        %v827 = vld [vmem:[#allocation8 + $0x140] sm:$0xff]
        %v828 = vld [vmem:[#allocation8 + $0x148] sm:$0xff]
        %v829 = vld [vmem:[#allocation8 + $0x150] sm:$0xff]
        %v830 = vld [vmem:[#allocation8 + $0x158] sm:$0xff]
        %v831 = vld [vmem:[#allocation8 + $0x160] sm:$0xff]
        %v832 = vld [vmem:[#allocation8 + $0x168] sm:$0xff]
        %v833 = vld [vmem:[#allocation8 + $0x170] sm:$0xff]
        %v834 = vld [vmem:[#allocation8 + $0x178] sm:$0xff]
        %v835 = vld [vmem:[#allocation8 + $0x180] sm:$0xff]
        %v836 = vld [vmem:[#allocation8 + $0x188] sm:$0xff]
        %v837 = vld [vmem:[#allocation8 + $0x190] sm:$0xff]
        %v838 = vld [vmem:[#allocation8 + $0x198] sm:$0xff]
        %v839 = vld [vmem:[#allocation8 + $0x1a0] sm:$0xff]
        %v840 = vld [vmem:[#allocation8 + $0x1a8] sm:$0xff]
        %v841 = vld [vmem:[#allocation8 + $0x1b0] sm:$0xff]
        %v842 = vld [vmem:[#allocation8 + $0x1b8] sm:$0xff]
        %v843 = vld [vmem:[#allocation8 + $0x1c0] sm:$0xff]
        %v844 = vld [vmem:[#allocation8 + $0x1c8] sm:$0xff]
        %v845 = vld [vmem:[#allocation8 + $0x1d0] sm:$0xff]
        %v846 = vld [vmem:[#allocation8 + $0x1d8] sm:$0xff]
        %v847 = vld [vmem:[#allocation8 + $0x1e0] sm:$0xff]
        %v848 = vld [vmem:[#allocation8 + $0x1e8] sm:$0xff]
        %v849 = vld [vmem:[#allocation8 + $0x1f0] sm:$0xff]
        %v850 = vld [vmem:[#allocation8 + $0x1f8] sm:$0xff]
        %v851 = vld [vmem:[#allocation8 + $0x200] sm:$0xff]
        %v852 = vld [vmem:[#allocation8 + $0x208] sm:$0xff]
        %v853 = vld [vmem:[#allocation8 + $0x210] sm:$0xff]
        %v854 = vld [vmem:[#allocation8 + $0x218] sm:$0xff]
        %v855 = vld [vmem:[#allocation8 + $0x220] sm:$0xff]
        %v856 = vld [vmem:[#allocation8 + $0x228] sm:$0xff]
        %v857 = vld [vmem:[#allocation8 + $0x230] sm:$0xff]
        %v858 = vld [vmem:[#allocation8 + $0x238] sm:$0xff]
        %v859 = vld [vmem:[#allocation8 + $0x240] sm:$0xff]
        %v860 = vld [vmem:[#allocation8 + $0x248] sm:$0xff]
        %v861 = vld [vmem:[#allocation8 + $0x250] sm:$0xff]
        %v862 = vld [vmem:[#allocation8 + $0x258] sm:$0xff]
        %v863 = vld [vmem:[#allocation8 + $0x260] sm:$0xff]
        %v864 = vld [vmem:[#allocation8 + $0x268] sm:$0xff]
        %v865 = vld [vmem:[#allocation8 + $0x270] sm:$0xff]
        %v866 = vld [vmem:[#allocation8 + $0x278] sm:$0xff]
        %v867 = vld [vmem:[#allocation8 + $0x280] sm:$0xff]
        %v868 = vld [vmem:[#allocation8 + $0x288] sm:$0xff]
        %v869 = vld [vmem:[#allocation8 + $0x290] sm:$0xff]
        %v870 = vld [vmem:[#allocation8 + $0x298] sm:$0xff]
        %v871 = vld [vmem:[#allocation8 + $0x2a0] sm:$0xff]
        %v872 = vld [vmem:[#allocation8 + $0x2a8] sm:$0xff]
        %v873 = vld [vmem:[#allocation8 + $0x2b0] sm:$0xff]
        %v874 = vld [vmem:[#allocation8 + $0x2b8] sm:$0xff]
        %v875 = vld [vmem:[#allocation8 + $0x2c0] sm:$0xff]
        %v876 = vld [vmem:[#allocation8 + $0x2c8] sm:$0xff]
        %v877 = vld [vmem:[#allocation8 + $0x2d0] sm:$0xff]
        %v878 = vld [vmem:[#allocation8 + $0x2d8] sm:$0xff]
        %v879 = vld [vmem:[#allocation8 + $0x2e0] sm:$0xff]
        %v880 = vld [vmem:[#allocation8 + $0x2e8] sm:$0xff]
        %v881 = vld [vmem:[#allocation8 + $0x2f0] sm:$0xff]
        %v882 = vld [vmem:[#allocation8 + $0x2f8] sm:$0xff]
        %v883 = vld [vmem:[#allocation8 + $0x300] sm:$0xff]
        %v884 = vld [vmem:[#allocation8 + $0x308] sm:$0xff]
        %v885 = vld [vmem:[#allocation8 + $0x310] sm:$0xff]
        %v886 = vld [vmem:[#allocation8 + $0x318] sm:$0xff]
        %v887 = vld [vmem:[#allocation8 + $0x320] sm:$0xff]
        %v888 = vld [vmem:[#allocation8 + $0x328] sm:$0xff]
        %v889 = vld [vmem:[#allocation8 + $0x330] sm:$0xff]
        %v890 = vld [vmem:[#allocation8 + $0x338] sm:$0xff]
        %v891 = vld [vmem:[#allocation8 + $0x340] sm:$0xff]
        %v892 = vld [vmem:[#allocation8 + $0x348] sm:$0xff]
        %v893 = vld [vmem:[#allocation8 + $0x350] sm:$0xff]
        %v894 = vld [vmem:[#allocation8 + $0x358] sm:$0xff]
        %v895 = vld [vmem:[#allocation8 + $0x360] sm:$0xff]
        %v896 = vld [vmem:[#allocation8 + $0x368] sm:$0xff]
        %v897 = vld [vmem:[#allocation8 + $0x370] sm:$0xff]
        %v898 = vld [vmem:[#allocation8 + $0x378] sm:$0xff]
        %v899 = vld [vmem:[#allocation8 + $0x380] sm:$0xff]
        %v900 = vld [vmem:[#allocation8 + $0x388] sm:$0xff]
        %v901 = vld [vmem:[#allocation8 + $0x390] sm:$0xff]
        %v902 = vld [vmem:[#allocation8 + $0x398] sm:$0xff]
        %v903 = vld [vmem:[#allocation8 + $0x3a0] sm:$0xff]
        %v904 = vld [vmem:[#allocation8 + $0x3a8] sm:$0xff]
        %v905 = vld [vmem:[#allocation8 + $0x3b0] sm:$0xff]
        %v906 = vld [vmem:[#allocation8 + $0x3b8] sm:$0xff]
        %v907 = vld [vmem:[#allocation8 + $0x3c0] sm:$0xff]
        %v908 = vld [vmem:[#allocation8 + $0x3c8] sm:$0xff]
        %v909 = vld [vmem:[#allocation8 + $0x3d0] sm:$0xff]
        %v910 = vld [vmem:[#allocation8 + $0x3d8] sm:$0xff]
        %v911 = vld [vmem:[#allocation8 + $0x3e0] sm:$0xff]
        %v912 = vld [vmem:[#allocation8 + $0x3e8] sm:$0xff]
        %v913 = vld [vmem:[#allocation8 + $0x3f0] sm:$0xff]
        %v914 = vld [vmem:[#allocation8 + $0x3f8] sm:$0xff]
        %915 = vmatprep.subr.mxu0 0.0
        %916 = vmatpush1.msra.mxu0 %v629
        %917 = vmatprep.subr.mxu0 0.0
        %918 = vmatpush1.msra.mxu0 %v634
        %919 = vmatprep.subr.mxu0 0.0
        %920 = vmatpush1.msra.mxu0 %v639
        %921 = vmatprep.subr.mxu0 0.0
        %922 = vmatpush1.msra.mxu0 %v644
        %923 = vmatprep.subr.mxu0 0.0
        %924 = vmatpush1.msra.mxu0 %v649
        %925 = vmatprep.subr.mxu0 0.0
        %926 = vmatpush1.msra.mxu0 %v654
        %927 = vmatprep.subr.mxu0 0.0
        %928 = vmatpush1.msra.mxu0 %v659
        %929 = vmatprep.subr.mxu0 0.0
        %930 = vmatpush1.msra.mxu0 %v664
        %931 = vmatprep.subr.mxu0 0.0
        %932 = vmatpush1.msra.mxu0 %v669
        %933 = vmatprep.subr.mxu0 0.0
        %934 = vmatpush1.msra.mxu0 %v674
        %935 = vmatprep.subr.mxu0 0.0
        %936 = vmatpush1.msra.mxu0 %v679
        %937 = vmatprep.subr.mxu0 0.0
        %938 = vmatpush1.msra.mxu0 %v684
        %939 = vmatprep.subr.mxu0 0.0
        %940 = vmatpush1.msra.mxu0 %v689
        %941 = vmatprep.subr.mxu0 0.0
        %942 = vmatpush1.msra.mxu0 %v694
        %943 = vmatprep.subr.mxu0 0.0
        %944 = vmatpush1.msra.mxu0 %v699
        %945 = vmatprep.subr.mxu0 0.0
        %946 = vmatpush1.msra.mxu0 %v704
        %947 = vmatprep.subr.mxu0 0.0
        %948 = vmatpush1.msra.mxu0 %v709
        %949 = vmatprep.subr.mxu0 0.0
        %950 = vmatpush1.msra.mxu0 %v714
        %951 = vmatprep.subr.mxu0 0.0
        %952 = vmatpush1.msra.mxu0 %v719
        %953 = vmatprep.subr.mxu0 0.0
        %954 = vmatpush1.msra.mxu0 %v724
        %955 = vmatprep.subr.mxu0 0.0
        %956 = vmatpush1.msra.mxu0 %v729
        %957 = vmatprep.subr.mxu0 0.0
        %958 = vmatpush1.msra.mxu0 %v734
        %959 = vmatprep.subr.mxu0 0.0
        %960 = vmatpush1.msra.mxu0 %v739
        %961 = vmatprep.subr.mxu0 0.0
        %962 = vmatpush1.msra.mxu0 %v744
        %963 = vmatprep.subr.mxu0 0.0
        %964 = vmatpush1.msra.mxu0 %v749
        %965 = vmatprep.subr.mxu0 0.0
        %966 = vmatpush1.msra.mxu0 %v754
        %967 = vmatprep.subr.mxu0 0.0
        %968 = vmatpush1.msra.mxu0 %v759
        %969 = vmatprep.subr.mxu0 0.0
        %970 = vmatpush1.msra.mxu0 %v764
        %971 = vmatprep.subr.mxu0 0.0
        %972 = vmatpush1.msra.mxu0 %v769
        %973 = vmatprep.subr.mxu0 0.0
        %974 = vmatpush1.msra.mxu0 %v774
        %975 = vmatprep.subr.mxu0 0.0
        %976 = vmatpush1.msra.mxu0 %v779
        %977 = vmatprep.subr.mxu0 0.0
        %978 = vmatpush1.msra.mxu0 %v784
        %979 = vmatprep.mubr.f32.mxu0 %v788
        %980 = vmatmul.mubr.f32.gmra.mrb[0].mxu0 %v787
        %v981 = vpop.f32.mrb[0].mxu0
        %v982 = vadd.f32 0.0, %v981
        %v983 = vpop.f32.mrb[0].mxu0
        %984 = vmatprep.mubr.f32.mxu0 %v790
        %985 = vmatmul.mubr.f32.gmra.mrb[0].mxu0 %v789
        %v986 = vpop.f32.mrb[0].mxu0
        %v987 = vadd.f32 0.0, %v986
        %v988 = vpop.f32.mrb[0].mxu0
        %989 = vmatprep.mubr.f32.mxu0 %v792
        %990 = vmatmul.mubr.f32.gmra.mrb[0].mxu0 %v791
        %v991 = vpop.f32.mrb[0].mxu0
        %v992 = vadd.f32 0.0, %v991
        %v993 = vpop.f32.mrb[0].mxu0
        %994 = vmatprep.mubr.f32.mxu0 %v794
        %995 = vmatmul.mubr.f32.gmra.mrb[0].mxu0 %v793
        %v996 = vpop.f32.mrb[0].mxu0
        %v997 = vadd.f32 0.0, %v996
        %v998 = vpop.f32.mrb[0].mxu0
        %999 = vmatprep.mubr.f32.mxu0 %v796
        %1000 = vmatmul.mubr.f32.gmra.mrb[0].mxu0 %v795
        %v1001 = vpop.f32.mrb[0].mxu0
        %v1002 = vadd.f32 0.0, %v1001
        %v1003 = vpop.f32.mrb[0].mxu0
        %1004 = vmatprep.mubr.f32.mxu0 %v798
        %1005 = vmatmul.mubr.f32.gmra.mrb[0].mxu0 %v797
        %v1006 = vpop.f32.mrb[0].mxu0
        %v1007 = vadd.f32 0.0, %v1006
        %v1008 = vpop.f32.mrb[0].mxu0
        %1009 = vmatprep.mubr.f32.mxu0 %v800
        %1010 = vmatmul.mubr.f32.gmra.mrb[0].mxu0 %v799
        %v1011 = vpop.f32.mrb[0].mxu0
        %v1012 = vadd.f32 0.0, %v1011
        %v1013 = vpop.f32.mrb[0].mxu0
        %1014 = vmatprep.mubr.f32.mxu0 %v802
        %1015 = vmatmul.mubr.f32.gmra.mrb[0].mxu0 %v801
        %v1016 = vpop.f32.mrb[0].mxu0
        %v1017 = vadd.f32 0.0, %v1016
        %v1018 = vpop.f32.mrb[0].mxu0
        %1019 = vmatprep.mubr.f32.mxu0 %v804
        %1020 = vmatmul.mubr.f32.gmra.mrb[0].mxu0 %v803
        %v1021 = vpop.f32.mrb[0].mxu0
        %v1022 = vadd.f32 0.0, %v1021
        %v1023 = vpop.f32.mrb[0].mxu0
        %1024 = vmatprep.mubr.f32.mxu0 %v806
        %1025 = vmatmul.mubr.f32.gmra.mrb[0].mxu0 %v805
        %v1026 = vpop.f32.mrb[0].mxu0
        %v1027 = vadd.f32 0.0, %v1026
        %v1028 = vpop.f32.mrb[0].mxu0
        %1029 = vmatprep.mubr.f32.mxu0 %v808
        %1030 = vmatmul.mubr.f32.gmra.mrb[0].mxu0 %v807
        %v1031 = vpop.f32.mrb[0].mxu0
        %v1032 = vadd.f32 0.0, %v1031
        %v1033 = vpop.f32.mrb[0].mxu0
        %1034 = vmatprep.mubr.f32.mxu0 %v810
        %1035 = vmatmul.mubr.f32.gmra.mrb[0].mxu0 %v809
        %v1036 = vpop.f32.mrb[0].mxu0
        %v1037 = vadd.f32 0.0, %v1036
        %v1038 = vpop.f32.mrb[0].mxu0
        %1039 = vmatprep.mubr.f32.mxu0 %v812
        %1040 = vmatmul.mubr.f32.gmra.mrb[0].mxu0 %v811
        %v1041 = vpop.f32.mrb[0].mxu0
        %v1042 = vadd.f32 0.0, %v1041
        %v1043 = vpop.f32.mrb[0].mxu0
        %1044 = vmatprep.mubr.f32.mxu0 %v814
        %1045 = vmatmul.mubr.f32.gmra.mrb[0].mxu0 %v813
        %v1046 = vpop.f32.mrb[0].mxu0
        %v1047 = vadd.f32 0.0, %v1046
        %v1048 = vpop.f32.mrb[0].mxu0
        %1049 = vmatprep.mubr.f32.mxu0 %v816
        %1050 = vmatmul.mubr.f32.gmra.mrb[0].mxu0 %v815
        %v1051 = vpop.f32.mrb[0].mxu0
        %v1052 = vadd.f32 0.0, %v1051
        %v1053 = vpop.f32.mrb[0].mxu0
        %1054 = vmatprep.mubr.f32.mxu0 %v818
        %1055 = vmatmul.mubr.f32.gmra.mrb[0].mxu0 %v817
        %v1056 = vpop.f32.mrb[0].mxu0
        %v1057 = vadd.f32 0.0, %v1056
        %v1058 = vpop.f32.mrb[0].mxu0
        %1059 = vmatprep.mubr.f32.mxu0 %v820
        %1060 = vmatmul.mubr.f32.gmra.mrb[0].mxu0 %v819
        %v1061 = vpop.f32.mrb[0].mxu0
        %v1062 = vadd.f32 0.0, %v1061
        %v1063 = vpop.f32.mrb[0].mxu0
        %1064 = vmatprep.mubr.f32.mxu0 %v822
        %1065 = vmatmul.mubr.f32.gmra.mrb[0].mxu0 %v821
        %v1066 = vpop.f32.mrb[0].mxu0
        %v1067 = vadd.f32 0.0, %v1066
        %v1068 = vpop.f32.mrb[0].mxu0
        %1069 = vmatprep.mubr.f32.mxu0 %v824
        %1070 = vmatmul.mubr.f32.gmra.mrb[0].mxu0 %v823
        %v1071 = vpop.f32.mrb[0].mxu0
        %v1072 = vadd.f32 0.0, %v1071
        %v1073 = vpop.f32.mrb[0].mxu0
        %1074 = vmatprep.mubr.f32.mxu0 %v826
        %1075 = vmatmul.mubr.f32.gmra.mrb[0].mxu0 %v825
        %v1076 = vpop.f32.mrb[0].mxu0
        %v1077 = vadd.f32 0.0, %v1076
        %v1078 = vpop.f32.mrb[0].mxu0
        %1079 = vmatprep.mubr.f32.mxu0 %v828
        %1080 = vmatmul.mubr.f32.gmra.mrb[0].mxu0 %v827
        %v1081 = vpop.f32.mrb[0].mxu0
        %v1082 = vadd.f32 0.0, %v1081
        %v1083 = vpop.f32.mrb[0].mxu0
        %1084 = vmatprep.mubr.f32.mxu0 %v830
        %1085 = vmatmul.mubr.f32.gmra.mrb[0].mxu0 %v829
        %v1086 = vpop.f32.mrb[0].mxu0
        %v1087 = vadd.f32 0.0, %v1086
        %v1088 = vpop.f32.mrb[0].mxu0
        %1089 = vmatprep.mubr.f32.mxu0 %v832
        %1090 = vmatmul.mubr.f32.gmra.mrb[0].mxu0 %v831
        %v1091 = vpop.f32.mrb[0].mxu0
        %v1092 = vadd.f32 0.0, %v1091
        %v1093 = vpop.f32.mrb[0].mxu0
        %1094 = vmatprep.mubr.f32.mxu0 %v834
        %1095 = vmatmul.mubr.f32.gmra.mrb[0].mxu0 %v833
        %v1096 = vpop.f32.mrb[0].mxu0
        %v1097 = vadd.f32 0.0, %v1096
        %v1098 = vpop.f32.mrb[0].mxu0
        %1099 = vmatprep.mubr.f32.mxu0 %v836
        %1100 = vmatmul.mubr.f32.gmra.mrb[0].mxu0 %v835
        %v1101 = vpop.f32.mrb[0].mxu0
        %v1102 = vadd.f32 0.0, %v1101
        %v1103 = vpop.f32.mrb[0].mxu0
        %1104 = vmatprep.mubr.f32.mxu0 %v838
        %1105 = vmatmul.mubr.f32.gmra.mrb[0].mxu0 %v837
        %v1106 = vpop.f32.mrb[0].mxu0
        %v1107 = vadd.f32 0.0, %v1106
        %v1108 = vpop.f32.mrb[0].mxu0
        %1109 = vmatprep.mubr.f32.mxu0 %v840
        %1110 = vmatmul.mubr.f32.gmra.mrb[0].mxu0 %v839
        %v1111 = vpop.f32.mrb[0].mxu0
        %v1112 = vadd.f32 0.0, %v1111
        %v1113 = vpop.f32.mrb[0].mxu0
        %1114 = vmatprep.mubr.f32.mxu0 %v842
        %1115 = vmatmul.mubr.f32.gmra.mrb[0].mxu0 %v841
        %v1116 = vpop.f32.mrb[0].mxu0
        %v1117 = vadd.f32 0.0, %v1116
        %v1118 = vpop.f32.mrb[0].mxu0
        %1119 = vmatprep.mubr.f32.mxu0 %v844
        %1120 = vmatmul.mubr.f32.gmra.mrb[0].mxu0 %v843
        %v1121 = vpop.f32.mrb[0].mxu0
        %v1122 = vadd.f32 0.0, %v1121
        %v1123 = vpop.f32.mrb[0].mxu0
        %1124 = vmatprep.mubr.f32.mxu0 %v846
        %1125 = vmatmul.mubr.f32.gmra.mrb[0].mxu0 %v845
        %v1126 = vpop.f32.mrb[0].mxu0
        %v1127 = vadd.f32 0.0, %v1126
        %v1128 = vpop.f32.mrb[0].mxu0
        %1129 = vmatprep.mubr.f32.mxu0 %v848
        %1130 = vmatmul.mubr.f32.gmra.mrb[0].mxu0 %v847
        %v1131 = vpop.f32.mrb[0].mxu0
        %v1132 = vadd.f32 0.0, %v1131
        %v1133 = vpop.f32.mrb[0].mxu0
        %1134 = vmatprep.mubr.f32.mxu0 %v850
        %1135 = vmatmul.mubr.f32.gmra.mrb[0].mxu0 %v849
        %v1136 = vpop.f32.mrb[0].mxu0
        %v1137 = vadd.f32 0.0, %v1136
        %v1138 = vpop.f32.mrb[0].mxu0
        %1139 = vmatprep.mubr.f32.mxu0 %v852
        %1140 = vmatmul.mubr.f32.gmra.mrb[0].mxu0 %v851
        %v1141 = vpop.f32.mrb[0].mxu0
        %v1142 = vadd.f32 0.0, %v1141
        %v1143 = vpop.f32.mrb[0].mxu0
        %1144 = vmatprep.mubr.f32.mxu0 %v854
        %1145 = vmatmul.mubr.f32.gmra.mrb[0].mxu0 %v853
        %v1146 = vpop.f32.mrb[0].mxu0
        %v1147 = vadd.f32 0.0, %v1146
        %v1148 = vpop.f32.mrb[0].mxu0
        %1149 = vmatprep.mubr.f32.mxu0 %v856
        %1150 = vmatmul.mubr.f32.gmra.mrb[0].mxu0 %v855
        %v1151 = vpop.f32.mrb[0].mxu0
        %v1152 = vadd.f32 0.0, %v1151
        %v1153 = vpop.f32.mrb[0].mxu0
        %1154 = vmatprep.mubr.f32.mxu0 %v858
        %1155 = vmatmul.mubr.f32.gmra.mrb[0].mxu0 %v857
        %v1156 = vpop.f32.mrb[0].mxu0
        %v1157 = vadd.f32 0.0, %v1156
        %v1158 = vpop.f32.mrb[0].mxu0
        %1159 = vmatprep.mubr.f32.mxu0 %v860
        %1160 = vmatmul.mubr.f32.gmra.mrb[0].mxu0 %v859
        %v1161 = vpop.f32.mrb[0].mxu0
        %v1162 = vadd.f32 0.0, %v1161
        %v1163 = vpop.f32.mrb[0].mxu0
        %1164 = vmatprep.mubr.f32.mxu0 %v862
        %1165 = vmatmul.mubr.f32.gmra.mrb[0].mxu0 %v861
        %v1166 = vpop.f32.mrb[0].mxu0
        %v1167 = vadd.f32 0.0, %v1166
        %v1168 = vpop.f32.mrb[0].mxu0
        %1169 = vmatprep.mubr.f32.mxu0 %v864
        %1170 = vmatmul.mubr.f32.gmra.mrb[0].mxu0 %v863
        %v1171 = vpop.f32.mrb[0].mxu0
        %v1172 = vadd.f32 0.0, %v1171
        %v1173 = vpop.f32.mrb[0].mxu0
        %1174 = vmatprep.mubr.f32.mxu0 %v866
        %1175 = vmatmul.mubr.f32.gmra.mrb[0].mxu0 %v865
        %v1176 = vpop.f32.mrb[0].mxu0
        %v1177 = vadd.f32 0.0, %v1176
        %v1178 = vpop.f32.mrb[0].mxu0
        %1179 = vmatprep.mubr.f32.mxu0 %v868
        %1180 = vmatmul.mubr.f32.gmra.mrb[0].mxu0 %v867
        %v1181 = vpop.f32.mrb[0].mxu0
        %v1182 = vadd.f32 0.0, %v1181
        %v1183 = vpop.f32.mrb[0].mxu0
        %1184 = vmatprep.mubr.f32.mxu0 %v870
        %1185 = vmatmul.mubr.f32.gmra.mrb[0].mxu0 %v869
        %v1186 = vpop.f32.mrb[0].mxu0
        %v1187 = vadd.f32 0.0, %v1186
        %v1188 = vpop.f32.mrb[0].mxu0
        %1189 = vmatprep.mubr.f32.mxu0 %v872
        %1190 = vmatmul.mubr.f32.gmra.mrb[0].mxu0 %v871
        %v1191 = vpop.f32.mrb[0].mxu0
        %v1192 = vadd.f32 0.0, %v1191
        %v1193 = vpop.f32.mrb[0].mxu0
        %1194 = vmatprep.mubr.f32.mxu0 %v874
        %1195 = vmatmul.mubr.f32.gmra.mrb[0].mxu0 %v873
        %v1196 = vpop.f32.mrb[0].mxu0
        %v1197 = vadd.f32 0.0, %v1196
        %v1198 = vpop.f32.mrb[0].mxu0
        %1199 = vmatprep.mubr.f32.mxu0 %v876
        %1200 = vmatmul.mubr.f32.gmra.mrb[0].mxu0 %v875
        %v1201 = vpop.f32.mrb[0].mxu0
        %v1202 = vadd.f32 0.0, %v1201
        %v1203 = vpop.f32.mrb[0].mxu0
        %1204 = vmatprep.mubr.f32.mxu0 %v878
        %1205 = vmatmul.mubr.f32.gmra.mrb[0].mxu0 %v877
        %v1206 = vpop.f32.mrb[0].mxu0
        %v1207 = vadd.f32 0.0, %v1206
        %v1208 = vpop.f32.mrb[0].mxu0
        %1209 = vmatprep.mubr.f32.mxu0 %v880
        %1210 = vmatmul.mubr.f32.gmra.mrb[0].mxu0 %v879
        %v1211 = vpop.f32.mrb[0].mxu0
        %v1212 = vadd.f32 0.0, %v1211
        %v1213 = vpop.f32.mrb[0].mxu0
        %1214 = vmatprep.mubr.f32.mxu0 %v882
        %1215 = vmatmul.mubr.f32.gmra.mrb[0].mxu0 %v881
        %v1216 = vpop.f32.mrb[0].mxu0
        %v1217 = vadd.f32 0.0, %v1216
        %v1218 = vpop.f32.mrb[0].mxu0
        %1219 = vmatprep.mubr.f32.mxu0 %v884
        %1220 = vmatmul.mubr.f32.gmra.mrb[0].mxu0 %v883
        %v1221 = vpop.f32.mrb[0].mxu0
        %v1222 = vadd.f32 0.0, %v1221
        %v1223 = vpop.f32.mrb[0].mxu0
        %1224 = vmatprep.mubr.f32.mxu0 %v886
        %1225 = vmatmul.mubr.f32.gmra.mrb[0].mxu0 %v885
        %v1226 = vpop.f32.mrb[0].mxu0
        %v1227 = vadd.f32 0.0, %v1226
        %v1228 = vpop.f32.mrb[0].mxu0
        %1229 = vmatprep.mubr.f32.mxu0 %v888
        %1230 = vmatmul.mubr.f32.gmra.mrb[0].mxu0 %v887
        %v1231 = vpop.f32.mrb[0].mxu0
        %v1232 = vadd.f32 0.0, %v1231
        %v1233 = vpop.f32.mrb[0].mxu0
        %1234 = vmatprep.mubr.f32.mxu0 %v890
        %1235 = vmatmul.mubr.f32.gmra.mrb[0].mxu0 %v889
        %v1236 = vpop.f32.mrb[0].mxu0
        %v1237 = vadd.f32 0.0, %v1236
        %v1238 = vpop.f32.mrb[0].mxu0
        %1239 = vmatprep.mubr.f32.mxu0 %v892
        %1240 = vmatmul.mubr.f32.gmra.mrb[0].mxu0 %v891
        %v1241 = vpop.f32.mrb[0].mxu0
        %v1242 = vadd.f32 0.0, %v1241
        %v1243 = vpop.f32.mrb[0].mxu0
        %1244 = vmatprep.mubr.f32.mxu0 %v894
        %1245 = vmatmul.mubr.f32.gmra.mrb[0].mxu0 %v893
        %v1246 = vpop.f32.mrb[0].mxu0
        %v1247 = vadd.f32 0.0, %v1246
        %v1248 = vpop.f32.mrb[0].mxu0
        %1249 = vmatprep.mubr.f32.mxu0 %v896
        %1250 = vmatmul.mubr.f32.gmra.mrb[0].mxu0 %v895
        %v1251 = vpop.f32.mrb[0].mxu0
        %v1252 = vadd.f32 0.0, %v1251
        %v1253 = vpop.f32.mrb[0].mxu0
        %1254 = vmatprep.mubr.f32.mxu0 %v898
        %1255 = vmatmul.mubr.f32.gmra.mrb[0].mxu0 %v897
        %v1256 = vpop.f32.mrb[0].mxu0
        %v1257 = vadd.f32 0.0, %v1256
        %v1258 = vpop.f32.mrb[0].mxu0
        %1259 = vmatprep.mubr.f32.mxu0 %v900
        %1260 = vmatmul.mubr.f32.gmra.mrb[0].mxu0 %v899
        %v1261 = vpop.f32.mrb[0].mxu0
        %v1262 = vadd.f32 0.0, %v1261
        %v1263 = vpop.f32.mrb[0].mxu0
        %1264 = vmatprep.mubr.f32.mxu0 %v902
        %1265 = vmatmul.mubr.f32.gmra.mrb[0].mxu0 %v901
        %v1266 = vpop.f32.mrb[0].mxu0
        %v1267 = vadd.f32 0.0, %v1266
        %v1268 = vpop.f32.mrb[0].mxu0
        %1269 = vmatprep.mubr.f32.mxu0 %v904
        %1270 = vmatmul.mubr.f32.gmra.mrb[0].mxu0 %v903
        %v1271 = vpop.f32.mrb[0].mxu0
        %v1272 = vadd.f32 0.0, %v1271
        %v1273 = vpop.f32.mrb[0].mxu0
        %1274 = vmatprep.mubr.f32.mxu0 %v906
        %1275 = vmatmul.mubr.f32.gmra.mrb[0].mxu0 %v905
        %v1276 = vpop.f32.mrb[0].mxu0
        %v1277 = vadd.f32 0.0, %v1276
        %v1278 = vpop.f32.mrb[0].mxu0
        %1279 = vmatprep.mubr.f32.mxu0 %v908
        %1280 = vmatmul.mubr.f32.gmra.mrb[0].mxu0 %v907
        %v1281 = vpop.f32.mrb[0].mxu0
        %v1282 = vadd.f32 0.0, %v1281
        %v1283 = vpop.f32.mrb[0].mxu0
        %1284 = vmatprep.mubr.f32.mxu0 %v910
        %1285 = vmatmul.mubr.f32.gmra.mrb[0].mxu0 %v909
        %v1286 = vpop.f32.mrb[0].mxu0
        %v1287 = vadd.f32 0.0, %v1286
        %v1288 = vpop.f32.mrb[0].mxu0
        %1289 = vmatprep.mubr.f32.mxu0 %v912
        %1290 = vmatmul.mubr.f32.gmra.mrb[0].mxu0 %v911
        %v1291 = vpop.f32.mrb[0].mxu0
        %v1292 = vadd.f32 0.0, %v1291
        %v1293 = vpop.f32.mrb[0].mxu0
        %1294 = vmatprep.mubr.f32.mxu0 %v914
        %1295 = vmatmul.mubr.f32.gmra.mrb[0].mxu0 %v913
        %v1296 = vpop.f32.mrb[0].mxu0
        %v1297 = vadd.f32 0.0, %v1296
        %v1298 = vpop.f32.mrb[0].mxu0
        %1299 = vdwg.mxu0
        %1300 = vmatprep.subr.mxu0 0.0
        %1301 = vmatpush1.msra.mxu0 %v498
        %1302 = vmatprep.subr.mxu0 0.0
        %1303 = vmatpush1.msra.mxu0 %v499
        %1304 = vmatprep.subr.mxu0 0.0
        %1305 = vmatpush1.msra.mxu0 %v500
        %1306 = vmatprep.subr.mxu0 0.0
        %1307 = vmatpush1.msra.mxu0 %v501
        %1308 = vmatprep.subr.mxu0 0.0
        %1309 = vmatpush1.msra.mxu0 %v502
        %1310 = vmatprep.subr.mxu0 0.0
        %1311 = vmatpush1.msra.mxu0 %v503
        %1312 = vmatprep.subr.mxu0 0.0
        %1313 = vmatpush1.msra.mxu0 %v504
        %1314 = vmatprep.subr.mxu0 0.0
        %1315 = vmatpush1.msra.mxu0 %v505
        %1316 = vmatprep.subr.mxu0 0.0
        %1317 = vmatpush1.msra.mxu0 %v506
        %1318 = vmatprep.subr.mxu0 0.0
        %1319 = vmatpush1.msra.mxu0 %v507
        %1320 = vmatprep.subr.mxu0 0.0
        %1321 = vmatpush1.msra.mxu0 %v508
        %1322 = vmatprep.subr.mxu0 0.0
        %1323 = vmatpush1.msra.mxu0 %v509
        %1324 = vmatprep.subr.mxu0 0.0
        %1325 = vmatpush1.msra.mxu0 %v510
        %1326 = vmatprep.subr.mxu0 0.0
        %1327 = vmatpush1.msra.mxu0 %v511
        %1328 = vmatprep.subr.mxu0 0.0
        %1329 = vmatpush1.msra.mxu0 %v512
        %1330 = vmatprep.subr.mxu0 0.0
        %1331 = vmatpush1.msra.mxu0 %v513
        %1332 = vmatprep.subr.mxu0 0.0
        %1333 = vmatpush1.msra.mxu0 0.0
        %1334 = vmatprep.subr.mxu0 0.0
        %1335 = vmatpush1.msra.mxu0 0.0
        %1336 = vmatprep.subr.mxu0 0.0
        %1337 = vmatpush1.msra.mxu0 0.0
        %1338 = vmatprep.subr.mxu0 0.0
        %1339 = vmatpush1.msra.mxu0 0.0
        %1340 = vmatprep.subr.mxu0 0.0
        %1341 = vmatpush1.msra.mxu0 0.0
        %1342 = vmatprep.subr.mxu0 0.0
        %1343 = vmatpush1.msra.mxu0 0.0
        %1344 = vmatprep.subr.mxu0 0.0
        %1345 = vmatpush1.msra.mxu0 0.0
        %1346 = vmatprep.subr.mxu0 0.0
        %1347 = vmatpush1.msra.mxu0 0.0
        %1348 = vmatprep.subr.mxu0 0.0
        %1349 = vmatpush1.msra.mxu0 0.0
        %1350 = vmatprep.subr.mxu0 0.0
        %1351 = vmatpush1.msra.mxu0 0.0
        %1352 = vmatprep.subr.mxu0 0.0
        %1353 = vmatpush1.msra.mxu0 0.0
        %1354 = vmatprep.subr.mxu0 0.0
        %1355 = vmatpush1.msra.mxu0 0.0
        %1356 = vmatprep.subr.mxu0 0.0
        %1357 = vmatpush1.msra.mxu0 0.0
        %1358 = vmatprep.subr.mxu0 0.0
        %1359 = vmatpush1.msra.mxu0 0.0
        %1360 = vmatprep.subr.mxu0 0.0
        %1361 = vmatpush1.msra.mxu0 0.0
        %1362 = vmatprep.subr.mxu0 0.0
        %1363 = vmatpush1.msra.mxu0 0.0
        %1364 = vmatprep.mubr.f32.mxu0 0.0
        %1365 = vmatmul.mubr.f32.gmra.mrb[0].mxu0 %v434
        %v1366 = vpop.f32.mrb[0].mxu0
        %v1367 = vadd.f32 %v982, %v1366
        %v1368 = vpop.f32.mrb[0].mxu0
        %1369 = vmatprep.mubr.f32.mxu0 0.0
        %1370 = vmatmul.mubr.f32.gmra.mrb[0].mxu0 %v435
        %v1371 = vpop.f32.mrb[0].mxu0
        %v1372 = vadd.f32 %v987, %v1371
        %v1373 = vpop.f32.mrb[0].mxu0
        %1374 = vmatprep.mubr.f32.mxu0 0.0
        %1375 = vmatmul.mubr.f32.gmra.mrb[0].mxu0 %v436
        %v1376 = vpop.f32.mrb[0].mxu0
        %v1377 = vadd.f32 %v992, %v1376
        %v1378 = vpop.f32.mrb[0].mxu0
        %1379 = vmatprep.mubr.f32.mxu0 0.0
        %1380 = vmatmul.mubr.f32.gmra.mrb[0].mxu0 %v437
        %v1381 = vpop.f32.mrb[0].mxu0
        %v1382 = vadd.f32 %v997, %v1381
        %v1383 = vpop.f32.mrb[0].mxu0
        %1384 = vmatprep.mubr.f32.mxu0 0.0
        %1385 = vmatmul.mubr.f32.gmra.mrb[0].mxu0 %v438
        %v1386 = vpop.f32.mrb[0].mxu0
        %v1387 = vadd.f32 %v1002, %v1386
        %v1388 = vpop.f32.mrb[0].mxu0
        %1389 = vmatprep.mubr.f32.mxu0 0.0
        %1390 = vmatmul.mubr.f32.gmra.mrb[0].mxu0 %v439
        %v1391 = vpop.f32.mrb[0].mxu0
        %v1392 = vadd.f32 %v1007, %v1391
        %v1393 = vpop.f32.mrb[0].mxu0
        %1394 = vmatprep.mubr.f32.mxu0 0.0
        %1395 = vmatmul.mubr.f32.gmra.mrb[0].mxu0 %v440
        %v1396 = vpop.f32.mrb[0].mxu0
        %v1397 = vadd.f32 %v1012, %v1396
        %v1398 = vpop.f32.mrb[0].mxu0
        %1399 = vmatprep.mubr.f32.mxu0 0.0
        %1400 = vmatmul.mubr.f32.gmra.mrb[0].mxu0 %v441
        %v1401 = vpop.f32.mrb[0].mxu0
        %v1402 = vadd.f32 %v1017, %v1401
        %v1403 = vpop.f32.mrb[0].mxu0
        %1404 = vmatprep.mubr.f32.mxu0 0.0
        %1405 = vmatmul.mubr.f32.gmra.mrb[0].mxu0 %v442
        %v1406 = vpop.f32.mrb[0].mxu0
        %v1407 = vadd.f32 %v1022, %v1406
        %v1408 = vpop.f32.mrb[0].mxu0
        %1409 = vmatprep.mubr.f32.mxu0 0.0
        %1410 = vmatmul.mubr.f32.gmra.mrb[0].mxu0 %v443
        %v1411 = vpop.f32.mrb[0].mxu0
        %v1412 = vadd.f32 %v1027, %v1411
        %v1413 = vpop.f32.mrb[0].mxu0
        %1414 = vmatprep.mubr.f32.mxu0 0.0
        %1415 = vmatmul.mubr.f32.gmra.mrb[0].mxu0 %v444
        %v1416 = vpop.f32.mrb[0].mxu0
        %v1417 = vadd.f32 %v1032, %v1416
        %v1418 = vpop.f32.mrb[0].mxu0
        %1419 = vmatprep.mubr.f32.mxu0 0.0
        %1420 = vmatmul.mubr.f32.gmra.mrb[0].mxu0 %v445
        %v1421 = vpop.f32.mrb[0].mxu0
        %v1422 = vadd.f32 %v1037, %v1421
        %v1423 = vpop.f32.mrb[0].mxu0
        %1424 = vmatprep.mubr.f32.mxu0 0.0
        %1425 = vmatmul.mubr.f32.gmra.mrb[0].mxu0 %v446
        %v1426 = vpop.f32.mrb[0].mxu0
        %v1427 = vadd.f32 %v1042, %v1426
        %v1428 = vpop.f32.mrb[0].mxu0
        %1429 = vmatprep.mubr.f32.mxu0 0.0
        %1430 = vmatmul.mubr.f32.gmra.mrb[0].mxu0 %v447
        %v1431 = vpop.f32.mrb[0].mxu0
        %v1432 = vadd.f32 %v1047, %v1431
        %v1433 = vpop.f32.mrb[0].mxu0
        %1434 = vmatprep.mubr.f32.mxu0 0.0
        %1435 = vmatmul.mubr.f32.gmra.mrb[0].mxu0 %v448
        %v1436 = vpop.f32.mrb[0].mxu0
        %v1437 = vadd.f32 %v1052, %v1436
        %v1438 = vpop.f32.mrb[0].mxu0
        %1439 = vmatprep.mubr.f32.mxu0 0.0
        %1440 = vmatmul.mubr.f32.gmra.mrb[0].mxu0 %v449
        %v1441 = vpop.f32.mrb[0].mxu0
        %v1442 = vadd.f32 %v1057, %v1441
        %v1443 = vpop.f32.mrb[0].mxu0
        %1444 = vmatprep.mubr.f32.mxu0 0.0
        %1445 = vmatmul.mubr.f32.gmra.mrb[0].mxu0 %v450
        %v1446 = vpop.f32.mrb[0].mxu0
        %v1447 = vadd.f32 %v1062, %v1446
        %v1448 = vpop.f32.mrb[0].mxu0
        %1449 = vmatprep.mubr.f32.mxu0 0.0
        %1450 = vmatmul.mubr.f32.gmra.mrb[0].mxu0 %v451
        %v1451 = vpop.f32.mrb[0].mxu0
        %v1452 = vadd.f32 %v1067, %v1451
        %v1453 = vpop.f32.mrb[0].mxu0
        %1454 = vmatprep.mubr.f32.mxu0 0.0
        %1455 = vmatmul.mubr.f32.gmra.mrb[0].mxu0 %v452
        %v1456 = vpop.f32.mrb[0].mxu0
        %v1457 = vadd.f32 %v1072, %v1456
        %v1458 = vpop.f32.mrb[0].mxu0
        %1459 = vmatprep.mubr.f32.mxu0 0.0
        %1460 = vmatmul.mubr.f32.gmra.mrb[0].mxu0 %v453
        %v1461 = vpop.f32.mrb[0].mxu0
        %v1462 = vadd.f32 %v1077, %v1461
        %v1463 = vpop.f32.mrb[0].mxu0
        %1464 = vmatprep.mubr.f32.mxu0 0.0
        %1465 = vmatmul.mubr.f32.gmra.mrb[0].mxu0 %v454
        %v1466 = vpop.f32.mrb[0].mxu0
        %v1467 = vadd.f32 %v1082, %v1466
        %v1468 = vpop.f32.mrb[0].mxu0
        %1469 = vmatprep.mubr.f32.mxu0 0.0
        %1470 = vmatmul.mubr.f32.gmra.mrb[0].mxu0 %v455
        %v1471 = vpop.f32.mrb[0].mxu0
        %v1472 = vadd.f32 %v1087, %v1471
        %v1473 = vpop.f32.mrb[0].mxu0
        %1474 = vmatprep.mubr.f32.mxu0 0.0
        %1475 = vmatmul.mubr.f32.gmra.mrb[0].mxu0 %v456
        %v1476 = vpop.f32.mrb[0].mxu0
        %v1477 = vadd.f32 %v1092, %v1476
        %v1478 = vpop.f32.mrb[0].mxu0
        %1479 = vmatprep.mubr.f32.mxu0 0.0
        %1480 = vmatmul.mubr.f32.gmra.mrb[0].mxu0 %v457
        %v1481 = vpop.f32.mrb[0].mxu0
        %v1482 = vadd.f32 %v1097, %v1481
        %v1483 = vpop.f32.mrb[0].mxu0
        %1484 = vmatprep.mubr.f32.mxu0 0.0
        %1485 = vmatmul.mubr.f32.gmra.mrb[0].mxu0 %v458
        %v1486 = vpop.f32.mrb[0].mxu0
        %v1487 = vadd.f32 %v1102, %v1486
        %v1488 = vpop.f32.mrb[0].mxu0
        %1489 = vmatprep.mubr.f32.mxu0 0.0
        %1490 = vmatmul.mubr.f32.gmra.mrb[0].mxu0 %v459
        %v1491 = vpop.f32.mrb[0].mxu0
        %v1492 = vadd.f32 %v1107, %v1491
        %v1493 = vpop.f32.mrb[0].mxu0
        %1494 = vmatprep.mubr.f32.mxu0 0.0
        %1495 = vmatmul.mubr.f32.gmra.mrb[0].mxu0 %v460
        %v1496 = vpop.f32.mrb[0].mxu0
        %v1497 = vadd.f32 %v1112, %v1496
        %v1498 = vpop.f32.mrb[0].mxu0
        %1499 = vmatprep.mubr.f32.mxu0 0.0
        %1500 = vmatmul.mubr.f32.gmra.mrb[0].mxu0 %v461
        %v1501 = vpop.f32.mrb[0].mxu0
        %v1502 = vadd.f32 %v1117, %v1501
        %v1503 = vpop.f32.mrb[0].mxu0
        %1504 = vmatprep.mubr.f32.mxu0 0.0
        %1505 = vmatmul.mubr.f32.gmra.mrb[0].mxu0 %v462
        %v1506 = vpop.f32.mrb[0].mxu0
        %v1507 = vadd.f32 %v1122, %v1506
        %v1508 = vpop.f32.mrb[0].mxu0
        %1509 = vmatprep.mubr.f32.mxu0 0.0
        %1510 = vmatmul.mubr.f32.gmra.mrb[0].mxu0 %v463
        %v1511 = vpop.f32.mrb[0].mxu0
        %v1512 = vadd.f32 %v1127, %v1511
        %v1513 = vpop.f32.mrb[0].mxu0
        %1514 = vmatprep.mubr.f32.mxu0 0.0
        %1515 = vmatmul.mubr.f32.gmra.mrb[0].mxu0 %v464
        %v1516 = vpop.f32.mrb[0].mxu0
        %v1517 = vadd.f32 %v1132, %v1516
        %v1518 = vpop.f32.mrb[0].mxu0
        %1519 = vmatprep.mubr.f32.mxu0 0.0
        %1520 = vmatmul.mubr.f32.gmra.mrb[0].mxu0 %v465
        %v1521 = vpop.f32.mrb[0].mxu0
        %v1522 = vadd.f32 %v1137, %v1521
        %v1523 = vpop.f32.mrb[0].mxu0
        %1524 = vmatprep.mubr.f32.mxu0 0.0
        %1525 = vmatmul.mubr.f32.gmra.mrb[0].mxu0 %v466
        %v1526 = vpop.f32.mrb[0].mxu0
        %v1527 = vadd.f32 %v1142, %v1526
        %v1528 = vpop.f32.mrb[0].mxu0
        %1529 = vmatprep.mubr.f32.mxu0 0.0
        %1530 = vmatmul.mubr.f32.gmra.mrb[0].mxu0 %v467
        %v1531 = vpop.f32.mrb[0].mxu0
        %v1532 = vadd.f32 %v1147, %v1531
        %v1533 = vpop.f32.mrb[0].mxu0
        %1534 = vmatprep.mubr.f32.mxu0 0.0
        %1535 = vmatmul.mubr.f32.gmra.mrb[0].mxu0 %v468
        %v1536 = vpop.f32.mrb[0].mxu0
        %v1537 = vadd.f32 %v1152, %v1536
        %v1538 = vpop.f32.mrb[0].mxu0
        %1539 = vmatprep.mubr.f32.mxu0 0.0
        %1540 = vmatmul.mubr.f32.gmra.mrb[0].mxu0 %v469
        %v1541 = vpop.f32.mrb[0].mxu0
        %v1542 = vadd.f32 %v1157, %v1541
        %v1543 = vpop.f32.mrb[0].mxu0
        %1544 = vmatprep.mubr.f32.mxu0 0.0
        %1545 = vmatmul.mubr.f32.gmra.mrb[0].mxu0 %v470
        %v1546 = vpop.f32.mrb[0].mxu0
        %v1547 = vadd.f32 %v1162, %v1546
        %v1548 = vpop.f32.mrb[0].mxu0
        %1549 = vmatprep.mubr.f32.mxu0 0.0
        %1550 = vmatmul.mubr.f32.gmra.mrb[0].mxu0 %v471
        %v1551 = vpop.f32.mrb[0].mxu0
        %v1552 = vadd.f32 %v1167, %v1551
        %v1553 = vpop.f32.mrb[0].mxu0
        %1554 = vmatprep.mubr.f32.mxu0 0.0
        %1555 = vmatmul.mubr.f32.gmra.mrb[0].mxu0 %v472
        %v1556 = vpop.f32.mrb[0].mxu0
        %v1557 = vadd.f32 %v1172, %v1556
        %v1558 = vpop.f32.mrb[0].mxu0
        %1559 = vmatprep.mubr.f32.mxu0 0.0
        %1560 = vmatmul.mubr.f32.gmra.mrb[0].mxu0 %v473
        %v1561 = vpop.f32.mrb[0].mxu0
        %v1562 = vadd.f32 %v1177, %v1561
        %v1563 = vpop.f32.mrb[0].mxu0
        %1564 = vmatprep.mubr.f32.mxu0 0.0
        %1565 = vmatmul.mubr.f32.gmra.mrb[0].mxu0 %v474
        %v1566 = vpop.f32.mrb[0].mxu0
        %v1567 = vadd.f32 %v1182, %v1566
        %v1568 = vpop.f32.mrb[0].mxu0
        %1569 = vmatprep.mubr.f32.mxu0 0.0
        %1570 = vmatmul.mubr.f32.gmra.mrb[0].mxu0 %v475
        %v1571 = vpop.f32.mrb[0].mxu0
        %v1572 = vadd.f32 %v1187, %v1571
        %v1573 = vpop.f32.mrb[0].mxu0
        %1574 = vmatprep.mubr.f32.mxu0 0.0
        %1575 = vmatmul.mubr.f32.gmra.mrb[0].mxu0 %v476
        %v1576 = vpop.f32.mrb[0].mxu0
        %v1577 = vadd.f32 %v1192, %v1576
        %v1578 = vpop.f32.mrb[0].mxu0
        %1579 = vmatprep.mubr.f32.mxu0 0.0
        %1580 = vmatmul.mubr.f32.gmra.mrb[0].mxu0 %v477
        %v1581 = vpop.f32.mrb[0].mxu0
        %v1582 = vadd.f32 %v1197, %v1581
        %v1583 = vpop.f32.mrb[0].mxu0
        %1584 = vmatprep.mubr.f32.mxu0 0.0
        %1585 = vmatmul.mubr.f32.gmra.mrb[0].mxu0 %v478
        %v1586 = vpop.f32.mrb[0].mxu0
        %v1587 = vadd.f32 %v1202, %v1586
        %v1588 = vpop.f32.mrb[0].mxu0
        %1589 = vmatprep.mubr.f32.mxu0 0.0
        %1590 = vmatmul.mubr.f32.gmra.mrb[0].mxu0 %v479
        %v1591 = vpop.f32.mrb[0].mxu0
        %v1592 = vadd.f32 %v1207, %v1591
        %v1593 = vpop.f32.mrb[0].mxu0
        %1594 = vmatprep.mubr.f32.mxu0 0.0
        %1595 = vmatmul.mubr.f32.gmra.mrb[0].mxu0 %v480
        %v1596 = vpop.f32.mrb[0].mxu0
        %v1597 = vadd.f32 %v1212, %v1596
        %v1598 = vpop.f32.mrb[0].mxu0
        %1599 = vmatprep.mubr.f32.mxu0 0.0
        %1600 = vmatmul.mubr.f32.gmra.mrb[0].mxu0 %v481
        %v1601 = vpop.f32.mrb[0].mxu0
        %v1602 = vadd.f32 %v1217, %v1601
        %v1603 = vpop.f32.mrb[0].mxu0
        %1604 = vmatprep.mubr.f32.mxu0 0.0
        %1605 = vmatmul.mubr.f32.gmra.mrb[0].mxu0 %v482
        %v1606 = vpop.f32.mrb[0].mxu0
        %v1607 = vadd.f32 %v1222, %v1606
        %v1608 = vpop.f32.mrb[0].mxu0
        %1609 = vmatprep.mubr.f32.mxu0 0.0
        %1610 = vmatmul.mubr.f32.gmra.mrb[0].mxu0 %v483
        %v1611 = vpop.f32.mrb[0].mxu0
        %v1612 = vadd.f32 %v1227, %v1611
        %v1613 = vpop.f32.mrb[0].mxu0
        %1614 = vmatprep.mubr.f32.mxu0 0.0
        %1615 = vmatmul.mubr.f32.gmra.mrb[0].mxu0 %v484
        %v1616 = vpop.f32.mrb[0].mxu0
        %v1617 = vadd.f32 %v1232, %v1616
        %v1618 = vpop.f32.mrb[0].mxu0
        %1619 = vmatprep.mubr.f32.mxu0 0.0
        %1620 = vmatmul.mubr.f32.gmra.mrb[0].mxu0 %v485
        %v1621 = vpop.f32.mrb[0].mxu0
        %v1622 = vadd.f32 %v1237, %v1621
        %v1623 = vpop.f32.mrb[0].mxu0
        %1624 = vmatprep.mubr.f32.mxu0 0.0
        %1625 = vmatmul.mubr.f32.gmra.mrb[0].mxu0 %v486
        %v1626 = vpop.f32.mrb[0].mxu0
        %v1627 = vadd.f32 %v1242, %v1626
        %v1628 = vpop.f32.mrb[0].mxu0
        %1629 = vmatprep.mubr.f32.mxu0 0.0
        %1630 = vmatmul.mubr.f32.gmra.mrb[0].mxu0 %v487
        %v1631 = vpop.f32.mrb[0].mxu0
        %v1632 = vadd.f32 %v1247, %v1631
        %v1633 = vpop.f32.mrb[0].mxu0
        %1634 = vmatprep.mubr.f32.mxu0 0.0
        %1635 = vmatmul.mubr.f32.gmra.mrb[0].mxu0 %v488
        %v1636 = vpop.f32.mrb[0].mxu0
        %v1637 = vadd.f32 %v1252, %v1636
        %v1638 = vpop.f32.mrb[0].mxu0
        %1639 = vmatprep.mubr.f32.mxu0 0.0
        %1640 = vmatmul.mubr.f32.gmra.mrb[0].mxu0 %v489
        %v1641 = vpop.f32.mrb[0].mxu0
        %v1642 = vadd.f32 %v1257, %v1641
        %v1643 = vpop.f32.mrb[0].mxu0
        %1644 = vmatprep.mubr.f32.mxu0 0.0
        %1645 = vmatmul.mubr.f32.gmra.mrb[0].mxu0 %v490
        %v1646 = vpop.f32.mrb[0].mxu0
        %v1647 = vadd.f32 %v1262, %v1646
        %v1648 = vpop.f32.mrb[0].mxu0
        %1649 = vmatprep.mubr.f32.mxu0 0.0
        %1650 = vmatmul.mubr.f32.gmra.mrb[0].mxu0 %v491
        %v1651 = vpop.f32.mrb[0].mxu0
        %v1652 = vadd.f32 %v1267, %v1651
        %v1653 = vpop.f32.mrb[0].mxu0
        %1654 = vmatprep.mubr.f32.mxu0 0.0
        %1655 = vmatmul.mubr.f32.gmra.mrb[0].mxu0 %v492
        %v1656 = vpop.f32.mrb[0].mxu0
        %v1657 = vadd.f32 %v1272, %v1656
        %v1658 = vpop.f32.mrb[0].mxu0
        %1659 = vmatprep.mubr.f32.mxu0 0.0
        %1660 = vmatmul.mubr.f32.gmra.mrb[0].mxu0 %v493
        %v1661 = vpop.f32.mrb[0].mxu0
        %v1662 = vadd.f32 %v1277, %v1661
        %v1663 = vpop.f32.mrb[0].mxu0
        %1664 = vmatprep.mubr.f32.mxu0 0.0
        %1665 = vmatmul.mubr.f32.gmra.mrb[0].mxu0 %v494
        %v1666 = vpop.f32.mrb[0].mxu0
        %v1667 = vadd.f32 %v1282, %v1666
        %v1668 = vpop.f32.mrb[0].mxu0
        %1669 = vmatprep.mubr.f32.mxu0 0.0
        %1670 = vmatmul.mubr.f32.gmra.mrb[0].mxu0 %v495
        %v1671 = vpop.f32.mrb[0].mxu0
        %v1672 = vadd.f32 %v1287, %v1671
        %v1673 = vpop.f32.mrb[0].mxu0
        %1674 = vmatprep.mubr.f32.mxu0 0.0
        %1675 = vmatmul.mubr.f32.gmra.mrb[0].mxu0 %v496
        %v1676 = vpop.f32.mrb[0].mxu0
        %v1677 = vadd.f32 %v1292, %v1676
        %v1678 = vpop.f32.mrb[0].mxu0
        %1679 = vmatprep.mubr.f32.mxu0 0.0
        %1680 = vmatmul.mubr.f32.gmra.mrb[0].mxu0 %v497
        %v1681 = vpop.f32.mrb[0].mxu0
        %v1682 = vadd.f32 %v1297, %v1681
        %v1683 = vpop.f32.mrb[0].mxu0
        %1684 = vdwg.mxu0
        %v1685 = vld [vmem:[%s373] sm:$0xff]
        %v1686 = vld [vmem:[%s373 + $0x8] sm:$0xff]
        %v1687 = vld [vmem:[%s373 + $0x10] sm:$0xff]
        %v1688 = vld [vmem:[%s373 + $0x18] sm:$0xff]
        %v1689 = vld [vmem:[%s373 + $0x20] sm:$0xff]
        %v1690 = vld [vmem:[%s373 + $0x28] sm:$0xff]
        %v1691 = vld [vmem:[%s373 + $0x30] sm:$0xff]
        %v1692 = vld [vmem:[%s373 + $0x38] sm:$0xff]
        %v1693 = vld [vmem:[%s373 + $0x40] sm:$0xff]
        %v1694 = vld [vmem:[%s373 + $0x48] sm:$0xff]
        %v1695 = vld [vmem:[%s373 + $0x50] sm:$0xff]
        %v1696 = vld [vmem:[%s373 + $0x58] sm:$0xff]
        %v1697 = vld [vmem:[%s373 + $0x60] sm:$0xff]
        %v1698 = vld [vmem:[%s373 + $0x68] sm:$0xff]
        %v1699 = vld [vmem:[%s373 + $0x70] sm:$0xff]
        %v1700 = vld [vmem:[%s373 + $0x78] sm:$0xff]
        %v1701 = vld [vmem:[#allocation11 + $0x100] sm:$0xff]
        %v1702 = vld [vmem:[#allocation11 + $0x108] sm:$0xff]
        %v1703 = vld [vmem:[#allocation11 + $0x110] sm:$0xff]
        %v1704 = vld [vmem:[#allocation11 + $0x118] sm:$0xff]
        %v1705 = vld [vmem:[#allocation11 + $0x120] sm:$0xff]
        %v1706 = vld [vmem:[#allocation11 + $0x128] sm:$0xff]
        %v1707 = vld [vmem:[#allocation11 + $0x130] sm:$0xff]
        %v1708 = vld [vmem:[#allocation11 + $0x138] sm:$0xff]
        %v1709 = vld [vmem:[#allocation11 + $0x140] sm:$0xff]
        %v1710 = vld [vmem:[#allocation11 + $0x148] sm:$0xff]
        %v1711 = vld [vmem:[#allocation11 + $0x150] sm:$0xff]
        %v1712 = vld [vmem:[#allocation11 + $0x158] sm:$0xff]
        %v1713 = vld [vmem:[#allocation11 + $0x160] sm:$0xff]
        %v1714 = vld [vmem:[#allocation11 + $0x168] sm:$0xff]
        %v1715 = vld [vmem:[#allocation11 + $0x170] sm:$0xff]
        %v1716 = vld [vmem:[#allocation11 + $0x178] sm:$0xff]
        %1717 = vmatprep.subr.mxu0 0.0
        %1718 = vmatpush1.msra.mxu0 %v1701
        %1719 = vmatprep.subr.mxu0 0.0
        %1720 = vmatpush1.msra.mxu0 %v1702
        %1721 = vmatprep.subr.mxu0 0.0
        %1722 = vmatpush1.msra.mxu0 %v1703
        %1723 = vmatprep.subr.mxu0 0.0
        %1724 = vmatpush1.msra.mxu0 %v1704
        %1725 = vmatprep.subr.mxu0 0.0
        %1726 = vmatpush1.msra.mxu0 %v1705
        %1727 = vmatprep.subr.mxu0 0.0
        %1728 = vmatpush1.msra.mxu0 %v1706
        %1729 = vmatprep.subr.mxu0 0.0
        %1730 = vmatpush1.msra.mxu0 %v1707
        %1731 = vmatprep.subr.mxu0 0.0
        %1732 = vmatpush1.msra.mxu0 %v1708
        %1733 = vmatprep.subr.mxu0 0.0
        %1734 = vmatpush1.msra.mxu0 %v1709
        %1735 = vmatprep.subr.mxu0 0.0
        %1736 = vmatpush1.msra.mxu0 %v1710
        %1737 = vmatprep.subr.mxu0 0.0
        %1738 = vmatpush1.msra.mxu0 %v1711
        %1739 = vmatprep.subr.mxu0 0.0
        %1740 = vmatpush1.msra.mxu0 %v1712
        %1741 = vmatprep.subr.mxu0 0.0
        %1742 = vmatpush1.msra.mxu0 %v1713
        %1743 = vmatprep.subr.mxu0 0.0
        %1744 = vmatpush1.msra.mxu0 %v1714
        %1745 = vmatprep.subr.mxu0 0.0
        %1746 = vmatpush1.msra.mxu0 %v1715
        %1747 = vmatprep.subr.mxu0 0.0
        %1748 = vmatpush1.msra.mxu0 %v1716
        %1749 = vmatprep.subr.mxu0 0.0
        %1750 = vmatpush1.msra.mxu0 0.0
        %1751 = vmatprep.subr.mxu0 0.0
        %1752 = vmatpush1.msra.mxu0 0.0
        %1753 = vmatprep.subr.mxu0 0.0
        %1754 = vmatpush1.msra.mxu0 0.0
        %1755 = vmatprep.subr.mxu0 0.0
        %1756 = vmatpush1.msra.mxu0 0.0
        %1757 = vmatprep.subr.mxu0 0.0
        %1758 = vmatpush1.msra.mxu0 0.0
        %1759 = vmatprep.subr.mxu0 0.0
        %1760 = vmatpush1.msra.mxu0 0.0
        %1761 = vmatprep.subr.mxu0 0.0
        %1762 = vmatpush1.msra.mxu0 0.0
        %1763 = vmatprep.subr.mxu0 0.0
        %1764 = vmatpush1.msra.mxu0 0.0
        %1765 = vmatprep.subr.mxu0 0.0
        %1766 = vmatpush1.msra.mxu0 0.0
        %1767 = vmatprep.subr.mxu0 0.0
        %1768 = vmatpush1.msra.mxu0 0.0
        %1769 = vmatprep.subr.mxu0 0.0
        %1770 = vmatpush1.msra.mxu0 0.0
        %1771 = vmatprep.subr.mxu0 0.0
        %1772 = vmatpush1.msra.mxu0 0.0
        %1773 = vmatprep.subr.mxu0 0.0
        %1774 = vmatpush1.msra.mxu0 0.0
        %1775 = vmatprep.subr.mxu0 0.0
        %1776 = vmatpush1.msra.mxu0 0.0
        %1777 = vmatprep.subr.mxu0 0.0
        %1778 = vmatpush1.msra.mxu0 0.0
        %1779 = vmatprep.subr.mxu0 0.0
        %1780 = vmatpush1.msra.mxu0 0.0
        %1781 = vmatprep.mubr.f32.mxu0 0.0
        %1782 = vmatmul.mubr.f32.gmra.mrb[0].mxu0 %v1685
        %v1783 = vpop.f32.mrb[0].mxu0
        %v1784 = vadd.f32 0.0, %v1783
        %v1785 = vpop.f32.mrb[0].mxu0
        %1786 = vmatprep.mubr.f32.mxu0 0.0
        %1787 = vmatmul.mubr.f32.gmra.mrb[0].mxu0 %v1686
        %v1788 = vpop.f32.mrb[0].mxu0
        %v1789 = vadd.f32 0.0, %v1788
        %v1790 = vpop.f32.mrb[0].mxu0
        %1791 = vmatprep.mubr.f32.mxu0 0.0
        %1792 = vmatmul.mubr.f32.gmra.mrb[0].mxu0 %v1687
        %v1793 = vpop.f32.mrb[0].mxu0
        %v1794 = vadd.f32 0.0, %v1793
        %v1795 = vpop.f32.mrb[0].mxu0
        %1796 = vmatprep.mubr.f32.mxu0 0.0
        %1797 = vmatmul.mubr.f32.gmra.mrb[0].mxu0 %v1688
        %v1798 = vpop.f32.mrb[0].mxu0
        %v1799 = vadd.f32 0.0, %v1798
        %v1800 = vpop.f32.mrb[0].mxu0
        %1801 = vmatprep.mubr.f32.mxu0 0.0
        %1802 = vmatmul.mubr.f32.gmra.mrb[0].mxu0 %v1689
        %v1803 = vpop.f32.mrb[0].mxu0
        %v1804 = vadd.f32 0.0, %v1803
        %v1805 = vpop.f32.mrb[0].mxu0
        %1806 = vmatprep.mubr.f32.mxu0 0.0
        %1807 = vmatmul.mubr.f32.gmra.mrb[0].mxu0 %v1690
        %v1808 = vpop.f32.mrb[0].mxu0
        %v1809 = vadd.f32 0.0, %v1808
        %v1810 = vpop.f32.mrb[0].mxu0
        %1811 = vmatprep.mubr.f32.mxu0 0.0
        %1812 = vmatmul.mubr.f32.gmra.mrb[0].mxu0 %v1691
        %v1813 = vpop.f32.mrb[0].mxu0
        %v1814 = vadd.f32 0.0, %v1813
        %v1815 = vpop.f32.mrb[0].mxu0
        %1816 = vmatprep.mubr.f32.mxu0 0.0
        %1817 = vmatmul.mubr.f32.gmra.mrb[0].mxu0 %v1692
        %v1818 = vpop.f32.mrb[0].mxu0
        %v1819 = vadd.f32 0.0, %v1818
        %v1820 = vpop.f32.mrb[0].mxu0
        %1821 = vmatprep.mubr.f32.mxu0 0.0
        %1822 = vmatmul.mubr.f32.gmra.mrb[0].mxu0 %v1693
        %v1823 = vpop.f32.mrb[0].mxu0
        %v1824 = vadd.f32 0.0, %v1823
        %v1825 = vpop.f32.mrb[0].mxu0
        %1826 = vmatprep.mubr.f32.mxu0 0.0
        %1827 = vmatmul.mubr.f32.gmra.mrb[0].mxu0 %v1694
        %v1828 = vpop.f32.mrb[0].mxu0
        %v1829 = vadd.f32 0.0, %v1828
        %v1830 = vpop.f32.mrb[0].mxu0
        %1831 = vmatprep.mubr.f32.mxu0 0.0
        %1832 = vmatmul.mubr.f32.gmra.mrb[0].mxu0 %v1695
        %v1833 = vpop.f32.mrb[0].mxu0
        %v1834 = vadd.f32 0.0, %v1833
        %v1835 = vpop.f32.mrb[0].mxu0
        %1836 = vmatprep.mubr.f32.mxu0 0.0
        %1837 = vmatmul.mubr.f32.gmra.mrb[0].mxu0 %v1696
        %v1838 = vpop.f32.mrb[0].mxu0
        %v1839 = vadd.f32 0.0, %v1838
        %v1840 = vpop.f32.mrb[0].mxu0
        %1841 = vmatprep.mubr.f32.mxu0 0.0
        %1842 = vmatmul.mubr.f32.gmra.mrb[0].mxu0 %v1697
        %v1843 = vpop.f32.mrb[0].mxu0
        %v1844 = vadd.f32 0.0, %v1843
        %v1845 = vpop.f32.mrb[0].mxu0
        %1846 = vmatprep.mubr.f32.mxu0 0.0
        %1847 = vmatmul.mubr.f32.gmra.mrb[0].mxu0 %v1698
        %v1848 = vpop.f32.mrb[0].mxu0
        %v1849 = vadd.f32 0.0, %v1848
        %v1850 = vpop.f32.mrb[0].mxu0
        %1851 = vmatprep.mubr.f32.mxu0 0.0
        %1852 = vmatmul.mubr.f32.gmra.mrb[0].mxu0 %v1699
        %v1853 = vpop.f32.mrb[0].mxu0
        %v1854 = vadd.f32 0.0, %v1853
        %v1855 = vpop.f32.mrb[0].mxu0
        %1856 = vmatprep.mubr.f32.mxu0 0.0
        %1857 = vmatmul.mubr.f32.gmra.mrb[0].mxu0 %v1700
        %v1858 = vpop.f32.mrb[0].mxu0
        %v1859 = vadd.f32 0.0, %v1858
        %v1860 = vpop.f32.mrb[0].mxu0
        %1861 = vdwg.mxu0
        %v1862 = vld [vmem:[#allocation10] sm:$0xff]
        %v1863 = vld [vmem:[#allocation10 + $0x8] sm:$0xff]
        %v1864 = vld [vmem:[#allocation10 + $0x10] sm:$0xff]
        %v1865 = vld [vmem:[#allocation10 + $0x18] sm:$0xff]
        %v1866 = vld [vmem:[#allocation10 + $0x20] sm:$0xff]
        %v1867 = vld [vmem:[#allocation10 + $0x28] sm:$0xff]
        %v1868 = vld [vmem:[#allocation10 + $0x30] sm:$0xff]
        %v1869 = vld [vmem:[#allocation10 + $0x38] sm:$0xff]
        %v1870 = vld [vmem:[#allocation10 + $0x40] sm:$0xff]
        %v1871 = vld [vmem:[#allocation10 + $0x48] sm:$0xff]
        %v1872 = vld [vmem:[#allocation10 + $0x50] sm:$0xff]
        %v1873 = vld [vmem:[#allocation10 + $0x58] sm:$0xff]
        %v1874 = vld [vmem:[#allocation10 + $0x60] sm:$0xff]
        %v1875 = vld [vmem:[#allocation10 + $0x68] sm:$0xff]
        %v1876 = vld [vmem:[#allocation10 + $0x70] sm:$0xff]
        %v1877 = vld [vmem:[#allocation10 + $0x78] sm:$0xff]
        %v1878 = vld [vmem:[#allocation10 + $0x80] sm:$0xff]
        %v1879 = vld [vmem:[#allocation10 + $0x88] sm:$0xff]
        %v1880 = vld [vmem:[#allocation10 + $0x90] sm:$0xff]
        %v1881 = vld [vmem:[#allocation10 + $0x98] sm:$0xff]
        %v1882 = vld [vmem:[#allocation10 + $0xa0] sm:$0xff]
        %v1883 = vld [vmem:[#allocation10 + $0xa8] sm:$0xff]
        %v1884 = vld [vmem:[#allocation10 + $0xb0] sm:$0xff]
        %v1885 = vld [vmem:[#allocation10 + $0xb8] sm:$0xff]
        %v1886 = vld [vmem:[#allocation10 + $0xc0] sm:$0xff]
        %v1887 = vld [vmem:[#allocation10 + $0xc8] sm:$0xff]
        %v1888 = vld [vmem:[#allocation10 + $0xd0] sm:$0xff]
        %v1889 = vld [vmem:[#allocation10 + $0xd8] sm:$0xff]
        %v1890 = vld [vmem:[#allocation10 + $0xe0] sm:$0xff]
        %v1891 = vld [vmem:[#allocation10 + $0xe8] sm:$0xff]
        %v1892 = vld [vmem:[#allocation10 + $0xf0] sm:$0xff]
        %v1893 = vld [vmem:[#allocation10 + $0xf8] sm:$0xff]
        %v1894 = vld [vmem:[#allocation10 + $0x100] sm:$0xff]
        %v1895 = vld [vmem:[#allocation10 + $0x108] sm:$0xff]
        %v1896 = vld [vmem:[#allocation10 + $0x110] sm:$0xff]
        %v1897 = vld [vmem:[#allocation10 + $0x118] sm:$0xff]
        %v1898 = vld [vmem:[#allocation10 + $0x120] sm:$0xff]
        %v1899 = vld [vmem:[#allocation10 + $0x128] sm:$0xff]
        %v1900 = vld [vmem:[#allocation10 + $0x130] sm:$0xff]
        %v1901 = vld [vmem:[#allocation10 + $0x138] sm:$0xff]
        %v1902 = vld [vmem:[#allocation10 + $0x140] sm:$0xff]
        %v1903 = vld [vmem:[#allocation10 + $0x148] sm:$0xff]
        %v1904 = vld [vmem:[#allocation10 + $0x150] sm:$0xff]
        %v1905 = vld [vmem:[#allocation10 + $0x158] sm:$0xff]
        %v1906 = vld [vmem:[#allocation10 + $0x160] sm:$0xff]
        %v1907 = vld [vmem:[#allocation10 + $0x168] sm:$0xff]
        %v1908 = vld [vmem:[#allocation10 + $0x170] sm:$0xff]
        %v1909 = vld [vmem:[#allocation10 + $0x178] sm:$0xff]
        %v1910 = vld [vmem:[#allocation10 + $0x180] sm:$0xff]
        %v1911 = vld [vmem:[#allocation10 + $0x188] sm:$0xff]
        %v1912 = vld [vmem:[#allocation10 + $0x190] sm:$0xff]
        %v1913 = vld [vmem:[#allocation10 + $0x198] sm:$0xff]
        %v1914 = vld [vmem:[#allocation10 + $0x1a0] sm:$0xff]
        %v1915 = vld [vmem:[#allocation10 + $0x1a8] sm:$0xff]
        %v1916 = vld [vmem:[#allocation10 + $0x1b0] sm:$0xff]
        %v1917 = vld [vmem:[#allocation10 + $0x1b8] sm:$0xff]
        %v1918 = vld [vmem:[#allocation10 + $0x1c0] sm:$0xff]
        %v1919 = vld [vmem:[#allocation10 + $0x1c8] sm:$0xff]
        %v1920 = vld [vmem:[#allocation10 + $0x1d0] sm:$0xff]
        %v1921 = vld [vmem:[#allocation10 + $0x1d8] sm:$0xff]
        %v1922 = vld [vmem:[#allocation10 + $0x1e0] sm:$0xff]
        %v1923 = vld [vmem:[#allocation10 + $0x1e8] sm:$0xff]
        %v1924 = vld [vmem:[#allocation10 + $0x1f0] sm:$0xff]
        %v1925 = vld [vmem:[#allocation10 + $0x1f8] sm:$0xff]
        %1926 = vmatprep.subr.mxu0 0.0
        %1927 = vmatpush1.msra.mxu0 %v1784
        %1928 = vmatprep.subr.mxu0 0.0
        %1929 = vmatpush1.msra.mxu0 %v1789
        %1930 = vmatprep.subr.mxu0 0.0
        %1931 = vmatpush1.msra.mxu0 %v1794
        %1932 = vmatprep.subr.mxu0 0.0
        %1933 = vmatpush1.msra.mxu0 %v1799
        %1934 = vmatprep.subr.mxu0 0.0
        %1935 = vmatpush1.msra.mxu0 %v1804
        %1936 = vmatprep.subr.mxu0 0.0
        %1937 = vmatpush1.msra.mxu0 %v1809
        %1938 = vmatprep.subr.mxu0 0.0
        %1939 = vmatpush1.msra.mxu0 %v1814
        %1940 = vmatprep.subr.mxu0 0.0
        %1941 = vmatpush1.msra.mxu0 %v1819
        %1942 = vmatprep.subr.mxu0 0.0
        %1943 = vmatpush1.msra.mxu0 %v1824
        %1944 = vmatprep.subr.mxu0 0.0
        %1945 = vmatpush1.msra.mxu0 %v1829
        %1946 = vmatprep.subr.mxu0 0.0
        %1947 = vmatpush1.msra.mxu0 %v1834
        %1948 = vmatprep.subr.mxu0 0.0
        %1949 = vmatpush1.msra.mxu0 %v1839
        %1950 = vmatprep.subr.mxu0 0.0
        %1951 = vmatpush1.msra.mxu0 %v1844
        %1952 = vmatprep.subr.mxu0 0.0
        %1953 = vmatpush1.msra.mxu0 %v1849
        %1954 = vmatprep.subr.mxu0 0.0
        %1955 = vmatpush1.msra.mxu0 %v1854
        %1956 = vmatprep.subr.mxu0 0.0
        %1957 = vmatpush1.msra.mxu0 %v1859
        %1958 = vmatprep.subr.mxu0 0.0
        %1959 = vmatpush1.msra.mxu0 0.0
        %1960 = vmatprep.subr.mxu0 0.0
        %1961 = vmatpush1.msra.mxu0 0.0
        %1962 = vmatprep.subr.mxu0 0.0
        %1963 = vmatpush1.msra.mxu0 0.0
        %1964 = vmatprep.subr.mxu0 0.0
        %1965 = vmatpush1.msra.mxu0 0.0
        %1966 = vmatprep.subr.mxu0 0.0
        %1967 = vmatpush1.msra.mxu0 0.0
        %1968 = vmatprep.subr.mxu0 0.0
        %1969 = vmatpush1.msra.mxu0 0.0
        %1970 = vmatprep.subr.mxu0 0.0
        %1971 = vmatpush1.msra.mxu0 0.0
        %1972 = vmatprep.subr.mxu0 0.0
        %1973 = vmatpush1.msra.mxu0 0.0
        %1974 = vmatprep.subr.mxu0 0.0
        %1975 = vmatpush1.msra.mxu0 0.0
        %1976 = vmatprep.subr.mxu0 0.0
        %1977 = vmatpush1.msra.mxu0 0.0
        %1978 = vmatprep.subr.mxu0 0.0
        %1979 = vmatpush1.msra.mxu0 0.0
        %1980 = vmatprep.subr.mxu0 0.0
        %1981 = vmatpush1.msra.mxu0 0.0
        %1982 = vmatprep.subr.mxu0 0.0
        %1983 = vmatpush1.msra.mxu0 0.0
        %1984 = vmatprep.subr.mxu0 0.0
        %1985 = vmatpush1.msra.mxu0 0.0
        %1986 = vmatprep.subr.mxu0 0.0
        %1987 = vmatpush1.msra.mxu0 0.0
        %1988 = vmatprep.subr.mxu0 0.0
        %1989 = vmatpush1.msra.mxu0 0.0
        %1990 = vmatprep.mubr.f32.mxu0 0.0
        %1991 = vmatmul.mubr.f32.gmra.mrb[0].mxu0 %v1862
        %v1992 = vpop.f32.mrb[0].mxu0
        %v1993 = vadd.f32 0.0, %v1992
        %v1994 = vpop.f32.mrb[0].mxu0
        %1995 = vmatprep.mubr.f32.mxu0 0.0
        %1996 = vmatmul.mubr.f32.gmra.mrb[0].mxu0 %v1863
        %v1997 = vpop.f32.mrb[0].mxu0
        %v1998 = vadd.f32 0.0, %v1997
        %v1999 = vpop.f32.mrb[0].mxu0
        %2000 = vmatprep.mubr.f32.mxu0 0.0
        %2001 = vmatmul.mubr.f32.gmra.mrb[0].mxu0 %v1864
        %v2002 = vpop.f32.mrb[0].mxu0
        %v2003 = vadd.f32 0.0, %v2002
        %v2004 = vpop.f32.mrb[0].mxu0
        %2005 = vmatprep.mubr.f32.mxu0 0.0
        %2006 = vmatmul.mubr.f32.gmra.mrb[0].mxu0 %v1865
        %v2007 = vpop.f32.mrb[0].mxu0
        %v2008 = vadd.f32 0.0, %v2007
        %v2009 = vpop.f32.mrb[0].mxu0
        %2010 = vmatprep.mubr.f32.mxu0 0.0
        %2011 = vmatmul.mubr.f32.gmra.mrb[0].mxu0 %v1866
        %v2012 = vpop.f32.mrb[0].mxu0
        %v2013 = vadd.f32 0.0, %v2012
        %v2014 = vpop.f32.mrb[0].mxu0
        %2015 = vmatprep.mubr.f32.mxu0 0.0
        %2016 = vmatmul.mubr.f32.gmra.mrb[0].mxu0 %v1867
        %v2017 = vpop.f32.mrb[0].mxu0
        %v2018 = vadd.f32 0.0, %v2017
        %v2019 = vpop.f32.mrb[0].mxu0
        %2020 = vmatprep.mubr.f32.mxu0 0.0
        %2021 = vmatmul.mubr.f32.gmra.mrb[0].mxu0 %v1868
        %v2022 = vpop.f32.mrb[0].mxu0
        %v2023 = vadd.f32 0.0, %v2022
        %v2024 = vpop.f32.mrb[0].mxu0
        %2025 = vmatprep.mubr.f32.mxu0 0.0
        %2026 = vmatmul.mubr.f32.gmra.mrb[0].mxu0 %v1869
        %v2027 = vpop.f32.mrb[0].mxu0
        %v2028 = vadd.f32 0.0, %v2027
        %v2029 = vpop.f32.mrb[0].mxu0
        %2030 = vmatprep.mubr.f32.mxu0 0.0
        %2031 = vmatmul.mubr.f32.gmra.mrb[0].mxu0 %v1870
        %v2032 = vpop.f32.mrb[0].mxu0
        %v2033 = vadd.f32 0.0, %v2032
        %v2034 = vpop.f32.mrb[0].mxu0
        %2035 = vmatprep.mubr.f32.mxu0 0.0
        %2036 = vmatmul.mubr.f32.gmra.mrb[0].mxu0 %v1871
        %v2037 = vpop.f32.mrb[0].mxu0
        %v2038 = vadd.f32 0.0, %v2037
        %v2039 = vpop.f32.mrb[0].mxu0
        %2040 = vmatprep.mubr.f32.mxu0 0.0
        %2041 = vmatmul.mubr.f32.gmra.mrb[0].mxu0 %v1872
        %v2042 = vpop.f32.mrb[0].mxu0
        %v2043 = vadd.f32 0.0, %v2042
        %v2044 = vpop.f32.mrb[0].mxu0
        %2045 = vmatprep.mubr.f32.mxu0 0.0
        %2046 = vmatmul.mubr.f32.gmra.mrb[0].mxu0 %v1873
        %v2047 = vpop.f32.mrb[0].mxu0
        %v2048 = vadd.f32 0.0, %v2047
        %v2049 = vpop.f32.mrb[0].mxu0
        %2050 = vmatprep.mubr.f32.mxu0 0.0
        %2051 = vmatmul.mubr.f32.gmra.mrb[0].mxu0 %v1874
        %v2052 = vpop.f32.mrb[0].mxu0
        %v2053 = vadd.f32 0.0, %v2052
        %v2054 = vpop.f32.mrb[0].mxu0
        %2055 = vmatprep.mubr.f32.mxu0 0.0
        %2056 = vmatmul.mubr.f32.gmra.mrb[0].mxu0 %v1875
        %v2057 = vpop.f32.mrb[0].mxu0
        %v2058 = vadd.f32 0.0, %v2057
        %v2059 = vpop.f32.mrb[0].mxu0
        %2060 = vmatprep.mubr.f32.mxu0 0.0
        %2061 = vmatmul.mubr.f32.gmra.mrb[0].mxu0 %v1876
        %v2062 = vpop.f32.mrb[0].mxu0
        %v2063 = vadd.f32 0.0, %v2062
        %v2064 = vpop.f32.mrb[0].mxu0
        %2065 = vmatprep.mubr.f32.mxu0 0.0
        %2066 = vmatmul.mubr.f32.gmra.mrb[0].mxu0 %v1877
        %v2067 = vpop.f32.mrb[0].mxu0
        %v2068 = vadd.f32 0.0, %v2067
        %v2069 = vpop.f32.mrb[0].mxu0
        %2070 = vmatprep.mubr.f32.mxu0 0.0
        %2071 = vmatmul.mubr.f32.gmra.mrb[0].mxu0 %v1878
        %v2072 = vpop.f32.mrb[0].mxu0
        %v2073 = vadd.f32 0.0, %v2072
        %v2074 = vpop.f32.mrb[0].mxu0
        %2075 = vmatprep.mubr.f32.mxu0 0.0
        %2076 = vmatmul.mubr.f32.gmra.mrb[0].mxu0 %v1879
        %v2077 = vpop.f32.mrb[0].mxu0
        %v2078 = vadd.f32 0.0, %v2077
        %v2079 = vpop.f32.mrb[0].mxu0
        %2080 = vmatprep.mubr.f32.mxu0 0.0
        %2081 = vmatmul.mubr.f32.gmra.mrb[0].mxu0 %v1880
        %v2082 = vpop.f32.mrb[0].mxu0
        %v2083 = vadd.f32 0.0, %v2082
        %v2084 = vpop.f32.mrb[0].mxu0
        %2085 = vmatprep.mubr.f32.mxu0 0.0
        %2086 = vmatmul.mubr.f32.gmra.mrb[0].mxu0 %v1881
        %v2087 = vpop.f32.mrb[0].mxu0
        %v2088 = vadd.f32 0.0, %v2087
        %v2089 = vpop.f32.mrb[0].mxu0
        %2090 = vmatprep.mubr.f32.mxu0 0.0
        %2091 = vmatmul.mubr.f32.gmra.mrb[0].mxu0 %v1882
        %v2092 = vpop.f32.mrb[0].mxu0
        %v2093 = vadd.f32 0.0, %v2092
        %v2094 = vpop.f32.mrb[0].mxu0
        %2095 = vmatprep.mubr.f32.mxu0 0.0
        %2096 = vmatmul.mubr.f32.gmra.mrb[0].mxu0 %v1883
        %v2097 = vpop.f32.mrb[0].mxu0
        %v2098 = vadd.f32 0.0, %v2097
        %v2099 = vpop.f32.mrb[0].mxu0
        %2100 = vmatprep.mubr.f32.mxu0 0.0
        %2101 = vmatmul.mubr.f32.gmra.mrb[0].mxu0 %v1884
        %v2102 = vpop.f32.mrb[0].mxu0
        %v2103 = vadd.f32 0.0, %v2102
        %v2104 = vpop.f32.mrb[0].mxu0
        %2105 = vmatprep.mubr.f32.mxu0 0.0
        %2106 = vmatmul.mubr.f32.gmra.mrb[0].mxu0 %v1885
        %v2107 = vpop.f32.mrb[0].mxu0
        %v2108 = vadd.f32 0.0, %v2107
        %v2109 = vpop.f32.mrb[0].mxu0
        %2110 = vmatprep.mubr.f32.mxu0 0.0
        %2111 = vmatmul.mubr.f32.gmra.mrb[0].mxu0 %v1886
        %v2112 = vpop.f32.mrb[0].mxu0
        %v2113 = vadd.f32 0.0, %v2112
        %v2114 = vpop.f32.mrb[0].mxu0
        %2115 = vmatprep.mubr.f32.mxu0 0.0
        %2116 = vmatmul.mubr.f32.gmra.mrb[0].mxu0 %v1887
        %v2117 = vpop.f32.mrb[0].mxu0
        %v2118 = vadd.f32 0.0, %v2117
        %v2119 = vpop.f32.mrb[0].mxu0
        %2120 = vmatprep.mubr.f32.mxu0 0.0
        %2121 = vmatmul.mubr.f32.gmra.mrb[0].mxu0 %v1888
        %v2122 = vpop.f32.mrb[0].mxu0
        %v2123 = vadd.f32 0.0, %v2122
        %v2124 = vpop.f32.mrb[0].mxu0
        %2125 = vmatprep.mubr.f32.mxu0 0.0
        %2126 = vmatmul.mubr.f32.gmra.mrb[0].mxu0 %v1889
        %v2127 = vpop.f32.mrb[0].mxu0
        %v2128 = vadd.f32 0.0, %v2127
        %v2129 = vpop.f32.mrb[0].mxu0
        %2130 = vmatprep.mubr.f32.mxu0 0.0
        %2131 = vmatmul.mubr.f32.gmra.mrb[0].mxu0 %v1890
        %v2132 = vpop.f32.mrb[0].mxu0
        %v2133 = vadd.f32 0.0, %v2132
        %v2134 = vpop.f32.mrb[0].mxu0
        %2135 = vmatprep.mubr.f32.mxu0 0.0
        %2136 = vmatmul.mubr.f32.gmra.mrb[0].mxu0 %v1891
        %v2137 = vpop.f32.mrb[0].mxu0
        %v2138 = vadd.f32 0.0, %v2137
        %v2139 = vpop.f32.mrb[0].mxu0
        %2140 = vmatprep.mubr.f32.mxu0 0.0
        %2141 = vmatmul.mubr.f32.gmra.mrb[0].mxu0 %v1892
        %v2142 = vpop.f32.mrb[0].mxu0
        %v2143 = vadd.f32 0.0, %v2142
        %v2144 = vpop.f32.mrb[0].mxu0
        %2145 = vmatprep.mubr.f32.mxu0 0.0
        %2146 = vmatmul.mubr.f32.gmra.mrb[0].mxu0 %v1893
        %v2147 = vpop.f32.mrb[0].mxu0
        %v2148 = vadd.f32 0.0, %v2147
        %v2149 = vpop.f32.mrb[0].mxu0
        %2150 = vmatprep.mubr.f32.mxu0 0.0
        %2151 = vmatmul.mubr.f32.gmra.mrb[0].mxu0 %v1894
        %v2152 = vpop.f32.mrb[0].mxu0
        %v2153 = vadd.f32 0.0, %v2152
        %v2154 = vpop.f32.mrb[0].mxu0
        %2155 = vmatprep.mubr.f32.mxu0 0.0
        %2156 = vmatmul.mubr.f32.gmra.mrb[0].mxu0 %v1895
        %v2157 = vpop.f32.mrb[0].mxu0
        %v2158 = vadd.f32 0.0, %v2157
        %v2159 = vpop.f32.mrb[0].mxu0
        %2160 = vmatprep.mubr.f32.mxu0 0.0
        %2161 = vmatmul.mubr.f32.gmra.mrb[0].mxu0 %v1896
        %v2162 = vpop.f32.mrb[0].mxu0
        %v2163 = vadd.f32 0.0, %v2162
        %v2164 = vpop.f32.mrb[0].mxu0
        %2165 = vmatprep.mubr.f32.mxu0 0.0
        %2166 = vmatmul.mubr.f32.gmra.mrb[0].mxu0 %v1897
        %v2167 = vpop.f32.mrb[0].mxu0
        %v2168 = vadd.f32 0.0, %v2167
        %v2169 = vpop.f32.mrb[0].mxu0
        %2170 = vmatprep.mubr.f32.mxu0 0.0
        %2171 = vmatmul.mubr.f32.gmra.mrb[0].mxu0 %v1898
        %v2172 = vpop.f32.mrb[0].mxu0
        %v2173 = vadd.f32 0.0, %v2172
        %v2174 = vpop.f32.mrb[0].mxu0
        %2175 = vmatprep.mubr.f32.mxu0 0.0
        %2176 = vmatmul.mubr.f32.gmra.mrb[0].mxu0 %v1899
        %v2177 = vpop.f32.mrb[0].mxu0
        %v2178 = vadd.f32 0.0, %v2177
        %v2179 = vpop.f32.mrb[0].mxu0
        %2180 = vmatprep.mubr.f32.mxu0 0.0
        %2181 = vmatmul.mubr.f32.gmra.mrb[0].mxu0 %v1900
        %v2182 = vpop.f32.mrb[0].mxu0
        %v2183 = vadd.f32 0.0, %v2182
        %v2184 = vpop.f32.mrb[0].mxu0
        %2185 = vmatprep.mubr.f32.mxu0 0.0
        %2186 = vmatmul.mubr.f32.gmra.mrb[0].mxu0 %v1901
        %v2187 = vpop.f32.mrb[0].mxu0
        %v2188 = vadd.f32 0.0, %v2187
        %v2189 = vpop.f32.mrb[0].mxu0
        %2190 = vmatprep.mubr.f32.mxu0 0.0
        %2191 = vmatmul.mubr.f32.gmra.mrb[0].mxu0 %v1902
        %v2192 = vpop.f32.mrb[0].mxu0
        %v2193 = vadd.f32 0.0, %v2192
        %v2194 = vpop.f32.mrb[0].mxu0
        %2195 = vmatprep.mubr.f32.mxu0 0.0
        %2196 = vmatmul.mubr.f32.gmra.mrb[0].mxu0 %v1903
        %v2197 = vpop.f32.mrb[0].mxu0
        %v2198 = vadd.f32 0.0, %v2197
        %v2199 = vpop.f32.mrb[0].mxu0
        %2200 = vmatprep.mubr.f32.mxu0 0.0
        %2201 = vmatmul.mubr.f32.gmra.mrb[0].mxu0 %v1904
        %v2202 = vpop.f32.mrb[0].mxu0
        %v2203 = vadd.f32 0.0, %v2202
        %v2204 = vpop.f32.mrb[0].mxu0
        %2205 = vmatprep.mubr.f32.mxu0 0.0
        %2206 = vmatmul.mubr.f32.gmra.mrb[0].mxu0 %v1905
        %v2207 = vpop.f32.mrb[0].mxu0
        %v2208 = vadd.f32 0.0, %v2207
        %v2209 = vpop.f32.mrb[0].mxu0
        %2210 = vmatprep.mubr.f32.mxu0 0.0
        %2211 = vmatmul.mubr.f32.gmra.mrb[0].mxu0 %v1906
        %v2212 = vpop.f32.mrb[0].mxu0
        %v2213 = vadd.f32 0.0, %v2212
        %v2214 = vpop.f32.mrb[0].mxu0
        %2215 = vmatprep.mubr.f32.mxu0 0.0
        %2216 = vmatmul.mubr.f32.gmra.mrb[0].mxu0 %v1907
        %v2217 = vpop.f32.mrb[0].mxu0
        %v2218 = vadd.f32 0.0, %v2217
        %v2219 = vpop.f32.mrb[0].mxu0
        %2220 = vmatprep.mubr.f32.mxu0 0.0
        %2221 = vmatmul.mubr.f32.gmra.mrb[0].mxu0 %v1908
        %v2222 = vpop.f32.mrb[0].mxu0
        %v2223 = vadd.f32 0.0, %v2222
        %v2224 = vpop.f32.mrb[0].mxu0
        %2225 = vmatprep.mubr.f32.mxu0 0.0
        %2226 = vmatmul.mubr.f32.gmra.mrb[0].mxu0 %v1909
        %v2227 = vpop.f32.mrb[0].mxu0
        %v2228 = vadd.f32 0.0, %v2227
        %v2229 = vpop.f32.mrb[0].mxu0
        %2230 = vmatprep.mubr.f32.mxu0 0.0
        %2231 = vmatmul.mubr.f32.gmra.mrb[0].mxu0 %v1910
        %v2232 = vpop.f32.mrb[0].mxu0
        %v2233 = vadd.f32 0.0, %v2232
        %v2234 = vpop.f32.mrb[0].mxu0
        %2235 = vmatprep.mubr.f32.mxu0 0.0
        %2236 = vmatmul.mubr.f32.gmra.mrb[0].mxu0 %v1911
        %v2237 = vpop.f32.mrb[0].mxu0
        %v2238 = vadd.f32 0.0, %v2237
        %v2239 = vpop.f32.mrb[0].mxu0
        %2240 = vmatprep.mubr.f32.mxu0 0.0
        %2241 = vmatmul.mubr.f32.gmra.mrb[0].mxu0 %v1912
        %v2242 = vpop.f32.mrb[0].mxu0
        %v2243 = vadd.f32 0.0, %v2242
        %v2244 = vpop.f32.mrb[0].mxu0
        %2245 = vmatprep.mubr.f32.mxu0 0.0
        %2246 = vmatmul.mubr.f32.gmra.mrb[0].mxu0 %v1913
        %v2247 = vpop.f32.mrb[0].mxu0
        %v2248 = vadd.f32 0.0, %v2247
        %v2249 = vpop.f32.mrb[0].mxu0
        %2250 = vmatprep.mubr.f32.mxu0 0.0
        %2251 = vmatmul.mubr.f32.gmra.mrb[0].mxu0 %v1914
        %v2252 = vpop.f32.mrb[0].mxu0
        %v2253 = vadd.f32 0.0, %v2252
        %v2254 = vpop.f32.mrb[0].mxu0
        %2255 = vmatprep.mubr.f32.mxu0 0.0
        %2256 = vmatmul.mubr.f32.gmra.mrb[0].mxu0 %v1915
        %v2257 = vpop.f32.mrb[0].mxu0
        %v2258 = vadd.f32 0.0, %v2257
        %v2259 = vpop.f32.mrb[0].mxu0
        %2260 = vmatprep.mubr.f32.mxu0 0.0
        %2261 = vmatmul.mubr.f32.gmra.mrb[0].mxu0 %v1916
        %v2262 = vpop.f32.mrb[0].mxu0
        %v2263 = vadd.f32 0.0, %v2262
        %v2264 = vpop.f32.mrb[0].mxu0
        %2265 = vmatprep.mubr.f32.mxu0 0.0
        %2266 = vmatmul.mubr.f32.gmra.mrb[0].mxu0 %v1917
        %v2267 = vpop.f32.mrb[0].mxu0
        %v2268 = vadd.f32 0.0, %v2267
        %v2269 = vpop.f32.mrb[0].mxu0
        %2270 = vmatprep.mubr.f32.mxu0 0.0
        %2271 = vmatmul.mubr.f32.gmra.mrb[0].mxu0 %v1918
        %v2272 = vpop.f32.mrb[0].mxu0
        %v2273 = vadd.f32 0.0, %v2272
        %v2274 = vpop.f32.mrb[0].mxu0
        %2275 = vmatprep.mubr.f32.mxu0 0.0
        %2276 = vmatmul.mubr.f32.gmra.mrb[0].mxu0 %v1919
        %v2277 = vpop.f32.mrb[0].mxu0
        %v2278 = vadd.f32 0.0, %v2277
        %v2279 = vpop.f32.mrb[0].mxu0
        %2280 = vmatprep.mubr.f32.mxu0 0.0
        %2281 = vmatmul.mubr.f32.gmra.mrb[0].mxu0 %v1920
        %v2282 = vpop.f32.mrb[0].mxu0
        %v2283 = vadd.f32 0.0, %v2282
        %v2284 = vpop.f32.mrb[0].mxu0
        %2285 = vmatprep.mubr.f32.mxu0 0.0
        %2286 = vmatmul.mubr.f32.gmra.mrb[0].mxu0 %v1921
        %v2287 = vpop.f32.mrb[0].mxu0
        %v2288 = vadd.f32 0.0, %v2287
        %v2289 = vpop.f32.mrb[0].mxu0
        %2290 = vmatprep.mubr.f32.mxu0 0.0
        %2291 = vmatmul.mubr.f32.gmra.mrb[0].mxu0 %v1922
        %v2292 = vpop.f32.mrb[0].mxu0
        %v2293 = vadd.f32 0.0, %v2292
        %v2294 = vpop.f32.mrb[0].mxu0
        %2295 = vmatprep.mubr.f32.mxu0 0.0
        %2296 = vmatmul.mubr.f32.gmra.mrb[0].mxu0 %v1923
        %v2297 = vpop.f32.mrb[0].mxu0
        %v2298 = vadd.f32 0.0, %v2297
        %v2299 = vpop.f32.mrb[0].mxu0
        %2300 = vmatprep.mubr.f32.mxu0 0.0
        %2301 = vmatmul.mubr.f32.gmra.mrb[0].mxu0 %v1924
        %v2302 = vpop.f32.mrb[0].mxu0
        %v2303 = vadd.f32 0.0, %v2302
        %v2304 = vpop.f32.mrb[0].mxu0
        %2305 = vmatprep.mubr.f32.mxu0 0.0
        %2306 = vmatmul.mubr.f32.gmra.mrb[0].mxu0 %v1925
        %v2307 = vpop.f32.mrb[0].mxu0
        %v2308 = vadd.f32 0.0, %v2307
        %v2309 = vpop.f32.mrb[0].mxu0
        %2310 = vdwg.mxu0
        %v2311 = vadd.f32 %v1367, %v1993
        %v2312 = vadd.f32 %v1372, %v1998
        %v2313 = vadd.f32 %v1377, %v2003
        %v2314 = vadd.f32 %v1382, %v2008
        %v2315 = vadd.f32 %v1387, %v2013
        %v2316 = vadd.f32 %v1392, %v2018
        %v2317 = vadd.f32 %v1397, %v2023
        %v2318 = vadd.f32 %v1402, %v2028
        %v2319 = vadd.f32 %v1407, %v2033
        %v2320 = vadd.f32 %v1412, %v2038
        %v2321 = vadd.f32 %v1417, %v2043
        %v2322 = vadd.f32 %v1422, %v2048
        %v2323 = vadd.f32 %v1427, %v2053
        %v2324 = vadd.f32 %v1432, %v2058
        %v2325 = vadd.f32 %v1437, %v2063
        %v2326 = vadd.f32 %v1442, %v2068
        %v2327 = vadd.f32 %v1447, %v2073
        %v2328 = vadd.f32 %v1452, %v2078
        %v2329 = vadd.f32 %v1457, %v2083
        %v2330 = vadd.f32 %v1462, %v2088
        %v2331 = vadd.f32 %v1467, %v2093
        %v2332 = vadd.f32 %v1472, %v2098
        %v2333 = vadd.f32 %v1477, %v2103
        %v2334 = vadd.f32 %v1482, %v2108
        %v2335 = vadd.f32 %v1487, %v2113
        %v2336 = vadd.f32 %v1492, %v2118
        %v2337 = vadd.f32 %v1497, %v2123
        %v2338 = vadd.f32 %v1502, %v2128
        %v2339 = vadd.f32 %v1507, %v2133
        %v2340 = vadd.f32 %v1512, %v2138
        %v2341 = vadd.f32 %v1517, %v2143
        %v2342 = vadd.f32 %v1522, %v2148
        %v2343 = vadd.f32 %v1527, %v2153
        %v2344 = vadd.f32 %v1532, %v2158
        %v2345 = vadd.f32 %v1537, %v2163
        %v2346 = vadd.f32 %v1542, %v2168
        %v2347 = vadd.f32 %v1547, %v2173
        %v2348 = vadd.f32 %v1552, %v2178
        %v2349 = vadd.f32 %v1557, %v2183
        %v2350 = vadd.f32 %v1562, %v2188
        %v2351 = vadd.f32 %v1567, %v2193
        %v2352 = vadd.f32 %v1572, %v2198
        %v2353 = vadd.f32 %v1577, %v2203
        %v2354 = vadd.f32 %v1582, %v2208
        %v2355 = vadd.f32 %v1587, %v2213
        %v2356 = vadd.f32 %v1592, %v2218
        %v2357 = vadd.f32 %v1597, %v2223
        %v2358 = vadd.f32 %v1602, %v2228
        %v2359 = vadd.f32 %v1607, %v2233
        %v2360 = vadd.f32 %v1612, %v2238
        %v2361 = vadd.f32 %v1617, %v2243
        %v2362 = vadd.f32 %v1622, %v2248
        %v2363 = vadd.f32 %v1627, %v2253
        %v2364 = vadd.f32 %v1632, %v2258
        %v2365 = vadd.f32 %v1637, %v2263
        %v2366 = vadd.f32 %v1642, %v2268
        %v2367 = vadd.f32 %v1647, %v2273
        %v2368 = vadd.f32 %v1652, %v2278
        %v2369 = vadd.f32 %v1657, %v2283
        %v2370 = vadd.f32 %v1662, %v2288
        %v2371 = vadd.f32 %v1667, %v2293
        %v2372 = vadd.f32 %v1672, %v2298
        %v2373 = vadd.f32 %v1677, %v2303
        %v2374 = vadd.f32 %v1682, %v2308
        %v2375 = vld [vmem:[#allocation13] sm:$0x1]
        %v2377 = vlaneseq
        %v2378 = vshrl.u32 %v2377, 7
        %v2379 = vsub.s32 0, %v2378
        %v2380 = vrot.slane %v2375, %v2379
        %v2382 = vadd.f32 %v2311, %v2380
        %v2383 = vadd.f32 %v2312, %v2380
        %v2384 = vadd.f32 %v2313, %v2380
        %v2385 = vadd.f32 %v2314, %v2380
        %v2386 = vadd.f32 %v2315, %v2380
        %v2387 = vadd.f32 %v2316, %v2380
        %v2388 = vadd.f32 %v2317, %v2380
        %v2389 = vadd.f32 %v2318, %v2380
        %v2390 = vadd.f32 %v2319, %v2380
        %v2391 = vadd.f32 %v2320, %v2380
        %v2392 = vadd.f32 %v2321, %v2380
        %v2393 = vadd.f32 %v2322, %v2380
        %v2394 = vadd.f32 %v2323, %v2380
        %v2395 = vadd.f32 %v2324, %v2380
        %v2396 = vadd.f32 %v2325, %v2380
        %v2397 = vadd.f32 %v2326, %v2380
        %v2398 = vadd.f32 %v2327, %v2380
        %v2399 = vadd.f32 %v2328, %v2380
        %v2400 = vadd.f32 %v2329, %v2380
        %v2401 = vadd.f32 %v2330, %v2380
        %v2402 = vadd.f32 %v2331, %v2380
        %v2403 = vadd.f32 %v2332, %v2380
        %v2404 = vadd.f32 %v2333, %v2380
        %v2405 = vadd.f32 %v2334, %v2380
        %v2406 = vadd.f32 %v2335, %v2380
        %v2407 = vadd.f32 %v2336, %v2380
        %v2408 = vadd.f32 %v2337, %v2380
        %v2409 = vadd.f32 %v2338, %v2380
        %v2410 = vadd.f32 %v2339, %v2380
        %v2411 = vadd.f32 %v2340, %v2380
        %v2412 = vadd.f32 %v2341, %v2380
        %v2413 = vadd.f32 %v2342, %v2380
        %v2414 = vadd.f32 %v2343, %v2380
        %v2415 = vadd.f32 %v2344, %v2380
        %v2416 = vadd.f32 %v2345, %v2380
        %v2417 = vadd.f32 %v2346, %v2380
        %v2418 = vadd.f32 %v2347, %v2380
        %v2419 = vadd.f32 %v2348, %v2380
        %v2420 = vadd.f32 %v2349, %v2380
        %v2421 = vadd.f32 %v2350, %v2380
        %v2422 = vadd.f32 %v2351, %v2380
        %v2423 = vadd.f32 %v2352, %v2380
        %v2424 = vadd.f32 %v2353, %v2380
        %v2425 = vadd.f32 %v2354, %v2380
        %v2426 = vadd.f32 %v2355, %v2380
        %v2427 = vadd.f32 %v2356, %v2380
        %v2428 = vadd.f32 %v2357, %v2380
        %v2429 = vadd.f32 %v2358, %v2380
        %v2430 = vadd.f32 %v2359, %v2380
        %v2431 = vadd.f32 %v2360, %v2380
        %v2432 = vadd.f32 %v2361, %v2380
        %v2433 = vadd.f32 %v2362, %v2380
        %v2434 = vadd.f32 %v2363, %v2380
        %v2435 = vadd.f32 %v2364, %v2380
        %v2436 = vadd.f32 %v2365, %v2380
        %v2437 = vadd.f32 %v2366, %v2380
        %v2438 = vadd.f32 %v2367, %v2380
        %v2439 = vadd.f32 %v2368, %v2380
        %v2440 = vadd.f32 %v2369, %v2380
        %v2441 = vadd.f32 %v2370, %v2380
        %v2442 = vadd.f32 %v2371, %v2380
        %v2443 = vadd.f32 %v2372, %v2380
        %v2444 = vadd.f32 %v2373, %v2380
        %v2445 = vadd.f32 %v2374, %v2380
        %v2446 = vmul.f32 %v2382, 0.70710677
        %v2447 = vmul.f32 %v2383, 0.70710677
        %v2448 = vmul.f32 %v2384, 0.70710677
        %v2449 = vmul.f32 %v2385, 0.70710677
        %v2450 = vmul.f32 %v2386, 0.70710677
        %v2451 = vmul.f32 %v2387, 0.70710677
        %v2452 = vmul.f32 %v2388, 0.70710677
        %v2453 = vmul.f32 %v2389, 0.70710677
        %v2454 = vmul.f32 %v2390, 0.70710677
        %v2455 = vmul.f32 %v2391, 0.70710677
        %v2456 = vmul.f32 %v2392, 0.70710677
        %v2457 = vmul.f32 %v2393, 0.70710677
        %v2458 = vmul.f32 %v2394, 0.70710677
        %v2459 = vmul.f32 %v2395, 0.70710677
        %v2460 = vmul.f32 %v2396, 0.70710677
        %v2461 = vmul.f32 %v2397, 0.70710677
        %v2462 = vmul.f32 %v2398, 0.70710677
        %v2463 = vmul.f32 %v2399, 0.70710677
        %v2464 = vmul.f32 %v2400, 0.70710677
        %v2465 = vmul.f32 %v2401, 0.70710677
        %v2466 = vmul.f32 %v2402, 0.70710677
        %v2467 = vmul.f32 %v2403, 0.70710677
        %v2468 = vmul.f32 %v2404, 0.70710677
        %v2469 = vmul.f32 %v2405, 0.70710677
        %v2470 = vmul.f32 %v2406, 0.70710677
        %v2471 = vmul.f32 %v2407, 0.70710677
        %v2472 = vmul.f32 %v2408, 0.70710677
        %v2473 = vmul.f32 %v2409, 0.70710677
        %v2474 = vmul.f32 %v2410, 0.70710677
        %v2475 = vmul.f32 %v2411, 0.70710677
        %v2476 = vmul.f32 %v2412, 0.70710677
        %v2477 = vmul.f32 %v2413, 0.70710677
        %v2478 = vmul.f32 %v2414, 0.70710677
        %v2479 = vmul.f32 %v2415, 0.70710677
        %v2480 = vmul.f32 %v2416, 0.70710677
        %v2481 = vmul.f32 %v2417, 0.70710677
        %v2482 = vmul.f32 %v2418, 0.70710677
        %v2483 = vmul.f32 %v2419, 0.70710677
        %v2484 = vmul.f32 %v2420, 0.70710677
        %v2485 = vmul.f32 %v2421, 0.70710677
        %v2486 = vmul.f32 %v2422, 0.70710677
        %v2487 = vmul.f32 %v2423, 0.70710677
        %v2488 = vmul.f32 %v2424, 0.70710677
        %v2489 = vmul.f32 %v2425, 0.70710677
        %v2490 = vmul.f32 %v2426, 0.70710677
        %v2491 = vmul.f32 %v2427, 0.70710677
        %v2492 = vmul.f32 %v2428, 0.70710677
        %v2493 = vmul.f32 %v2429, 0.70710677
        %v2494 = vmul.f32 %v2430, 0.70710677
        %v2495 = vmul.f32 %v2431, 0.70710677
        %v2496 = vmul.f32 %v2432, 0.70710677
        %v2497 = vmul.f32 %v2433, 0.70710677
        %v2498 = vmul.f32 %v2434, 0.70710677
        %v2499 = vmul.f32 %v2435, 0.70710677
        %v2500 = vmul.f32 %v2436, 0.70710677
        %v2501 = vmul.f32 %v2437, 0.70710677
        %v2502 = vmul.f32 %v2438, 0.70710677
        %v2503 = vmul.f32 %v2439, 0.70710677
        %v2504 = vmul.f32 %v2440, 0.70710677
        %v2505 = vmul.f32 %v2441, 0.70710677
        %v2506 = vmul.f32 %v2442, 0.70710677
        %v2507 = vmul.f32 %v2443, 0.70710677
        %v2508 = vmul.f32 %v2444, 0.70710677
        %v2509 = vmul.f32 %v2445, 0.70710677
        %v2510 = vand.u32 2147483647, %v2446
        %v2511 = vand.u32 2147483647, %v2447
        %v2512 = vand.u32 2147483647, %v2448
        %v2513 = vand.u32 2147483647, %v2449
        %v2514 = vand.u32 2147483647, %v2450
        %v2515 = vand.u32 2147483647, %v2451
        %v2516 = vand.u32 2147483647, %v2452
        %v2517 = vand.u32 2147483647, %v2453
        %v2518 = vand.u32 2147483647, %v2454
        %v2519 = vand.u32 2147483647, %v2455
        %v2520 = vand.u32 2147483647, %v2456
        %v2521 = vand.u32 2147483647, %v2457
        %v2522 = vand.u32 2147483647, %v2458
        %v2523 = vand.u32 2147483647, %v2459
        %v2524 = vand.u32 2147483647, %v2460
        %v2525 = vand.u32 2147483647, %v2461
        %v2526 = vand.u32 2147483647, %v2462
        %v2527 = vand.u32 2147483647, %v2463
        %v2528 = vand.u32 2147483647, %v2464
        %v2529 = vand.u32 2147483647, %v2465
        %v2530 = vand.u32 2147483647, %v2466
        %v2531 = vand.u32 2147483647, %v2467
        %v2532 = vand.u32 2147483647, %v2468
        %v2533 = vand.u32 2147483647, %v2469
        %v2534 = vand.u32 2147483647, %v2470
        %v2535 = vand.u32 2147483647, %v2471
        %v2536 = vand.u32 2147483647, %v2472
        %v2537 = vand.u32 2147483647, %v2473
        %v2538 = vand.u32 2147483647, %v2474
        %v2539 = vand.u32 2147483647, %v2475
        %v2540 = vand.u32 2147483647, %v2476
        %v2541 = vand.u32 2147483647, %v2477
        %v2542 = vand.u32 2147483647, %v2478
        %v2543 = vand.u32 2147483647, %v2479
        %v2544 = vand.u32 2147483647, %v2480
        %v2545 = vand.u32 2147483647, %v2481
        %v2546 = vand.u32 2147483647, %v2482
        %v2547 = vand.u32 2147483647, %v2483
        %v2548 = vand.u32 2147483647, %v2484
        %v2549 = vand.u32 2147483647, %v2485
        %v2550 = vand.u32 2147483647, %v2486
        %v2551 = vand.u32 2147483647, %v2487
        %v2552 = vand.u32 2147483647, %v2488
        %v2553 = vand.u32 2147483647, %v2489
        %v2554 = vand.u32 2147483647, %v2490
        %v2555 = vand.u32 2147483647, %v2491
        %v2556 = vand.u32 2147483647, %v2492
        %v2557 = vand.u32 2147483647, %v2493
        %v2558 = vand.u32 2147483647, %v2494
        %v2559 = vand.u32 2147483647, %v2495
        %v2560 = vand.u32 2147483647, %v2496
        %v2561 = vand.u32 2147483647, %v2497
        %v2562 = vand.u32 2147483647, %v2498
        %v2563 = vand.u32 2147483647, %v2499
        %v2564 = vand.u32 2147483647, %v2500
        %v2565 = vand.u32 2147483647, %v2501
        %v2566 = vand.u32 2147483647, %v2502
        %v2567 = vand.u32 2147483647, %v2503
        %v2568 = vand.u32 2147483647, %v2504
        %v2569 = vand.u32 2147483647, %v2505
        %v2570 = vand.u32 2147483647, %v2506
        %v2571 = vand.u32 2147483647, %v2507
        %v2572 = vand.u32 2147483647, %v2508
        %v2573 = vand.u32 2147483647, %v2509
        %v2574 = vsub.f32 0.0, %v2510
        %v2575 = vsub.f32 0.0, %v2511
        %v2576 = vsub.f32 0.0, %v2512
        %v2577 = vsub.f32 0.0, %v2513
        %v2578 = vsub.f32 0.0, %v2514
        %v2579 = vsub.f32 0.0, %v2515
        %v2580 = vsub.f32 0.0, %v2516
        %v2581 = vsub.f32 0.0, %v2517
        %v2582 = vsub.f32 0.0, %v2518
        %v2583 = vsub.f32 0.0, %v2519
        %v2584 = vsub.f32 0.0, %v2520
        %v2585 = vsub.f32 0.0, %v2521
        %v2586 = vsub.f32 0.0, %v2522
        %v2587 = vsub.f32 0.0, %v2523
        %v2588 = vsub.f32 0.0, %v2524
        %v2589 = vsub.f32 0.0, %v2525
        %v2590 = vsub.f32 0.0, %v2526
        %v2591 = vsub.f32 0.0, %v2527
        %v2592 = vsub.f32 0.0, %v2528
        %v2593 = vsub.f32 0.0, %v2529
        %v2594 = vsub.f32 0.0, %v2530
        %v2595 = vsub.f32 0.0, %v2531
        %v2596 = vsub.f32 0.0, %v2532
        %v2597 = vsub.f32 0.0, %v2533
        %v2598 = vsub.f32 0.0, %v2534
        %v2599 = vsub.f32 0.0, %v2535
        %v2600 = vsub.f32 0.0, %v2536
        %v2601 = vsub.f32 0.0, %v2537
        %v2602 = vsub.f32 0.0, %v2538
        %v2603 = vsub.f32 0.0, %v2539
        %v2604 = vsub.f32 0.0, %v2540
        %v2605 = vsub.f32 0.0, %v2541
        %v2606 = vsub.f32 0.0, %v2542
        %v2607 = vsub.f32 0.0, %v2543
        %v2608 = vsub.f32 0.0, %v2544
        %v2609 = vsub.f32 0.0, %v2545
        %v2610 = vsub.f32 0.0, %v2546
        %v2611 = vsub.f32 0.0, %v2547
        %v2612 = vsub.f32 0.0, %v2548
        %v2613 = vsub.f32 0.0, %v2549
        %v2614 = vsub.f32 0.0, %v2550
        %v2615 = vsub.f32 0.0, %v2551
        %v2616 = vsub.f32 0.0, %v2552
        %v2617 = vsub.f32 0.0, %v2553
        %v2618 = vsub.f32 0.0, %v2554
        %v2619 = vsub.f32 0.0, %v2555
        %v2620 = vsub.f32 0.0, %v2556
        %v2621 = vsub.f32 0.0, %v2557
        %v2622 = vsub.f32 0.0, %v2558
        %v2623 = vsub.f32 0.0, %v2559
        %v2624 = vsub.f32 0.0, %v2560
        %v2625 = vsub.f32 0.0, %v2561
        %v2626 = vsub.f32 0.0, %v2562
        %v2627 = vsub.f32 0.0, %v2563
        %v2628 = vsub.f32 0.0, %v2564
        %v2629 = vsub.f32 0.0, %v2565
        %v2630 = vsub.f32 0.0, %v2566
        %v2631 = vsub.f32 0.0, %v2567
        %v2632 = vsub.f32 0.0, %v2568
        %v2633 = vsub.f32 0.0, %v2569
        %v2634 = vsub.f32 0.0, %v2570
        %v2635 = vsub.f32 0.0, %v2571
        %v2636 = vsub.f32 0.0, %v2572
        %v2637 = vsub.f32 0.0, %v2573
        %v2638 = vmul.f32 %v2574, %v2510
        %v2639 = vmul.f32 %v2575, %v2511
        %v2640 = vmul.f32 %v2576, %v2512
        %v2641 = vmul.f32 %v2577, %v2513
        %v2642 = vmul.f32 %v2578, %v2514
        %v2643 = vmul.f32 %v2579, %v2515
        %v2644 = vmul.f32 %v2580, %v2516
        %v2645 = vmul.f32 %v2581, %v2517
        %v2646 = vmul.f32 %v2582, %v2518
        %v2647 = vmul.f32 %v2583, %v2519
        %v2648 = vmul.f32 %v2584, %v2520
        %v2649 = vmul.f32 %v2585, %v2521
        %v2650 = vmul.f32 %v2586, %v2522
        %v2651 = vmul.f32 %v2587, %v2523
        %v2652 = vmul.f32 %v2588, %v2524
        %v2653 = vmul.f32 %v2589, %v2525
        %v2654 = vmul.f32 %v2590, %v2526
        %v2655 = vmul.f32 %v2591, %v2527
        %v2656 = vmul.f32 %v2592, %v2528
        %v2657 = vmul.f32 %v2593, %v2529
        %v2658 = vmul.f32 %v2594, %v2530
        %v2659 = vmul.f32 %v2595, %v2531
        %v2660 = vmul.f32 %v2596, %v2532
        %v2661 = vmul.f32 %v2597, %v2533
        %v2662 = vmul.f32 %v2598, %v2534
        %v2663 = vmul.f32 %v2599, %v2535
        %v2664 = vmul.f32 %v2600, %v2536
        %v2665 = vmul.f32 %v2601, %v2537
        %v2666 = vmul.f32 %v2602, %v2538
        %v2667 = vmul.f32 %v2603, %v2539
        %v2668 = vmul.f32 %v2604, %v2540
        %v2669 = vmul.f32 %v2605, %v2541
        %v2670 = vmul.f32 %v2606, %v2542
        %v2671 = vmul.f32 %v2607, %v2543
        %v2672 = vmul.f32 %v2608, %v2544
        %v2673 = vmul.f32 %v2609, %v2545
        %v2674 = vmul.f32 %v2610, %v2546
        %v2675 = vmul.f32 %v2611, %v2547
        %v2676 = vmul.f32 %v2612, %v2548
        %v2677 = vmul.f32 %v2613, %v2549
        %v2678 = vmul.f32 %v2614, %v2550
        %v2679 = vmul.f32 %v2615, %v2551
        %v2680 = vmul.f32 %v2616, %v2552
        %v2681 = vmul.f32 %v2617, %v2553
        %v2682 = vmul.f32 %v2618, %v2554
        %v2683 = vmul.f32 %v2619, %v2555
        %v2684 = vmul.f32 %v2620, %v2556
        %v2685 = vmul.f32 %v2621, %v2557
        %v2686 = vmul.f32 %v2622, %v2558
        %v2687 = vmul.f32 %v2623, %v2559
        %v2688 = vmul.f32 %v2624, %v2560
        %v2689 = vmul.f32 %v2625, %v2561
        %v2690 = vmul.f32 %v2626, %v2562
        %v2691 = vmul.f32 %v2627, %v2563
        %v2692 = vmul.f32 %v2628, %v2564
        %v2693 = vmul.f32 %v2629, %v2565
        %v2694 = vmul.f32 %v2630, %v2566
        %v2695 = vmul.f32 %v2631, %v2567
        %v2696 = vmul.f32 %v2632, %v2568
        %v2697 = vmul.f32 %v2633, %v2569
        %v2698 = vmul.f32 %v2634, %v2570
        %v2699 = vmul.f32 %v2635, %v2571
        %v2700 = vmul.f32 %v2636, %v2572
        %v2701 = vmul.f32 %v2637, %v2573
        %v2702 = vmul.f32 %v2638, 1.442695
        %v2703 = vpow.pop %v2702
        %v2704 = vmul.f32 %v2639, 1.442695
        %v2705 = vpow.pop %v2704
        %v2706 = vmul.f32 %v2640, 1.442695
        %v2707 = vpow.pop %v2706
        %v2708 = vmul.f32 %v2641, 1.442695
        %v2709 = vpow.pop %v2708
        %v2710 = vmul.f32 %v2642, 1.442695
        %v2711 = vpow.pop %v2710
        %v2712 = vmul.f32 %v2643, 1.442695
        %v2713 = vpow.pop %v2712
        %v2714 = vmul.f32 %v2644, 1.442695
        %v2715 = vpow.pop %v2714
        %v2716 = vmul.f32 %v2645, 1.442695
        %v2717 = vpow.pop %v2716
        %v2718 = vmul.f32 %v2646, 1.442695
        %v2719 = vpow.pop %v2718
        %v2720 = vmul.f32 %v2647, 1.442695
        %v2721 = vpow.pop %v2720
        %v2722 = vmul.f32 %v2648, 1.442695
        %v2723 = vpow.pop %v2722
        %v2724 = vmul.f32 %v2649, 1.442695
        %v2725 = vpow.pop %v2724
        %v2726 = vmul.f32 %v2650, 1.442695
        %v2727 = vpow.pop %v2726
        %v2728 = vmul.f32 %v2651, 1.442695
        %v2729 = vpow.pop %v2728
        %v2730 = vmul.f32 %v2652, 1.442695
        %v2731 = vpow.pop %v2730
        %v2732 = vmul.f32 %v2653, 1.442695
        %v2733 = vpow.pop %v2732
        %v2734 = vmul.f32 %v2654, 1.442695
        %v2735 = vpow.pop %v2734
        %v2736 = vmul.f32 %v2655, 1.442695
        %v2737 = vpow.pop %v2736
        %v2738 = vmul.f32 %v2656, 1.442695
        %v2739 = vpow.pop %v2738
        %v2740 = vmul.f32 %v2657, 1.442695
        %v2741 = vpow.pop %v2740
        %v2742 = vmul.f32 %v2658, 1.442695
        %v2743 = vpow.pop %v2742
        %v2744 = vmul.f32 %v2659, 1.442695
        %v2745 = vpow.pop %v2744
        %v2746 = vmul.f32 %v2660, 1.442695
        %v2747 = vpow.pop %v2746
        %v2748 = vmul.f32 %v2661, 1.442695
        %v2749 = vpow.pop %v2748
        %v2750 = vmul.f32 %v2662, 1.442695
        %v2751 = vpow.pop %v2750
        %v2752 = vmul.f32 %v2663, 1.442695
        %v2753 = vpow.pop %v2752
        %v2754 = vmul.f32 %v2664, 1.442695
        %v2755 = vpow.pop %v2754
        %v2756 = vmul.f32 %v2665, 1.442695
        %v2757 = vpow.pop %v2756
        %v2758 = vmul.f32 %v2666, 1.442695
        %v2759 = vpow.pop %v2758
        %v2760 = vmul.f32 %v2667, 1.442695
        %v2761 = vpow.pop %v2760
        %v2762 = vmul.f32 %v2668, 1.442695
        %v2763 = vpow.pop %v2762
        %v2764 = vmul.f32 %v2669, 1.442695
        %v2765 = vpow.pop %v2764
        %v2766 = vmul.f32 %v2670, 1.442695
        %v2767 = vpow.pop %v2766
        %v2768 = vmul.f32 %v2671, 1.442695
        %v2769 = vpow.pop %v2768
        %v2770 = vmul.f32 %v2672, 1.442695
        %v2771 = vpow.pop %v2770
        %v2772 = vmul.f32 %v2673, 1.442695
        %v2773 = vpow.pop %v2772
        %v2774 = vmul.f32 %v2674, 1.442695
        %v2775 = vpow.pop %v2774
        %v2776 = vmul.f32 %v2675, 1.442695
        %v2777 = vpow.pop %v2776
        %v2778 = vmul.f32 %v2676, 1.442695
        %v2779 = vpow.pop %v2778
        %v2780 = vmul.f32 %v2677, 1.442695
        %v2781 = vpow.pop %v2780
        %v2782 = vmul.f32 %v2678, 1.442695
        %v2783 = vpow.pop %v2782
        %v2784 = vmul.f32 %v2679, 1.442695
        %v2785 = vpow.pop %v2784
        %v2786 = vmul.f32 %v2680, 1.442695
        %v2787 = vpow.pop %v2786
        %v2788 = vmul.f32 %v2681, 1.442695
        %v2789 = vpow.pop %v2788
        %v2790 = vmul.f32 %v2682, 1.442695
        %v2791 = vpow.pop %v2790
        %v2792 = vmul.f32 %v2683, 1.442695
        %v2793 = vpow.pop %v2792
        %v2794 = vmul.f32 %v2684, 1.442695
        %v2795 = vpow.pop %v2794
        %v2796 = vmul.f32 %v2685, 1.442695
        %v2797 = vpow.pop %v2796
        %v2798 = vmul.f32 %v2686, 1.442695
        %v2799 = vpow.pop %v2798
        %v2800 = vmul.f32 %v2687, 1.442695
        %v2801 = vpow.pop %v2800
        %v2802 = vmul.f32 %v2688, 1.442695
        %v2803 = vpow.pop %v2802
        %v2804 = vmul.f32 %v2689, 1.442695
        %v2805 = vpow.pop %v2804
        %v2806 = vmul.f32 %v2690, 1.442695
        %v2807 = vpow.pop %v2806
        %v2808 = vmul.f32 %v2691, 1.442695
        %v2809 = vpow.pop %v2808
        %v2810 = vmul.f32 %v2692, 1.442695
        %v2811 = vpow.pop %v2810
        %v2812 = vmul.f32 %v2693, 1.442695
        %v2813 = vpow.pop %v2812
        %v2814 = vmul.f32 %v2694, 1.442695
        %v2815 = vpow.pop %v2814
        %v2816 = vmul.f32 %v2695, 1.442695
        %v2817 = vpow.pop %v2816
        %v2818 = vmul.f32 %v2696, 1.442695
        %v2819 = vpow.pop %v2818
        %v2820 = vmul.f32 %v2697, 1.442695
        %v2821 = vpow.pop %v2820
        %v2822 = vmul.f32 %v2698, 1.442695
        %v2823 = vpow.pop %v2822
        %v2824 = vmul.f32 %v2699, 1.442695
        %v2825 = vpow.pop %v2824
        %v2826 = vmul.f32 %v2700, 1.442695
        %v2827 = vpow.pop %v2826
        %v2828 = vmul.f32 %v2701, 1.442695
        %v2829 = vpow.pop %v2828
        %vm2830 = vcmp.ge.f32.partialorder %v2446, 0.0
        %vm2831 = vcmp.ge.f32.partialorder %v2447, 0.0
        %vm2832 = vcmp.ge.f32.partialorder %v2448, 0.0
        %vm2833 = vcmp.ge.f32.partialorder %v2449, 0.0
        %vm2834 = vcmp.ge.f32.partialorder %v2450, 0.0
        %vm2835 = vcmp.ge.f32.partialorder %v2451, 0.0
        %vm2836 = vcmp.ge.f32.partialorder %v2452, 0.0
        %vm2837 = vcmp.ge.f32.partialorder %v2453, 0.0
        %vm2838 = vcmp.ge.f32.partialorder %v2454, 0.0
        %vm2839 = vcmp.ge.f32.partialorder %v2455, 0.0
        %vm2840 = vcmp.ge.f32.partialorder %v2456, 0.0
        %vm2841 = vcmp.ge.f32.partialorder %v2457, 0.0
        %vm2842 = vcmp.ge.f32.partialorder %v2458, 0.0
        %vm2843 = vcmp.ge.f32.partialorder %v2459, 0.0
        %vm2844 = vcmp.ge.f32.partialorder %v2460, 0.0
        %vm2845 = vcmp.ge.f32.partialorder %v2461, 0.0
        %vm2846 = vcmp.ge.f32.partialorder %v2462, 0.0
        %vm2847 = vcmp.ge.f32.partialorder %v2463, 0.0
        %vm2848 = vcmp.ge.f32.partialorder %v2464, 0.0
        %vm2849 = vcmp.ge.f32.partialorder %v2465, 0.0
        %vm2850 = vcmp.ge.f32.partialorder %v2466, 0.0
        %vm2851 = vcmp.ge.f32.partialorder %v2467, 0.0
        %vm2852 = vcmp.ge.f32.partialorder %v2468, 0.0
        %vm2853 = vcmp.ge.f32.partialorder %v2469, 0.0
        %vm2854 = vcmp.ge.f32.partialorder %v2470, 0.0
        %vm2855 = vcmp.ge.f32.partialorder %v2471, 0.0
        %vm2856 = vcmp.ge.f32.partialorder %v2472, 0.0
        %vm2857 = vcmp.ge.f32.partialorder %v2473, 0.0
        %vm2858 = vcmp.ge.f32.partialorder %v2474, 0.0
        %vm2859 = vcmp.ge.f32.partialorder %v2475, 0.0
        %vm2860 = vcmp.ge.f32.partialorder %v2476, 0.0
        %vm2861 = vcmp.ge.f32.partialorder %v2477, 0.0
        %vm2862 = vcmp.ge.f32.partialorder %v2478, 0.0
        %vm2863 = vcmp.ge.f32.partialorder %v2479, 0.0
        %vm2864 = vcmp.ge.f32.partialorder %v2480, 0.0
        %vm2865 = vcmp.ge.f32.partialorder %v2481, 0.0
        %vm2866 = vcmp.ge.f32.partialorder %v2482, 0.0
        %vm2867 = vcmp.ge.f32.partialorder %v2483, 0.0
        %vm2868 = vcmp.ge.f32.partialorder %v2484, 0.0
        %vm2869 = vcmp.ge.f32.partialorder %v2485, 0.0
        %vm2870 = vcmp.ge.f32.partialorder %v2486, 0.0
        %vm2871 = vcmp.ge.f32.partialorder %v2487, 0.0
        %vm2872 = vcmp.ge.f32.partialorder %v2488, 0.0
        %vm2873 = vcmp.ge.f32.partialorder %v2489, 0.0
        %vm2874 = vcmp.ge.f32.partialorder %v2490, 0.0
        %vm2875 = vcmp.ge.f32.partialorder %v2491, 0.0
        %vm2876 = vcmp.ge.f32.partialorder %v2492, 0.0
        %vm2877 = vcmp.ge.f32.partialorder %v2493, 0.0
        %vm2878 = vcmp.ge.f32.partialorder %v2494, 0.0
        %vm2879 = vcmp.ge.f32.partialorder %v2495, 0.0
        %vm2880 = vcmp.ge.f32.partialorder %v2496, 0.0
        %vm2881 = vcmp.ge.f32.partialorder %v2497, 0.0
        %vm2882 = vcmp.ge.f32.partialorder %v2498, 0.0
        %vm2883 = vcmp.ge.f32.partialorder %v2499, 0.0
        %vm2884 = vcmp.ge.f32.partialorder %v2500, 0.0
        %vm2885 = vcmp.ge.f32.partialorder %v2501, 0.0
        %vm2886 = vcmp.ge.f32.partialorder %v2502, 0.0
        %vm2887 = vcmp.ge.f32.partialorder %v2503, 0.0
        %vm2888 = vcmp.ge.f32.partialorder %v2504, 0.0
        %vm2889 = vcmp.ge.f32.partialorder %v2505, 0.0
        %vm2890 = vcmp.ge.f32.partialorder %v2506, 0.0
        %vm2891 = vcmp.ge.f32.partialorder %v2507, 0.0
        %vm2892 = vcmp.ge.f32.partialorder %v2508, 0.0
        %vm2893 = vcmp.ge.f32.partialorder %v2509, 0.0
        %v2894 = vsel %vm2830, 1.0, -1.0
        %v2895 = vsel %vm2831, 1.0, -1.0
        %v2896 = vsel %vm2832, 1.0, -1.0
        %v2897 = vsel %vm2833, 1.0, -1.0
        %v2898 = vsel %vm2834, 1.0, -1.0
        %v2899 = vsel %vm2835, 1.0, -1.0
        %v2900 = vsel %vm2836, 1.0, -1.0
        %v2901 = vsel %vm2837, 1.0, -1.0
        %v2902 = vsel %vm2838, 1.0, -1.0
        %v2903 = vsel %vm2839, 1.0, -1.0
        %v2904 = vsel %vm2840, 1.0, -1.0
        %v2905 = vsel %vm2841, 1.0, -1.0
        %v2906 = vsel %vm2842, 1.0, -1.0
        %v2907 = vsel %vm2843, 1.0, -1.0
        %v2908 = vsel %vm2844, 1.0, -1.0
        %v2909 = vsel %vm2845, 1.0, -1.0
        %v2910 = vsel %vm2846, 1.0, -1.0
        %v2911 = vsel %vm2847, 1.0, -1.0
        %v2912 = vsel %vm2848, 1.0, -1.0
        %v2913 = vsel %vm2849, 1.0, -1.0
        %v2914 = vsel %vm2850, 1.0, -1.0
        %v2915 = vsel %vm2851, 1.0, -1.0
        %v2916 = vsel %vm2852, 1.0, -1.0
        %v2917 = vsel %vm2853, 1.0, -1.0
        %v2918 = vsel %vm2854, 1.0, -1.0
        %v2919 = vsel %vm2855, 1.0, -1.0
        %v2920 = vsel %vm2856, 1.0, -1.0
        %v2921 = vsel %vm2857, 1.0, -1.0
        %v2922 = vsel %vm2858, 1.0, -1.0
        %v2923 = vsel %vm2859, 1.0, -1.0
        %v2924 = vsel %vm2860, 1.0, -1.0
        %v2925 = vsel %vm2861, 1.0, -1.0
        %v2926 = vsel %vm2862, 1.0, -1.0
        %v2927 = vsel %vm2863, 1.0, -1.0
        %v2928 = vsel %vm2864, 1.0, -1.0
        %v2929 = vsel %vm2865, 1.0, -1.0
        %v2930 = vsel %vm2866, 1.0, -1.0
        %v2931 = vsel %vm2867, 1.0, -1.0
        %v2932 = vsel %vm2868, 1.0, -1.0
        %v2933 = vsel %vm2869, 1.0, -1.0
        %v2934 = vsel %vm2870, 1.0, -1.0
        %v2935 = vsel %vm2871, 1.0, -1.0
        %v2936 = vsel %vm2872, 1.0, -1.0
        %v2937 = vsel %vm2873, 1.0, -1.0
        %v2938 = vsel %vm2874, 1.0, -1.0
        %v2939 = vsel %vm2875, 1.0, -1.0
        %v2940 = vsel %vm2876, 1.0, -1.0
        %v2941 = vsel %vm2877, 1.0, -1.0
        %v2942 = vsel %vm2878, 1.0, -1.0
        %v2943 = vsel %vm2879, 1.0, -1.0
        %v2944 = vsel %vm2880, 1.0, -1.0
        %v2945 = vsel %vm2881, 1.0, -1.0
        %v2946 = vsel %vm2882, 1.0, -1.0
        %v2947 = vsel %vm2883, 1.0, -1.0
        %v2948 = vsel %vm2884, 1.0, -1.0
        %v2949 = vsel %vm2885, 1.0, -1.0
        %v2950 = vsel %vm2886, 1.0, -1.0
        %v2951 = vsel %vm2887, 1.0, -1.0
        %v2952 = vsel %vm2888, 1.0, -1.0
        %v2953 = vsel %vm2889, 1.0, -1.0
        %v2954 = vsel %vm2890, 1.0, -1.0
        %v2955 = vsel %vm2891, 1.0, -1.0
        %v2956 = vsel %vm2892, 1.0, -1.0
        %v2957 = vsel %vm2893, 1.0, -1.0
        %v2958 = vmul.f32 %v2510, 0.3275911
        %v2959 = vmul.f32 %v2511, 0.3275911
        %v2960 = vmul.f32 %v2512, 0.3275911
        %v2961 = vmul.f32 %v2513, 0.3275911
        %v2962 = vmul.f32 %v2514, 0.3275911
        %v2963 = vmul.f32 %v2515, 0.3275911
        %v2964 = vmul.f32 %v2516, 0.3275911
        %v2965 = vmul.f32 %v2517, 0.3275911
        %v2966 = vmul.f32 %v2518, 0.3275911
        %v2967 = vmul.f32 %v2519, 0.3275911
        %v2968 = vmul.f32 %v2520, 0.3275911
        %v2969 = vmul.f32 %v2521, 0.3275911
        %v2970 = vmul.f32 %v2522, 0.3275911
        %v2971 = vmul.f32 %v2523, 0.3275911
        %v2972 = vmul.f32 %v2524, 0.3275911
        %v2973 = vmul.f32 %v2525, 0.3275911
        %v2974 = vmul.f32 %v2526, 0.3275911
        %v2975 = vmul.f32 %v2527, 0.3275911
        %v2976 = vmul.f32 %v2528, 0.3275911
        %v2977 = vmul.f32 %v2529, 0.3275911
        %v2978 = vmul.f32 %v2530, 0.3275911
        %v2979 = vmul.f32 %v2531, 0.3275911
        %v2980 = vmul.f32 %v2532, 0.3275911
        %v2981 = vmul.f32 %v2533, 0.3275911
        %v2982 = vmul.f32 %v2534, 0.3275911
        %v2983 = vmul.f32 %v2535, 0.3275911
        %v2984 = vmul.f32 %v2536, 0.3275911
        %v2985 = vmul.f32 %v2537, 0.3275911
        %v2986 = vmul.f32 %v2538, 0.3275911
        %v2987 = vmul.f32 %v2539, 0.3275911
        %v2988 = vmul.f32 %v2540, 0.3275911
        %v2989 = vmul.f32 %v2541, 0.3275911
        %v2990 = vmul.f32 %v2542, 0.3275911
        %v2991 = vmul.f32 %v2543, 0.3275911
        %v2992 = vmul.f32 %v2544, 0.3275911
        %v2993 = vmul.f32 %v2545, 0.3275911
        %v2994 = vmul.f32 %v2546, 0.3275911
        %v2995 = vmul.f32 %v2547, 0.3275911
        %v2996 = vmul.f32 %v2548, 0.3275911
        %v2997 = vmul.f32 %v2549, 0.3275911
        %v2998 = vmul.f32 %v2550, 0.3275911
        %v2999 = vmul.f32 %v2551, 0.3275911
        %v3000 = vmul.f32 %v2552, 0.3275911
        %v3001 = vmul.f32 %v2553, 0.3275911
        %v3002 = vmul.f32 %v2554, 0.3275911
        %v3003 = vmul.f32 %v2555, 0.3275911
        %v3004 = vmul.f32 %v2556, 0.3275911
        %v3005 = vmul.f32 %v2557, 0.3275911
        %v3006 = vmul.f32 %v2558, 0.3275911
        %v3007 = vmul.f32 %v2559, 0.3275911
        %v3008 = vmul.f32 %v2560, 0.3275911
        %v3009 = vmul.f32 %v2561, 0.3275911
        %v3010 = vmul.f32 %v2562, 0.3275911
        %v3011 = vmul.f32 %v2563, 0.3275911
        %v3012 = vmul.f32 %v2564, 0.3275911
        %v3013 = vmul.f32 %v2565, 0.3275911
        %v3014 = vmul.f32 %v2566, 0.3275911
        %v3015 = vmul.f32 %v2567, 0.3275911
        %v3016 = vmul.f32 %v2568, 0.3275911
        %v3017 = vmul.f32 %v2569, 0.3275911
        %v3018 = vmul.f32 %v2570, 0.3275911
        %v3019 = vmul.f32 %v2571, 0.3275911
        %v3020 = vmul.f32 %v2572, 0.3275911
        %v3021 = vmul.f32 %v2573, 0.3275911
        %v3022 = vadd.f32 %v2958, 1.0
        %v3023 = vadd.f32 %v2959, 1.0
        %v3024 = vadd.f32 %v2960, 1.0
        %v3025 = vadd.f32 %v2961, 1.0
        %v3026 = vadd.f32 %v2962, 1.0
        %v3027 = vadd.f32 %v2963, 1.0
        %v3028 = vadd.f32 %v2964, 1.0
        %v3029 = vadd.f32 %v2965, 1.0
        %v3030 = vadd.f32 %v2966, 1.0
        %v3031 = vadd.f32 %v2967, 1.0
        %v3032 = vadd.f32 %v2968, 1.0
        %v3033 = vadd.f32 %v2969, 1.0
        %v3034 = vadd.f32 %v2970, 1.0
        %v3035 = vadd.f32 %v2971, 1.0
        %v3036 = vadd.f32 %v2972, 1.0
        %v3037 = vadd.f32 %v2973, 1.0
        %v3038 = vadd.f32 %v2974, 1.0
        %v3039 = vadd.f32 %v2975, 1.0
        %v3040 = vadd.f32 %v2976, 1.0
        %v3041 = vadd.f32 %v2977, 1.0
        %v3042 = vadd.f32 %v2978, 1.0
        %v3043 = vadd.f32 %v2979, 1.0
        %v3044 = vadd.f32 %v2980, 1.0
        %v3045 = vadd.f32 %v2981, 1.0
        %v3046 = vadd.f32 %v2982, 1.0
        %v3047 = vadd.f32 %v2983, 1.0
        %v3048 = vadd.f32 %v2984, 1.0
        %v3049 = vadd.f32 %v2985, 1.0
        %v3050 = vadd.f32 %v2986, 1.0
        %v3051 = vadd.f32 %v2987, 1.0
        %v3052 = vadd.f32 %v2988, 1.0
        %v3053 = vadd.f32 %v2989, 1.0
        %v3054 = vadd.f32 %v2990, 1.0
        %v3055 = vadd.f32 %v2991, 1.0
        %v3056 = vadd.f32 %v2992, 1.0
        %v3057 = vadd.f32 %v2993, 1.0
        %v3058 = vadd.f32 %v2994, 1.0
        %v3059 = vadd.f32 %v2995, 1.0
        %v3060 = vadd.f32 %v2996, 1.0
        %v3061 = vadd.f32 %v2997, 1.0
        %v3062 = vadd.f32 %v2998, 1.0
        %v3063 = vadd.f32 %v2999, 1.0
        %v3064 = vadd.f32 %v3000, 1.0
        %v3065 = vadd.f32 %v3001, 1.0
        %v3066 = vadd.f32 %v3002, 1.0
        %v3067 = vadd.f32 %v3003, 1.0
        %v3068 = vadd.f32 %v3004, 1.0
        %v3069 = vadd.f32 %v3005, 1.0
        %v3070 = vadd.f32 %v3006, 1.0
        %v3071 = vadd.f32 %v3007, 1.0
        %v3072 = vadd.f32 %v3008, 1.0
        %v3073 = vadd.f32 %v3009, 1.0
        %v3074 = vadd.f32 %v3010, 1.0
        %v3075 = vadd.f32 %v3011, 1.0
        %v3076 = vadd.f32 %v3012, 1.0
        %v3077 = vadd.f32 %v3013, 1.0
        %v3078 = vadd.f32 %v3014, 1.0
        %v3079 = vadd.f32 %v3015, 1.0
        %v3080 = vadd.f32 %v3016, 1.0
        %v3081 = vadd.f32 %v3017, 1.0
        %v3082 = vadd.f32 %v3018, 1.0
        %v3083 = vadd.f32 %v3019, 1.0
        %v3084 = vadd.f32 %v3020, 1.0
        %v3085 = vadd.f32 %v3021, 1.0
        %v3086 = vrcp.pop %v3022
        %v3087 = vrcp.pop %v3023
        %v3088 = vrcp.pop %v3024
        %v3089 = vrcp.pop %v3025
        %v3090 = vrcp.pop %v3026
        %v3091 = vrcp.pop %v3027
        %v3092 = vrcp.pop %v3028
        %v3093 = vrcp.pop %v3029
        %v3094 = vrcp.pop %v3030
        %v3095 = vrcp.pop %v3031
        %v3096 = vrcp.pop %v3032
        %v3097 = vrcp.pop %v3033
        %v3098 = vrcp.pop %v3034
        %v3099 = vrcp.pop %v3035
        %v3100 = vrcp.pop %v3036
        %v3101 = vrcp.pop %v3037
        %v3102 = vrcp.pop %v3038
        %v3103 = vrcp.pop %v3039
        %v3104 = vrcp.pop %v3040
        %v3105 = vrcp.pop %v3041
        %v3106 = vrcp.pop %v3042
        %v3107 = vrcp.pop %v3043
        %v3108 = vrcp.pop %v3044
        %v3109 = vrcp.pop %v3045
        %v3110 = vrcp.pop %v3046
        %v3111 = vrcp.pop %v3047
        %v3112 = vrcp.pop %v3048
        %v3113 = vrcp.pop %v3049
        %v3114 = vrcp.pop %v3050
        %v3115 = vrcp.pop %v3051
        %v3116 = vrcp.pop %v3052
        %v3117 = vrcp.pop %v3053
        %v3118 = vrcp.pop %v3054
        %v3119 = vrcp.pop %v3055
        %v3120 = vrcp.pop %v3056
        %v3121 = vrcp.pop %v3057
        %v3122 = vrcp.pop %v3058
        %v3123 = vrcp.pop %v3059
        %v3124 = vrcp.pop %v3060
        %v3125 = vrcp.pop %v3061
        %v3126 = vrcp.pop %v3062
        %v3127 = vrcp.pop %v3063
        %v3128 = vrcp.pop %v3064
        %v3129 = vrcp.pop %v3065
        %v3130 = vrcp.pop %v3066
        %v3131 = vrcp.pop %v3067
        %v3132 = vrcp.pop %v3068
        %v3133 = vrcp.pop %v3069
        %v3134 = vrcp.pop %v3070
        %v3135 = vrcp.pop %v3071
        %v3136 = vrcp.pop %v3072
        %v3137 = vrcp.pop %v3073
        %v3138 = vrcp.pop %v3074
        %v3139 = vrcp.pop %v3075
        %v3140 = vrcp.pop %v3076
        %v3141 = vrcp.pop %v3077
        %v3142 = vrcp.pop %v3078
        %v3143 = vrcp.pop %v3079
        %v3144 = vrcp.pop %v3080
        %v3145 = vrcp.pop %v3081
        %v3146 = vrcp.pop %v3082
        %v3147 = vrcp.pop %v3083
        %v3148 = vrcp.pop %v3084
        %v3149 = vrcp.pop %v3085
        %v3150 = vmul.f32 %v3022, %v3086
        %v3151 = vmul.f32 %v3023, %v3087
        %v3152 = vmul.f32 %v3024, %v3088
        %v3153 = vmul.f32 %v3025, %v3089
        %v3154 = vmul.f32 %v3026, %v3090
        %v3155 = vmul.f32 %v3027, %v3091
        %v3156 = vmul.f32 %v3028, %v3092
        %v3157 = vmul.f32 %v3029, %v3093
        %v3158 = vmul.f32 %v3030, %v3094
        %v3159 = vmul.f32 %v3031, %v3095
        %v3160 = vmul.f32 %v3032, %v3096
        %v3161 = vmul.f32 %v3033, %v3097
        %v3162 = vmul.f32 %v3034, %v3098
        %v3163 = vmul.f32 %v3035, %v3099
        %v3164 = vmul.f32 %v3036, %v3100
        %v3165 = vmul.f32 %v3037, %v3101
        %v3166 = vmul.f32 %v3038, %v3102
        %v3167 = vmul.f32 %v3039, %v3103
        %v3168 = vmul.f32 %v3040, %v3104
        %v3169 = vmul.f32 %v3041, %v3105
        %v3170 = vmul.f32 %v3042, %v3106
        %v3171 = vmul.f32 %v3043, %v3107
        %v3172 = vmul.f32 %v3044, %v3108
        %v3173 = vmul.f32 %v3045, %v3109
        %v3174 = vmul.f32 %v3046, %v3110
        %v3175 = vmul.f32 %v3047, %v3111
        %v3176 = vmul.f32 %v3048, %v3112
        %v3177 = vmul.f32 %v3049, %v3113
        %v3178 = vmul.f32 %v3050, %v3114
        %v3179 = vmul.f32 %v3051, %v3115
        %v3180 = vmul.f32 %v3052, %v3116
        %v3181 = vmul.f32 %v3053, %v3117
        %v3182 = vmul.f32 %v3054, %v3118
        %v3183 = vmul.f32 %v3055, %v3119
        %v3184 = vmul.f32 %v3056, %v3120
        %v3185 = vmul.f32 %v3057, %v3121
        %v3186 = vmul.f32 %v3058, %v3122
        %v3187 = vmul.f32 %v3059, %v3123
        %v3188 = vmul.f32 %v3060, %v3124
        %v3189 = vmul.f32 %v3061, %v3125
        %v3190 = vmul.f32 %v3062, %v3126
        %v3191 = vmul.f32 %v3063, %v3127
        %v3192 = vmul.f32 %v3064, %v3128
        %v3193 = vmul.f32 %v3065, %v3129
        %v3194 = vmul.f32 %v3066, %v3130
        %v3195 = vmul.f32 %v3067, %v3131
        %v3196 = vmul.f32 %v3068, %v3132
        %v3197 = vmul.f32 %v3069, %v3133
        %v3198 = vmul.f32 %v3070, %v3134
        %v3199 = vmul.f32 %v3071, %v3135
        %v3200 = vmul.f32 %v3072, %v3136
        %v3201 = vmul.f32 %v3073, %v3137
        %v3202 = vmul.f32 %v3074, %v3138
        %v3203 = vmul.f32 %v3075, %v3139
        %v3204 = vmul.f32 %v3076, %v3140
        %v3205 = vmul.f32 %v3077, %v3141
        %v3206 = vmul.f32 %v3078, %v3142
        %v3207 = vmul.f32 %v3079, %v3143
        %v3208 = vmul.f32 %v3080, %v3144
        %v3209 = vmul.f32 %v3081, %v3145
        %v3210 = vmul.f32 %v3082, %v3146
        %v3211 = vmul.f32 %v3083, %v3147
        %v3212 = vmul.f32 %v3084, %v3148
        %v3213 = vmul.f32 %v3085, %v3149
        %v3214 = vsub.f32 2.0, %v3150
        %v3215 = vsub.f32 2.0, %v3151
        %v3216 = vsub.f32 2.0, %v3152
        %v3217 = vsub.f32 2.0, %v3153
        %v3218 = vsub.f32 2.0, %v3154
        %v3219 = vsub.f32 2.0, %v3155
        %v3220 = vsub.f32 2.0, %v3156
        %v3221 = vsub.f32 2.0, %v3157
        %v3222 = vsub.f32 2.0, %v3158
        %v3223 = vsub.f32 2.0, %v3159
        %v3224 = vsub.f32 2.0, %v3160
        %v3225 = vsub.f32 2.0, %v3161
        %v3226 = vsub.f32 2.0, %v3162
        %v3227 = vsub.f32 2.0, %v3163
        %v3228 = vsub.f32 2.0, %v3164
        %v3229 = vsub.f32 2.0, %v3165
        %v3230 = vsub.f32 2.0, %v3166
        %v3231 = vsub.f32 2.0, %v3167
        %v3232 = vsub.f32 2.0, %v3168
        %v3233 = vsub.f32 2.0, %v3169
        %v3234 = vsub.f32 2.0, %v3170
        %v3235 = vsub.f32 2.0, %v3171
        %v3236 = vsub.f32 2.0, %v3172
        %v3237 = vsub.f32 2.0, %v3173
        %v3238 = vsub.f32 2.0, %v3174
        %v3239 = vsub.f32 2.0, %v3175
        %v3240 = vsub.f32 2.0, %v3176
        %v3241 = vsub.f32 2.0, %v3177
        %v3242 = vsub.f32 2.0, %v3178
        %v3243 = vsub.f32 2.0, %v3179
        %v3244 = vsub.f32 2.0, %v3180
        %v3245 = vsub.f32 2.0, %v3181
        %v3246 = vsub.f32 2.0, %v3182
        %v3247 = vsub.f32 2.0, %v3183
        %v3248 = vsub.f32 2.0, %v3184
        %v3249 = vsub.f32 2.0, %v3185
        %v3250 = vsub.f32 2.0, %v3186
        %v3251 = vsub.f32 2.0, %v3187
        %v3252 = vsub.f32 2.0, %v3188
        %v3253 = vsub.f32 2.0, %v3189
        %v3254 = vsub.f32 2.0, %v3190
        %v3255 = vsub.f32 2.0, %v3191
        %v3256 = vsub.f32 2.0, %v3192
        %v3257 = vsub.f32 2.0, %v3193
        %v3258 = vsub.f32 2.0, %v3194
        %v3259 = vsub.f32 2.0, %v3195
        %v3260 = vsub.f32 2.0, %v3196
        %v3261 = vsub.f32 2.0, %v3197
        %v3262 = vsub.f32 2.0, %v3198
        %v3263 = vsub.f32 2.0, %v3199
        %v3264 = vsub.f32 2.0, %v3200
        %v3265 = vsub.f32 2.0, %v3201
        %v3266 = vsub.f32 2.0, %v3202
        %v3267 = vsub.f32 2.0, %v3203
        %v3268 = vsub.f32 2.0, %v3204
        %v3269 = vsub.f32 2.0, %v3205
        %v3270 = vsub.f32 2.0, %v3206
        %v3271 = vsub.f32 2.0, %v3207
        %v3272 = vsub.f32 2.0, %v3208
        %v3273 = vsub.f32 2.0, %v3209
        %v3274 = vsub.f32 2.0, %v3210
        %v3275 = vsub.f32 2.0, %v3211
        %v3276 = vsub.f32 2.0, %v3212
        %v3277 = vsub.f32 2.0, %v3213
        %v3278 = vmul.f32 %v3086, %v3214
        %v3279 = vmul.f32 %v3087, %v3215
        %v3280 = vmul.f32 %v3088, %v3216
        %v3281 = vmul.f32 %v3089, %v3217
        %v3282 = vmul.f32 %v3090, %v3218
        %v3283 = vmul.f32 %v3091, %v3219
        %v3284 = vmul.f32 %v3092, %v3220
        %v3285 = vmul.f32 %v3093, %v3221
        %v3286 = vmul.f32 %v3094, %v3222
        %v3287 = vmul.f32 %v3095, %v3223
        %v3288 = vmul.f32 %v3096, %v3224
        %v3289 = vmul.f32 %v3097, %v3225
        %v3290 = vmul.f32 %v3098, %v3226
        %v3291 = vmul.f32 %v3099, %v3227
        %v3292 = vmul.f32 %v3100, %v3228
        %v3293 = vmul.f32 %v3101, %v3229
        %v3294 = vmul.f32 %v3102, %v3230
        %v3295 = vmul.f32 %v3103, %v3231
        %v3296 = vmul.f32 %v3104, %v3232
        %v3297 = vmul.f32 %v3105, %v3233
        %v3298 = vmul.f32 %v3106, %v3234
        %v3299 = vmul.f32 %v3107, %v3235
        %v3300 = vmul.f32 %v3108, %v3236
        %v3301 = vmul.f32 %v3109, %v3237
        %v3302 = vmul.f32 %v3110, %v3238
        %v3303 = vmul.f32 %v3111, %v3239
        %v3304 = vmul.f32 %v3112, %v3240
        %v3305 = vmul.f32 %v3113, %v3241
        %v3306 = vmul.f32 %v3114, %v3242
        %v3307 = vmul.f32 %v3115, %v3243
        %v3308 = vmul.f32 %v3116, %v3244
        %v3309 = vmul.f32 %v3117, %v3245
        %v3310 = vmul.f32 %v3118, %v3246
        %v3311 = vmul.f32 %v3119, %v3247
        %v3312 = vmul.f32 %v3120, %v3248
        %v3313 = vmul.f32 %v3121, %v3249
        %v3314 = vmul.f32 %v3122, %v3250
        %v3315 = vmul.f32 %v3123, %v3251
        %v3316 = vmul.f32 %v3124, %v3252
        %v3317 = vmul.f32 %v3125, %v3253
        %v3318 = vmul.f32 %v3126, %v3254
        %v3319 = vmul.f32 %v3127, %v3255
        %v3320 = vmul.f32 %v3128, %v3256
        %v3321 = vmul.f32 %v3129, %v3257
        %v3322 = vmul.f32 %v3130, %v3258
        %v3323 = vmul.f32 %v3131, %v3259
        %v3324 = vmul.f32 %v3132, %v3260
        %v3325 = vmul.f32 %v3133, %v3261
        %v3326 = vmul.f32 %v3134, %v3262
        %v3327 = vmul.f32 %v3135, %v3263
        %v3328 = vmul.f32 %v3136, %v3264
        %v3329 = vmul.f32 %v3137, %v3265
        %v3330 = vmul.f32 %v3138, %v3266
        %v3331 = vmul.f32 %v3139, %v3267
        %v3332 = vmul.f32 %v3140, %v3268
        %v3333 = vmul.f32 %v3141, %v3269
        %v3334 = vmul.f32 %v3142, %v3270
        %v3335 = vmul.f32 %v3143, %v3271
        %v3336 = vmul.f32 %v3144, %v3272
        %v3337 = vmul.f32 %v3145, %v3273
        %v3338 = vmul.f32 %v3146, %v3274
        %v3339 = vmul.f32 %v3147, %v3275
        %v3340 = vmul.f32 %v3148, %v3276
        %v3341 = vmul.f32 %v3149, %v3277
        %v3342 = vmul.f32 %v3278, 1.0614054
        %v3343 = vmul.f32 %v3279, 1.0614054
        %v3344 = vmul.f32 %v3280, 1.0614054
        %v3345 = vmul.f32 %v3281, 1.0614054
        %v3346 = vmul.f32 %v3282, 1.0614054
        %v3347 = vmul.f32 %v3283, 1.0614054
        %v3348 = vmul.f32 %v3284, 1.0614054
        %v3349 = vmul.f32 %v3285, 1.0614054
        %v3350 = vmul.f32 %v3286, 1.0614054
        %v3351 = vmul.f32 %v3287, 1.0614054
        %v3352 = vmul.f32 %v3288, 1.0614054
        %v3353 = vmul.f32 %v3289, 1.0614054
        %v3354 = vmul.f32 %v3290, 1.0614054
        %v3355 = vmul.f32 %v3291, 1.0614054
        %v3356 = vmul.f32 %v3292, 1.0614054
        %v3357 = vmul.f32 %v3293, 1.0614054
        %v3358 = vmul.f32 %v3294, 1.0614054
        %v3359 = vmul.f32 %v3295, 1.0614054
        %v3360 = vmul.f32 %v3296, 1.0614054
        %v3361 = vmul.f32 %v3297, 1.0614054
        %v3362 = vmul.f32 %v3298, 1.0614054
        %v3363 = vmul.f32 %v3299, 1.0614054
        %v3364 = vmul.f32 %v3300, 1.0614054
        %v3365 = vmul.f32 %v3301, 1.0614054
        %v3366 = vmul.f32 %v3302, 1.0614054
        %v3367 = vmul.f32 %v3303, 1.0614054
        %v3368 = vmul.f32 %v3304, 1.0614054
        %v3369 = vmul.f32 %v3305, 1.0614054
        %v3370 = vmul.f32 %v3306, 1.0614054
        %v3371 = vmul.f32 %v3307, 1.0614054
        %v3372 = vmul.f32 %v3308, 1.0614054
        %v3373 = vmul.f32 %v3309, 1.0614054
        %v3374 = vmul.f32 %v3310, 1.0614054
        %v3375 = vmul.f32 %v3311, 1.0614054
        %v3376 = vmul.f32 %v3312, 1.0614054
        %v3377 = vmul.f32 %v3313, 1.0614054
        %v3378 = vmul.f32 %v3314, 1.0614054
        %v3379 = vmul.f32 %v3315, 1.0614054
        %v3380 = vmul.f32 %v3316, 1.0614054
        %v3381 = vmul.f32 %v3317, 1.0614054
        %v3382 = vmul.f32 %v3318, 1.0614054
        %v3383 = vmul.f32 %v3319, 1.0614054
        %v3384 = vmul.f32 %v3320, 1.0614054
        %v3385 = vmul.f32 %v3321, 1.0614054
        %v3386 = vmul.f32 %v3322, 1.0614054
        %v3387 = vmul.f32 %v3323, 1.0614054
        %v3388 = vmul.f32 %v3324, 1.0614054
        %v3389 = vmul.f32 %v3325, 1.0614054
        %v3390 = vmul.f32 %v3326, 1.0614054
        %v3391 = vmul.f32 %v3327, 1.0614054
        %v3392 = vmul.f32 %v3328, 1.0614054
        %v3393 = vmul.f32 %v3329, 1.0614054
        %v3394 = vmul.f32 %v3330, 1.0614054
        %v3395 = vmul.f32 %v3331, 1.0614054
        %v3396 = vmul.f32 %v3332, 1.0614054
        %v3397 = vmul.f32 %v3333, 1.0614054
        %v3398 = vmul.f32 %v3334, 1.0614054
        %v3399 = vmul.f32 %v3335, 1.0614054
        %v3400 = vmul.f32 %v3336, 1.0614054
        %v3401 = vmul.f32 %v3337, 1.0614054
        %v3402 = vmul.f32 %v3338, 1.0614054
        %v3403 = vmul.f32 %v3339, 1.0614054
        %v3404 = vmul.f32 %v3340, 1.0614054
        %v3405 = vmul.f32 %v3341, 1.0614054
        %v3406 = vadd.f32 %v3342, -1.4531521
        %v3407 = vadd.f32 %v3343, -1.4531521
        %v3408 = vadd.f32 %v3344, -1.4531521
        %v3409 = vadd.f32 %v3345, -1.4531521
        %v3410 = vadd.f32 %v3346, -1.4531521
        %v3411 = vadd.f32 %v3347, -1.4531521
        %v3412 = vadd.f32 %v3348, -1.4531521
        %v3413 = vadd.f32 %v3349, -1.4531521
        %v3414 = vadd.f32 %v3350, -1.4531521
        %v3415 = vadd.f32 %v3351, -1.4531521
        %v3416 = vadd.f32 %v3352, -1.4531521
        %v3417 = vadd.f32 %v3353, -1.4531521
        %v3418 = vadd.f32 %v3354, -1.4531521
        %v3419 = vadd.f32 %v3355, -1.4531521
        %v3420 = vadd.f32 %v3356, -1.4531521
        %v3421 = vadd.f32 %v3357, -1.4531521
        %v3422 = vadd.f32 %v3358, -1.4531521
        %v3423 = vadd.f32 %v3359, -1.4531521
        %v3424 = vadd.f32 %v3360, -1.4531521
        %v3425 = vadd.f32 %v3361, -1.4531521
        %v3426 = vadd.f32 %v3362, -1.4531521
        %v3427 = vadd.f32 %v3363, -1.4531521
        %v3428 = vadd.f32 %v3364, -1.4531521
        %v3429 = vadd.f32 %v3365, -1.4531521
        %v3430 = vadd.f32 %v3366, -1.4531521
        %v3431 = vadd.f32 %v3367, -1.4531521
        %v3432 = vadd.f32 %v3368, -1.4531521
        %v3433 = vadd.f32 %v3369, -1.4531521
        %v3434 = vadd.f32 %v3370, -1.4531521
        %v3435 = vadd.f32 %v3371, -1.4531521
        %v3436 = vadd.f32 %v3372, -1.4531521
        %v3437 = vadd.f32 %v3373, -1.4531521
        %v3438 = vadd.f32 %v3374, -1.4531521
        %v3439 = vadd.f32 %v3375, -1.4531521
        %v3440 = vadd.f32 %v3376, -1.4531521
        %v3441 = vadd.f32 %v3377, -1.4531521
        %v3442 = vadd.f32 %v3378, -1.4531521
        %v3443 = vadd.f32 %v3379, -1.4531521
        %v3444 = vadd.f32 %v3380, -1.4531521
        %v3445 = vadd.f32 %v3381, -1.4531521
        %v3446 = vadd.f32 %v3382, -1.4531521
        %v3447 = vadd.f32 %v3383, -1.4531521
        %v3448 = vadd.f32 %v3384, -1.4531521
        %v3449 = vadd.f32 %v3385, -1.4531521
        %v3450 = vadd.f32 %v3386, -1.4531521
        %v3451 = vadd.f32 %v3387, -1.4531521
        %v3452 = vadd.f32 %v3388, -1.4531521
        %v3453 = vadd.f32 %v3389, -1.4531521
        %v3454 = vadd.f32 %v3390, -1.4531521
        %v3455 = vadd.f32 %v3391, -1.4531521
        %v3456 = vadd.f32 %v3392, -1.4531521
        %v3457 = vadd.f32 %v3393, -1.4531521
        %v3458 = vadd.f32 %v3394, -1.4531521
        %v3459 = vadd.f32 %v3395, -1.4531521
        %v3460 = vadd.f32 %v3396, -1.4531521
        %v3461 = vadd.f32 %v3397, -1.4531521
        %v3462 = vadd.f32 %v3398, -1.4531521
        %v3463 = vadd.f32 %v3399, -1.4531521
        %v3464 = vadd.f32 %v3400, -1.4531521
        %v3465 = vadd.f32 %v3401, -1.4531521
        %v3466 = vadd.f32 %v3402, -1.4531521
        %v3467 = vadd.f32 %v3403, -1.4531521
        %v3468 = vadd.f32 %v3404, -1.4531521
        %v3469 = vadd.f32 %v3405, -1.4531521
        %v3470 = vmul.f32 %v3406, %v3278
        %v3471 = vmul.f32 %v3407, %v3279
        %v3472 = vmul.f32 %v3408, %v3280
        %v3473 = vmul.f32 %v3409, %v3281
        %v3474 = vmul.f32 %v3410, %v3282
        %v3475 = vmul.f32 %v3411, %v3283
        %v3476 = vmul.f32 %v3412, %v3284
        %v3477 = vmul.f32 %v3413, %v3285
        %v3478 = vmul.f32 %v3414, %v3286
        %v3479 = vmul.f32 %v3415, %v3287
        %v3480 = vmul.f32 %v3416, %v3288
        %v3481 = vmul.f32 %v3417, %v3289
        %v3482 = vmul.f32 %v3418, %v3290
        %v3483 = vmul.f32 %v3419, %v3291
        %v3484 = vmul.f32 %v3420, %v3292
        %v3485 = vmul.f32 %v3421, %v3293
        %v3486 = vmul.f32 %v3422, %v3294
        %v3487 = vmul.f32 %v3423, %v3295
        %v3488 = vmul.f32 %v3424, %v3296
        %v3489 = vmul.f32 %v3425, %v3297
        %v3490 = vmul.f32 %v3426, %v3298
        %v3491 = vmul.f32 %v3427, %v3299
        %v3492 = vmul.f32 %v3428, %v3300
        %v3493 = vmul.f32 %v3429, %v3301
        %v3494 = vmul.f32 %v3430, %v3302
        %v3495 = vmul.f32 %v3431, %v3303
        %v3496 = vmul.f32 %v3432, %v3304
        %v3497 = vmul.f32 %v3433, %v3305
        %v3498 = vmul.f32 %v3434, %v3306
        %v3499 = vmul.f32 %v3435, %v3307
        %v3500 = vmul.f32 %v3436, %v3308
        %v3501 = vmul.f32 %v3437, %v3309
        %v3502 = vmul.f32 %v3438, %v3310
        %v3503 = vmul.f32 %v3439, %v3311
        %v3504 = vmul.f32 %v3440, %v3312
        %v3505 = vmul.f32 %v3441, %v3313
        %v3506 = vmul.f32 %v3442, %v3314
        %v3507 = vmul.f32 %v3443, %v3315
        %v3508 = vmul.f32 %v3444, %v3316
        %v3509 = vmul.f32 %v3445, %v3317
        %v3510 = vmul.f32 %v3446, %v3318
        %v3511 = vmul.f32 %v3447, %v3319
        %v3512 = vmul.f32 %v3448, %v3320
        %v3513 = vmul.f32 %v3449, %v3321
        %v3514 = vmul.f32 %v3450, %v3322
        %v3515 = vmul.f32 %v3451, %v3323
        %v3516 = vmul.f32 %v3452, %v3324
        %v3517 = vmul.f32 %v3453, %v3325
        %v3518 = vmul.f32 %v3454, %v3326
        %v3519 = vmul.f32 %v3455, %v3327
        %v3520 = vmul.f32 %v3456, %v3328
        %v3521 = vmul.f32 %v3457, %v3329
        %v3522 = vmul.f32 %v3458, %v3330
        %v3523 = vmul.f32 %v3459, %v3331
        %v3524 = vmul.f32 %v3460, %v3332
        %v3525 = vmul.f32 %v3461, %v3333
        %v3526 = vmul.f32 %v3462, %v3334
        %v3527 = vmul.f32 %v3463, %v3335
        %v3528 = vmul.f32 %v3464, %v3336
        %v3529 = vmul.f32 %v3465, %v3337
        %v3530 = vmul.f32 %v3466, %v3338
        %v3531 = vmul.f32 %v3467, %v3339
        %v3532 = vmul.f32 %v3468, %v3340
        %v3533 = vmul.f32 %v3469, %v3341
        %v3534 = vadd.f32 %v3470, 1.4214138
        %v3535 = vadd.f32 %v3471, 1.4214138
        %v3536 = vadd.f32 %v3472, 1.4214138
        %v3537 = vadd.f32 %v3473, 1.4214138
        %v3538 = vadd.f32 %v3474, 1.4214138
        %v3539 = vadd.f32 %v3475, 1.4214138
        %v3540 = vadd.f32 %v3476, 1.4214138
        %v3541 = vadd.f32 %v3477, 1.4214138
        %v3542 = vadd.f32 %v3478, 1.4214138
        %v3543 = vadd.f32 %v3479, 1.4214138
        %v3544 = vadd.f32 %v3480, 1.4214138
        %v3545 = vadd.f32 %v3481, 1.4214138
        %v3546 = vadd.f32 %v3482, 1.4214138
        %v3547 = vadd.f32 %v3483, 1.4214138
        %v3548 = vadd.f32 %v3484, 1.4214138
        %v3549 = vadd.f32 %v3485, 1.4214138
        %v3550 = vadd.f32 %v3486, 1.4214138
        %v3551 = vadd.f32 %v3487, 1.4214138
        %v3552 = vadd.f32 %v3488, 1.4214138
        %v3553 = vadd.f32 %v3489, 1.4214138
        %v3554 = vadd.f32 %v3490, 1.4214138
        %v3555 = vadd.f32 %v3491, 1.4214138
        %v3556 = vadd.f32 %v3492, 1.4214138
        %v3557 = vadd.f32 %v3493, 1.4214138
        %v3558 = vadd.f32 %v3494, 1.4214138
        %v3559 = vadd.f32 %v3495, 1.4214138
        %v3560 = vadd.f32 %v3496, 1.4214138
        %v3561 = vadd.f32 %v3497, 1.4214138
        %v3562 = vadd.f32 %v3498, 1.4214138
        %v3563 = vadd.f32 %v3499, 1.4214138
        %v3564 = vadd.f32 %v3500, 1.4214138
        %v3565 = vadd.f32 %v3501, 1.4214138
        %v3566 = vadd.f32 %v3502, 1.4214138
        %v3567 = vadd.f32 %v3503, 1.4214138
        %v3568 = vadd.f32 %v3504, 1.4214138
        %v3569 = vadd.f32 %v3505, 1.4214138
        %v3570 = vadd.f32 %v3506, 1.4214138
        %v3571 = vadd.f32 %v3507, 1.4214138
        %v3572 = vadd.f32 %v3508, 1.4214138
        %v3573 = vadd.f32 %v3509, 1.4214138
        %v3574 = vadd.f32 %v3510, 1.4214138
        %v3575 = vadd.f32 %v3511, 1.4214138
        %v3576 = vadd.f32 %v3512, 1.4214138
        %v3577 = vadd.f32 %v3513, 1.4214138
        %v3578 = vadd.f32 %v3514, 1.4214138
        %v3579 = vadd.f32 %v3515, 1.4214138
        %v3580 = vadd.f32 %v3516, 1.4214138
        %v3581 = vadd.f32 %v3517, 1.4214138
        %v3582 = vadd.f32 %v3518, 1.4214138
        %v3583 = vadd.f32 %v3519, 1.4214138
        %v3584 = vadd.f32 %v3520, 1.4214138
        %v3585 = vadd.f32 %v3521, 1.4214138
        %v3586 = vadd.f32 %v3522, 1.4214138
        %v3587 = vadd.f32 %v3523, 1.4214138
        %v3588 = vadd.f32 %v3524, 1.4214138
        %v3589 = vadd.f32 %v3525, 1.4214138
        %v3590 = vadd.f32 %v3526, 1.4214138
        %v3591 = vadd.f32 %v3527, 1.4214138
        %v3592 = vadd.f32 %v3528, 1.4214138
        %v3593 = vadd.f32 %v3529, 1.4214138
        %v3594 = vadd.f32 %v3530, 1.4214138
        %v3595 = vadd.f32 %v3531, 1.4214138
        %v3596 = vadd.f32 %v3532, 1.4214138
        %v3597 = vadd.f32 %v3533, 1.4214138
        %v3598 = vmul.f32 %v3534, %v3278
        %v3599 = vmul.f32 %v3535, %v3279
        %v3600 = vmul.f32 %v3536, %v3280
        %v3601 = vmul.f32 %v3537, %v3281
        %v3602 = vmul.f32 %v3538, %v3282
        %v3603 = vmul.f32 %v3539, %v3283
        %v3604 = vmul.f32 %v3540, %v3284
        %v3605 = vmul.f32 %v3541, %v3285
        %v3606 = vmul.f32 %v3542, %v3286
        %v3607 = vmul.f32 %v3543, %v3287
        %v3608 = vmul.f32 %v3544, %v3288
        %v3609 = vmul.f32 %v3545, %v3289
        %v3610 = vmul.f32 %v3546, %v3290
        %v3611 = vmul.f32 %v3547, %v3291
        %v3612 = vmul.f32 %v3548, %v3292
        %v3613 = vmul.f32 %v3549, %v3293
        %v3614 = vmul.f32 %v3550, %v3294
        %v3615 = vmul.f32 %v3551, %v3295
        %v3616 = vmul.f32 %v3552, %v3296
        %v3617 = vmul.f32 %v3553, %v3297
        %v3618 = vmul.f32 %v3554, %v3298
        %v3619 = vmul.f32 %v3555, %v3299
        %v3620 = vmul.f32 %v3556, %v3300
        %v3621 = vmul.f32 %v3557, %v3301
        %v3622 = vmul.f32 %v3558, %v3302
        %v3623 = vmul.f32 %v3559, %v3303
        %v3624 = vmul.f32 %v3560, %v3304
        %v3625 = vmul.f32 %v3561, %v3305
        %v3626 = vmul.f32 %v3562, %v3306
        %v3627 = vmul.f32 %v3563, %v3307
        %v3628 = vmul.f32 %v3564, %v3308
        %v3629 = vmul.f32 %v3565, %v3309
        %v3630 = vmul.f32 %v3566, %v3310
        %v3631 = vmul.f32 %v3567, %v3311
        %v3632 = vmul.f32 %v3568, %v3312
        %v3633 = vmul.f32 %v3569, %v3313
        %v3634 = vmul.f32 %v3570, %v3314
        %v3635 = vmul.f32 %v3571, %v3315
        %v3636 = vmul.f32 %v3572, %v3316
        %v3637 = vmul.f32 %v3573, %v3317
        %v3638 = vmul.f32 %v3574, %v3318
        %v3639 = vmul.f32 %v3575, %v3319
        %v3640 = vmul.f32 %v3576, %v3320
        %v3641 = vmul.f32 %v3577, %v3321
        %v3642 = vmul.f32 %v3578, %v3322
        %v3643 = vmul.f32 %v3579, %v3323
        %v3644 = vmul.f32 %v3580, %v3324
        %v3645 = vmul.f32 %v3581, %v3325
        %v3646 = vmul.f32 %v3582, %v3326
        %v3647 = vmul.f32 %v3583, %v3327
        %v3648 = vmul.f32 %v3584, %v3328
        %v3649 = vmul.f32 %v3585, %v3329
        %v3650 = vmul.f32 %v3586, %v3330
        %v3651 = vmul.f32 %v3587, %v3331
        %v3652 = vmul.f32 %v3588, %v3332
        %v3653 = vmul.f32 %v3589, %v3333
        %v3654 = vmul.f32 %v3590, %v3334
        %v3655 = vmul.f32 %v3591, %v3335
        %v3656 = vmul.f32 %v3592, %v3336
        %v3657 = vmul.f32 %v3593, %v3337
        %v3658 = vmul.f32 %v3594, %v3338
        %v3659 = vmul.f32 %v3595, %v3339
        %v3660 = vmul.f32 %v3596, %v3340
        %v3661 = vmul.f32 %v3597, %v3341
        %v3662 = vadd.f32 %v3598, -0.28449672
        %v3663 = vadd.f32 %v3599, -0.28449672
        %v3664 = vadd.f32 %v3600, -0.28449672
        %v3665 = vadd.f32 %v3601, -0.28449672
        %v3666 = vadd.f32 %v3602, -0.28449672
        %v3667 = vadd.f32 %v3603, -0.28449672
        %v3668 = vadd.f32 %v3604, -0.28449672
        %v3669 = vadd.f32 %v3605, -0.28449672
        %v3670 = vadd.f32 %v3606, -0.28449672
        %v3671 = vadd.f32 %v3607, -0.28449672
        %v3672 = vadd.f32 %v3608, -0.28449672
        %v3673 = vadd.f32 %v3609, -0.28449672
        %v3674 = vadd.f32 %v3610, -0.28449672
        %v3675 = vadd.f32 %v3611, -0.28449672
        %v3676 = vadd.f32 %v3612, -0.28449672
        %v3677 = vadd.f32 %v3613, -0.28449672
        %v3678 = vadd.f32 %v3614, -0.28449672
        %v3679 = vadd.f32 %v3615, -0.28449672
        %v3680 = vadd.f32 %v3616, -0.28449672
        %v3681 = vadd.f32 %v3617, -0.28449672
        %v3682 = vadd.f32 %v3618, -0.28449672
        %v3683 = vadd.f32 %v3619, -0.28449672
        %v3684 = vadd.f32 %v3620, -0.28449672
        %v3685 = vadd.f32 %v3621, -0.28449672
        %v3686 = vadd.f32 %v3622, -0.28449672
        %v3687 = vadd.f32 %v3623, -0.28449672
        %v3688 = vadd.f32 %v3624, -0.28449672
        %v3689 = vadd.f32 %v3625, -0.28449672
        %v3690 = vadd.f32 %v3626, -0.28449672
        %v3691 = vadd.f32 %v3627, -0.28449672
        %v3692 = vadd.f32 %v3628, -0.28449672
        %v3693 = vadd.f32 %v3629, -0.28449672
        %v3694 = vadd.f32 %v3630, -0.28449672
        %v3695 = vadd.f32 %v3631, -0.28449672
        %v3696 = vadd.f32 %v3632, -0.28449672
        %v3697 = vadd.f32 %v3633, -0.28449672
        %v3698 = vadd.f32 %v3634, -0.28449672
        %v3699 = vadd.f32 %v3635, -0.28449672
        %v3700 = vadd.f32 %v3636, -0.28449672
        %v3701 = vadd.f32 %v3637, -0.28449672
        %v3702 = vadd.f32 %v3638, -0.28449672
        %v3703 = vadd.f32 %v3639, -0.28449672
        %v3704 = vadd.f32 %v3640, -0.28449672
        %v3705 = vadd.f32 %v3641, -0.28449672
        %v3706 = vadd.f32 %v3642, -0.28449672
        %v3707 = vadd.f32 %v3643, -0.28449672
        %v3708 = vadd.f32 %v3644, -0.28449672
        %v3709 = vadd.f32 %v3645, -0.28449672
        %v3710 = vadd.f32 %v3646, -0.28449672
        %v3711 = vadd.f32 %v3647, -0.28449672
        %v3712 = vadd.f32 %v3648, -0.28449672
        %v3713 = vadd.f32 %v3649, -0.28449672
        %v3714 = vadd.f32 %v3650, -0.28449672
        %v3715 = vadd.f32 %v3651, -0.28449672
        %v3716 = vadd.f32 %v3652, -0.28449672
        %v3717 = vadd.f32 %v3653, -0.28449672
        %v3718 = vadd.f32 %v3654, -0.28449672
        %v3719 = vadd.f32 %v3655, -0.28449672
        %v3720 = vadd.f32 %v3656, -0.28449672
        %v3721 = vadd.f32 %v3657, -0.28449672
        %v3722 = vadd.f32 %v3658, -0.28449672
        %v3723 = vadd.f32 %v3659, -0.28449672
        %v3724 = vadd.f32 %v3660, -0.28449672
        %v3725 = vadd.f32 %v3661, -0.28449672
        %v3726 = vmul.f32 %v3662, %v3278
        %v3727 = vmul.f32 %v3663, %v3279
        %v3728 = vmul.f32 %v3664, %v3280
        %v3729 = vmul.f32 %v3665, %v3281
        %v3730 = vmul.f32 %v3666, %v3282
        %v3731 = vmul.f32 %v3667, %v3283
        %v3732 = vmul.f32 %v3668, %v3284
        %v3733 = vmul.f32 %v3669, %v3285
        %v3734 = vmul.f32 %v3670, %v3286
        %v3735 = vmul.f32 %v3671, %v3287
        %v3736 = vmul.f32 %v3672, %v3288
        %v3737 = vmul.f32 %v3673, %v3289
        %v3738 = vmul.f32 %v3674, %v3290
        %v3739 = vmul.f32 %v3675, %v3291
        %v3740 = vmul.f32 %v3676, %v3292
        %v3741 = vmul.f32 %v3677, %v3293
        %v3742 = vmul.f32 %v3678, %v3294
        %v3743 = vmul.f32 %v3679, %v3295
        %v3744 = vmul.f32 %v3680, %v3296
        %v3745 = vmul.f32 %v3681, %v3297
        %v3746 = vmul.f32 %v3682, %v3298
        %v3747 = vmul.f32 %v3683, %v3299
        %v3748 = vmul.f32 %v3684, %v3300
        %v3749 = vmul.f32 %v3685, %v3301
        %v3750 = vmul.f32 %v3686, %v3302
        %v3751 = vmul.f32 %v3687, %v3303
        %v3752 = vmul.f32 %v3688, %v3304
        %v3753 = vmul.f32 %v3689, %v3305
        %v3754 = vmul.f32 %v3690, %v3306
        %v3755 = vmul.f32 %v3691, %v3307
        %v3756 = vmul.f32 %v3692, %v3308
        %v3757 = vmul.f32 %v3693, %v3309
        %v3758 = vmul.f32 %v3694, %v3310
        %v3759 = vmul.f32 %v3695, %v3311
        %v3760 = vmul.f32 %v3696, %v3312
        %v3761 = vmul.f32 %v3697, %v3313
        %v3762 = vmul.f32 %v3698, %v3314
        %v3763 = vmul.f32 %v3699, %v3315
        %v3764 = vmul.f32 %v3700, %v3316
        %v3765 = vmul.f32 %v3701, %v3317
        %v3766 = vmul.f32 %v3702, %v3318
        %v3767 = vmul.f32 %v3703, %v3319
        %v3768 = vmul.f32 %v3704, %v3320
        %v3769 = vmul.f32 %v3705, %v3321
        %v3770 = vmul.f32 %v3706, %v3322
        %v3771 = vmul.f32 %v3707, %v3323
        %v3772 = vmul.f32 %v3708, %v3324
        %v3773 = vmul.f32 %v3709, %v3325
        %v3774 = vmul.f32 %v3710, %v3326
        %v3775 = vmul.f32 %v3711, %v3327
        %v3776 = vmul.f32 %v3712, %v3328
        %v3777 = vmul.f32 %v3713, %v3329
        %v3778 = vmul.f32 %v3714, %v3330
        %v3779 = vmul.f32 %v3715, %v3331
        %v3780 = vmul.f32 %v3716, %v3332
        %v3781 = vmul.f32 %v3717, %v3333
        %v3782 = vmul.f32 %v3718, %v3334
        %v3783 = vmul.f32 %v3719, %v3335
        %v3784 = vmul.f32 %v3720, %v3336
        %v3785 = vmul.f32 %v3721, %v3337
        %v3786 = vmul.f32 %v3722, %v3338
        %v3787 = vmul.f32 %v3723, %v3339
        %v3788 = vmul.f32 %v3724, %v3340
        %v3789 = vmul.f32 %v3725, %v3341
        %v3790 = vadd.f32 %v3726, 0.2548296
        %v3791 = vadd.f32 %v3727, 0.2548296
        %v3792 = vadd.f32 %v3728, 0.2548296
        %v3793 = vadd.f32 %v3729, 0.2548296
        %v3794 = vadd.f32 %v3730, 0.2548296
        %v3795 = vadd.f32 %v3731, 0.2548296
        %v3796 = vadd.f32 %v3732, 0.2548296
        %v3797 = vadd.f32 %v3733, 0.2548296
        %v3798 = vadd.f32 %v3734, 0.2548296
        %v3799 = vadd.f32 %v3735, 0.2548296
        %v3800 = vadd.f32 %v3736, 0.2548296
        %v3801 = vadd.f32 %v3737, 0.2548296
        %v3802 = vadd.f32 %v3738, 0.2548296
        %v3803 = vadd.f32 %v3739, 0.2548296
        %v3804 = vadd.f32 %v3740, 0.2548296
        %v3805 = vadd.f32 %v3741, 0.2548296
        %v3806 = vadd.f32 %v3742, 0.2548296
        %v3807 = vadd.f32 %v3743, 0.2548296
        %v3808 = vadd.f32 %v3744, 0.2548296
        %v3809 = vadd.f32 %v3745, 0.2548296
        %v3810 = vadd.f32 %v3746, 0.2548296
        %v3811 = vadd.f32 %v3747, 0.2548296
        %v3812 = vadd.f32 %v3748, 0.2548296
        %v3813 = vadd.f32 %v3749, 0.2548296
        %v3814 = vadd.f32 %v3750, 0.2548296
        %v3815 = vadd.f32 %v3751, 0.2548296
        %v3816 = vadd.f32 %v3752, 0.2548296
        %v3817 = vadd.f32 %v3753, 0.2548296
        %v3818 = vadd.f32 %v3754, 0.2548296
        %v3819 = vadd.f32 %v3755, 0.2548296
        %v3820 = vadd.f32 %v3756, 0.2548296
        %v3821 = vadd.f32 %v3757, 0.2548296
        %v3822 = vadd.f32 %v3758, 0.2548296
        %v3823 = vadd.f32 %v3759, 0.2548296
        %v3824 = vadd.f32 %v3760, 0.2548296
        %v3825 = vadd.f32 %v3761, 0.2548296
        %v3826 = vadd.f32 %v3762, 0.2548296
        %v3827 = vadd.f32 %v3763, 0.2548296
        %v3828 = vadd.f32 %v3764, 0.2548296
        %v3829 = vadd.f32 %v3765, 0.2548296
        %v3830 = vadd.f32 %v3766, 0.2548296
        %v3831 = vadd.f32 %v3767, 0.2548296
        %v3832 = vadd.f32 %v3768, 0.2548296
        %v3833 = vadd.f32 %v3769, 0.2548296
        %v3834 = vadd.f32 %v3770, 0.2548296
        %v3835 = vadd.f32 %v3771, 0.2548296
        %v3836 = vadd.f32 %v3772, 0.2548296
        %v3837 = vadd.f32 %v3773, 0.2548296
        %v3838 = vadd.f32 %v3774, 0.2548296
        %v3839 = vadd.f32 %v3775, 0.2548296
        %v3840 = vadd.f32 %v3776, 0.2548296
        %v3841 = vadd.f32 %v3777, 0.2548296
        %v3842 = vadd.f32 %v3778, 0.2548296
        %v3843 = vadd.f32 %v3779, 0.2548296
        %v3844 = vadd.f32 %v3780, 0.2548296
        %v3845 = vadd.f32 %v3781, 0.2548296
        %v3846 = vadd.f32 %v3782, 0.2548296
        %v3847 = vadd.f32 %v3783, 0.2548296
        %v3848 = vadd.f32 %v3784, 0.2548296
        %v3849 = vadd.f32 %v3785, 0.2548296
        %v3850 = vadd.f32 %v3786, 0.2548296
        %v3851 = vadd.f32 %v3787, 0.2548296
        %v3852 = vadd.f32 %v3788, 0.2548296
        %v3853 = vadd.f32 %v3789, 0.2548296
        %v3854 = vmul.f32 %v3790, %v3278
        %v3855 = vmul.f32 %v3791, %v3279
        %v3856 = vmul.f32 %v3792, %v3280
        %v3857 = vmul.f32 %v3793, %v3281
        %v3858 = vmul.f32 %v3794, %v3282
        %v3859 = vmul.f32 %v3795, %v3283
        %v3860 = vmul.f32 %v3796, %v3284
        %v3861 = vmul.f32 %v3797, %v3285
        %v3862 = vmul.f32 %v3798, %v3286
        %v3863 = vmul.f32 %v3799, %v3287
        %v3864 = vmul.f32 %v3800, %v3288
        %v3865 = vmul.f32 %v3801, %v3289
        %v3866 = vmul.f32 %v3802, %v3290
        %v3867 = vmul.f32 %v3803, %v3291
        %v3868 = vmul.f32 %v3804, %v3292
        %v3869 = vmul.f32 %v3805, %v3293
        %v3870 = vmul.f32 %v3806, %v3294
        %v3871 = vmul.f32 %v3807, %v3295
        %v3872 = vmul.f32 %v3808, %v3296
        %v3873 = vmul.f32 %v3809, %v3297
        %v3874 = vmul.f32 %v3810, %v3298
        %v3875 = vmul.f32 %v3811, %v3299
        %v3876 = vmul.f32 %v3812, %v3300
        %v3877 = vmul.f32 %v3813, %v3301
        %v3878 = vmul.f32 %v3814, %v3302
        %v3879 = vmul.f32 %v3815, %v3303
        %v3880 = vmul.f32 %v3816, %v3304
        %v3881 = vmul.f32 %v3817, %v3305
        %v3882 = vmul.f32 %v3818, %v3306
        %v3883 = vmul.f32 %v3819, %v3307
        %v3884 = vmul.f32 %v3820, %v3308
        %v3885 = vmul.f32 %v3821, %v3309
        %v3886 = vmul.f32 %v3822, %v3310
        %v3887 = vmul.f32 %v3823, %v3311
        %v3888 = vmul.f32 %v3824, %v3312
        %v3889 = vmul.f32 %v3825, %v3313
        %v3890 = vmul.f32 %v3826, %v3314
        %v3891 = vmul.f32 %v3827, %v3315
        %v3892 = vmul.f32 %v3828, %v3316
        %v3893 = vmul.f32 %v3829, %v3317
        %v3894 = vmul.f32 %v3830, %v3318
        %v3895 = vmul.f32 %v3831, %v3319
        %v3896 = vmul.f32 %v3832, %v3320
        %v3897 = vmul.f32 %v3833, %v3321
        %v3898 = vmul.f32 %v3834, %v3322
        %v3899 = vmul.f32 %v3835, %v3323
        %v3900 = vmul.f32 %v3836, %v3324
        %v3901 = vmul.f32 %v3837, %v3325
        %v3902 = vmul.f32 %v3838, %v3326
        %v3903 = vmul.f32 %v3839, %v3327
        %v3904 = vmul.f32 %v3840, %v3328
        %v3905 = vmul.f32 %v3841, %v3329
        %v3906 = vmul.f32 %v3842, %v3330
        %v3907 = vmul.f32 %v3843, %v3331
        %v3908 = vmul.f32 %v3844, %v3332
        %v3909 = vmul.f32 %v3845, %v3333
        %v3910 = vmul.f32 %v3846, %v3334
        %v3911 = vmul.f32 %v3847, %v3335
        %v3912 = vmul.f32 %v3848, %v3336
        %v3913 = vmul.f32 %v3849, %v3337
        %v3914 = vmul.f32 %v3850, %v3338
        %v3915 = vmul.f32 %v3851, %v3339
        %v3916 = vmul.f32 %v3852, %v3340
        %v3917 = vmul.f32 %v3853, %v3341
        %v3918 = vmul.f32 %v3854, %v2703
        %v3919 = vmul.f32 %v3855, %v2705
        %v3920 = vmul.f32 %v3856, %v2707
        %v3921 = vmul.f32 %v3857, %v2709
        %v3922 = vmul.f32 %v3858, %v2711
        %v3923 = vmul.f32 %v3859, %v2713
        %v3924 = vmul.f32 %v3860, %v2715
        %v3925 = vmul.f32 %v3861, %v2717
        %v3926 = vmul.f32 %v3862, %v2719
        %v3927 = vmul.f32 %v3863, %v2721
        %v3928 = vmul.f32 %v3864, %v2723
        %v3929 = vmul.f32 %v3865, %v2725
        %v3930 = vmul.f32 %v3866, %v2727
        %v3931 = vmul.f32 %v3867, %v2729
        %v3932 = vmul.f32 %v3868, %v2731
        %v3933 = vmul.f32 %v3869, %v2733
        %v3934 = vmul.f32 %v3870, %v2735
        %v3935 = vmul.f32 %v3871, %v2737
        %v3936 = vmul.f32 %v3872, %v2739
        %v3937 = vmul.f32 %v3873, %v2741
        %v3938 = vmul.f32 %v3874, %v2743
        %v3939 = vmul.f32 %v3875, %v2745
        %v3940 = vmul.f32 %v3876, %v2747
        %v3941 = vmul.f32 %v3877, %v2749
        %v3942 = vmul.f32 %v3878, %v2751
        %v3943 = vmul.f32 %v3879, %v2753
        %v3944 = vmul.f32 %v3880, %v2755
        %v3945 = vmul.f32 %v3881, %v2757
        %v3946 = vmul.f32 %v3882, %v2759
        %v3947 = vmul.f32 %v3883, %v2761
        %v3948 = vmul.f32 %v3884, %v2763
        %v3949 = vmul.f32 %v3885, %v2765
        %v3950 = vmul.f32 %v3886, %v2767
        %v3951 = vmul.f32 %v3887, %v2769
        %v3952 = vmul.f32 %v3888, %v2771
        %v3953 = vmul.f32 %v3889, %v2773
        %v3954 = vmul.f32 %v3890, %v2775
        %v3955 = vmul.f32 %v3891, %v2777
        %v3956 = vmul.f32 %v3892, %v2779
        %v3957 = vmul.f32 %v3893, %v2781
        %v3958 = vmul.f32 %v3894, %v2783
        %v3959 = vmul.f32 %v3895, %v2785
        %v3960 = vmul.f32 %v3896, %v2787
        %v3961 = vmul.f32 %v3897, %v2789
        %v3962 = vmul.f32 %v3898, %v2791
        %v3963 = vmul.f32 %v3899, %v2793
        %v3964 = vmul.f32 %v3900, %v2795
        %v3965 = vmul.f32 %v3901, %v2797
        %v3966 = vmul.f32 %v3902, %v2799
        %v3967 = vmul.f32 %v3903, %v2801
        %v3968 = vmul.f32 %v3904, %v2803
        %v3969 = vmul.f32 %v3905, %v2805
        %v3970 = vmul.f32 %v3906, %v2807
        %v3971 = vmul.f32 %v3907, %v2809
        %v3972 = vmul.f32 %v3908, %v2811
        %v3973 = vmul.f32 %v3909, %v2813
        %v3974 = vmul.f32 %v3910, %v2815
        %v3975 = vmul.f32 %v3911, %v2817
        %v3976 = vmul.f32 %v3912, %v2819
        %v3977 = vmul.f32 %v3913, %v2821
        %v3978 = vmul.f32 %v3914, %v2823
        %v3979 = vmul.f32 %v3915, %v2825
        %v3980 = vmul.f32 %v3916, %v2827
        %v3981 = vmul.f32 %v3917, %v2829
        %v3982 = vsub.f32 1.0, %v3918
        %v3983 = vsub.f32 1.0, %v3919
        %v3984 = vsub.f32 1.0, %v3920
        %v3985 = vsub.f32 1.0, %v3921
        %v3986 = vsub.f32 1.0, %v3922
        %v3987 = vsub.f32 1.0, %v3923
        %v3988 = vsub.f32 1.0, %v3924
        %v3989 = vsub.f32 1.0, %v3925
        %v3990 = vsub.f32 1.0, %v3926
        %v3991 = vsub.f32 1.0, %v3927
        %v3992 = vsub.f32 1.0, %v3928
        %v3993 = vsub.f32 1.0, %v3929
        %v3994 = vsub.f32 1.0, %v3930
        %v3995 = vsub.f32 1.0, %v3931
        %v3996 = vsub.f32 1.0, %v3932
        %v3997 = vsub.f32 1.0, %v3933
        %v3998 = vsub.f32 1.0, %v3934
        %v3999 = vsub.f32 1.0, %v3935
        %v4000 = vsub.f32 1.0, %v3936
        %v4001 = vsub.f32 1.0, %v3937
        %v4002 = vsub.f32 1.0, %v3938
        %v4003 = vsub.f32 1.0, %v3939
        %v4004 = vsub.f32 1.0, %v3940
        %v4005 = vsub.f32 1.0, %v3941
        %v4006 = vsub.f32 1.0, %v3942
        %v4007 = vsub.f32 1.0, %v3943
        %v4008 = vsub.f32 1.0, %v3944
        %v4009 = vsub.f32 1.0, %v3945
        %v4010 = vsub.f32 1.0, %v3946
        %v4011 = vsub.f32 1.0, %v3947
        %v4012 = vsub.f32 1.0, %v3948
        %v4013 = vsub.f32 1.0, %v3949
        %v4014 = vsub.f32 1.0, %v3950
        %v4015 = vsub.f32 1.0, %v3951
        %v4016 = vsub.f32 1.0, %v3952
        %v4017 = vsub.f32 1.0, %v3953
        %v4018 = vsub.f32 1.0, %v3954
        %v4019 = vsub.f32 1.0, %v3955
        %v4020 = vsub.f32 1.0, %v3956
        %v4021 = vsub.f32 1.0, %v3957
        %v4022 = vsub.f32 1.0, %v3958
        %v4023 = vsub.f32 1.0, %v3959
        %v4024 = vsub.f32 1.0, %v3960
        %v4025 = vsub.f32 1.0, %v3961
        %v4026 = vsub.f32 1.0, %v3962
        %v4027 = vsub.f32 1.0, %v3963
        %v4028 = vsub.f32 1.0, %v3964
        %v4029 = vsub.f32 1.0, %v3965
        %v4030 = vsub.f32 1.0, %v3966
        %v4031 = vsub.f32 1.0, %v3967
        %v4032 = vsub.f32 1.0, %v3968
        %v4033 = vsub.f32 1.0, %v3969
        %v4034 = vsub.f32 1.0, %v3970
        %v4035 = vsub.f32 1.0, %v3971
        %v4036 = vsub.f32 1.0, %v3972
        %v4037 = vsub.f32 1.0, %v3973
        %v4038 = vsub.f32 1.0, %v3974
        %v4039 = vsub.f32 1.0, %v3975
        %v4040 = vsub.f32 1.0, %v3976
        %v4041 = vsub.f32 1.0, %v3977
        %v4042 = vsub.f32 1.0, %v3978
        %v4043 = vsub.f32 1.0, %v3979
        %v4044 = vsub.f32 1.0, %v3980
        %v4045 = vsub.f32 1.0, %v3981
        %v4046 = vmul.f32 %v2894, %v3982
        %v4047 = vmul.f32 %v2895, %v3983
        %v4048 = vmul.f32 %v2896, %v3984
        %v4049 = vmul.f32 %v2897, %v3985
        %v4050 = vmul.f32 %v2898, %v3986
        %v4051 = vmul.f32 %v2899, %v3987
        %v4052 = vmul.f32 %v2900, %v3988
        %v4053 = vmul.f32 %v2901, %v3989
        %v4054 = vmul.f32 %v2902, %v3990
        %v4055 = vmul.f32 %v2903, %v3991
        %v4056 = vmul.f32 %v2904, %v3992
        %v4057 = vmul.f32 %v2905, %v3993
        %v4058 = vmul.f32 %v2906, %v3994
        %v4059 = vmul.f32 %v2907, %v3995
        %v4060 = vmul.f32 %v2908, %v3996
        %v4061 = vmul.f32 %v2909, %v3997
        %v4062 = vmul.f32 %v2910, %v3998
        %v4063 = vmul.f32 %v2911, %v3999
        %v4064 = vmul.f32 %v2912, %v4000
        %v4065 = vmul.f32 %v2913, %v4001
        %v4066 = vmul.f32 %v2914, %v4002
        %v4067 = vmul.f32 %v2915, %v4003
        %v4068 = vmul.f32 %v2916, %v4004
        %v4069 = vmul.f32 %v2917, %v4005
        %v4070 = vmul.f32 %v2918, %v4006
        %v4071 = vmul.f32 %v2919, %v4007
        %v4072 = vmul.f32 %v2920, %v4008
        %v4073 = vmul.f32 %v2921, %v4009
        %v4074 = vmul.f32 %v2922, %v4010
        %v4075 = vmul.f32 %v2923, %v4011
        %v4076 = vmul.f32 %v2924, %v4012
        %v4077 = vmul.f32 %v2925, %v4013
        %v4078 = vmul.f32 %v2926, %v4014
        %v4079 = vmul.f32 %v2927, %v4015
        %v4080 = vmul.f32 %v2928, %v4016
        %v4081 = vmul.f32 %v2929, %v4017
        %v4082 = vmul.f32 %v2930, %v4018
        %v4083 = vmul.f32 %v2931, %v4019
        %v4084 = vmul.f32 %v2932, %v4020
        %v4085 = vmul.f32 %v2933, %v4021
        %v4086 = vmul.f32 %v2934, %v4022
        %v4087 = vmul.f32 %v2935, %v4023
        %v4088 = vmul.f32 %v2936, %v4024
        %v4089 = vmul.f32 %v2937, %v4025
        %v4090 = vmul.f32 %v2938, %v4026
        %v4091 = vmul.f32 %v2939, %v4027
        %v4092 = vmul.f32 %v2940, %v4028
        %v4093 = vmul.f32 %v2941, %v4029
        %v4094 = vmul.f32 %v2942, %v4030
        %v4095 = vmul.f32 %v2943, %v4031
        %v4096 = vmul.f32 %v2944, %v4032
        %v4097 = vmul.f32 %v2945, %v4033
        %v4098 = vmul.f32 %v2946, %v4034
        %v4099 = vmul.f32 %v2947, %v4035
        %v4100 = vmul.f32 %v2948, %v4036
        %v4101 = vmul.f32 %v2949, %v4037
        %v4102 = vmul.f32 %v2950, %v4038
        %v4103 = vmul.f32 %v2951, %v4039
        %v4104 = vmul.f32 %v2952, %v4040
        %v4105 = vmul.f32 %v2953, %v4041
        %v4106 = vmul.f32 %v2954, %v4042
        %v4107 = vmul.f32 %v2955, %v4043
        %v4108 = vmul.f32 %v2956, %v4044
        %v4109 = vmul.f32 %v2957, %v4045
        %v4110 = vmul.f32 %v2382, 0.5
        %v4111 = vmul.f32 %v2383, 0.5
        %v4112 = vmul.f32 %v2384, 0.5
        %v4113 = vmul.f32 %v2385, 0.5
        %v4114 = vmul.f32 %v2386, 0.5
        %v4115 = vmul.f32 %v2387, 0.5
        %v4116 = vmul.f32 %v2388, 0.5
        %v4117 = vmul.f32 %v2389, 0.5
        %v4118 = vmul.f32 %v2390, 0.5
        %v4119 = vmul.f32 %v2391, 0.5
        %v4120 = vmul.f32 %v2392, 0.5
        %v4121 = vmul.f32 %v2393, 0.5
        %v4122 = vmul.f32 %v2394, 0.5
        %v4123 = vmul.f32 %v2395, 0.5
        %v4124 = vmul.f32 %v2396, 0.5
        %v4125 = vmul.f32 %v2397, 0.5
        %v4126 = vmul.f32 %v2398, 0.5
        %v4127 = vmul.f32 %v2399, 0.5
        %v4128 = vmul.f32 %v2400, 0.5
        %v4129 = vmul.f32 %v2401, 0.5
        %v4130 = vmul.f32 %v2402, 0.5
        %v4131 = vmul.f32 %v2403, 0.5
        %v4132 = vmul.f32 %v2404, 0.5
        %v4133 = vmul.f32 %v2405, 0.5
        %v4134 = vmul.f32 %v2406, 0.5
        %v4135 = vmul.f32 %v2407, 0.5
        %v4136 = vmul.f32 %v2408, 0.5
        %v4137 = vmul.f32 %v2409, 0.5
        %v4138 = vmul.f32 %v2410, 0.5
        %v4139 = vmul.f32 %v2411, 0.5
        %v4140 = vmul.f32 %v2412, 0.5
        %v4141 = vmul.f32 %v2413, 0.5
        %v4142 = vmul.f32 %v2414, 0.5
        %v4143 = vmul.f32 %v2415, 0.5
        %v4144 = vmul.f32 %v2416, 0.5
        %v4145 = vmul.f32 %v2417, 0.5
        %v4146 = vmul.f32 %v2418, 0.5
        %v4147 = vmul.f32 %v2419, 0.5
        %v4148 = vmul.f32 %v2420, 0.5
        %v4149 = vmul.f32 %v2421, 0.5
        %v4150 = vmul.f32 %v2422, 0.5
        %v4151 = vmul.f32 %v2423, 0.5
        %v4152 = vmul.f32 %v2424, 0.5
        %v4153 = vmul.f32 %v2425, 0.5
        %v4154 = vmul.f32 %v2426, 0.5
        %v4155 = vmul.f32 %v2427, 0.5
        %v4156 = vmul.f32 %v2428, 0.5
        %v4157 = vmul.f32 %v2429, 0.5
        %v4158 = vmul.f32 %v2430, 0.5
        %v4159 = vmul.f32 %v2431, 0.5
        %v4160 = vmul.f32 %v2432, 0.5
        %v4161 = vmul.f32 %v2433, 0.5
        %v4162 = vmul.f32 %v2434, 0.5
        %v4163 = vmul.f32 %v2435, 0.5
        %v4164 = vmul.f32 %v2436, 0.5
        %v4165 = vmul.f32 %v2437, 0.5
        %v4166 = vmul.f32 %v2438, 0.5
        %v4167 = vmul.f32 %v2439, 0.5
        %v4168 = vmul.f32 %v2440, 0.5
        %v4169 = vmul.f32 %v2441, 0.5
        %v4170 = vmul.f32 %v2442, 0.5
        %v4171 = vmul.f32 %v2443, 0.5
        %v4172 = vmul.f32 %v2444, 0.5
        %v4173 = vmul.f32 %v2445, 0.5
        %v4174 = vadd.f32 %v4046, 1.0
        %v4175 = vadd.f32 %v4047, 1.0
        %v4176 = vadd.f32 %v4048, 1.0
        %v4177 = vadd.f32 %v4049, 1.0
        %v4178 = vadd.f32 %v4050, 1.0
        %v4179 = vadd.f32 %v4051, 1.0
        %v4180 = vadd.f32 %v4052, 1.0
        %v4181 = vadd.f32 %v4053, 1.0
        %v4182 = vadd.f32 %v4054, 1.0
        %v4183 = vadd.f32 %v4055, 1.0
        %v4184 = vadd.f32 %v4056, 1.0
        %v4185 = vadd.f32 %v4057, 1.0
        %v4186 = vadd.f32 %v4058, 1.0
        %v4187 = vadd.f32 %v4059, 1.0
        %v4188 = vadd.f32 %v4060, 1.0
        %v4189 = vadd.f32 %v4061, 1.0
        %v4190 = vadd.f32 %v4062, 1.0
        %v4191 = vadd.f32 %v4063, 1.0
        %v4192 = vadd.f32 %v4064, 1.0
        %v4193 = vadd.f32 %v4065, 1.0
        %v4194 = vadd.f32 %v4066, 1.0
        %v4195 = vadd.f32 %v4067, 1.0
        %v4196 = vadd.f32 %v4068, 1.0
        %v4197 = vadd.f32 %v4069, 1.0
        %v4198 = vadd.f32 %v4070, 1.0
        %v4199 = vadd.f32 %v4071, 1.0
        %v4200 = vadd.f32 %v4072, 1.0
        %v4201 = vadd.f32 %v4073, 1.0
        %v4202 = vadd.f32 %v4074, 1.0
        %v4203 = vadd.f32 %v4075, 1.0
        %v4204 = vadd.f32 %v4076, 1.0
        %v4205 = vadd.f32 %v4077, 1.0
        %v4206 = vadd.f32 %v4078, 1.0
        %v4207 = vadd.f32 %v4079, 1.0
        %v4208 = vadd.f32 %v4080, 1.0
        %v4209 = vadd.f32 %v4081, 1.0
        %v4210 = vadd.f32 %v4082, 1.0
        %v4211 = vadd.f32 %v4083, 1.0
        %v4212 = vadd.f32 %v4084, 1.0
        %v4213 = vadd.f32 %v4085, 1.0
        %v4214 = vadd.f32 %v4086, 1.0
        %v4215 = vadd.f32 %v4087, 1.0
        %v4216 = vadd.f32 %v4088, 1.0
        %v4217 = vadd.f32 %v4089, 1.0
        %v4218 = vadd.f32 %v4090, 1.0
        %v4219 = vadd.f32 %v4091, 1.0
        %v4220 = vadd.f32 %v4092, 1.0
        %v4221 = vadd.f32 %v4093, 1.0
        %v4222 = vadd.f32 %v4094, 1.0
        %v4223 = vadd.f32 %v4095, 1.0
        %v4224 = vadd.f32 %v4096, 1.0
        %v4225 = vadd.f32 %v4097, 1.0
        %v4226 = vadd.f32 %v4098, 1.0
        %v4227 = vadd.f32 %v4099, 1.0
        %v4228 = vadd.f32 %v4100, 1.0
        %v4229 = vadd.f32 %v4101, 1.0
        %v4230 = vadd.f32 %v4102, 1.0
        %v4231 = vadd.f32 %v4103, 1.0
        %v4232 = vadd.f32 %v4104, 1.0
        %v4233 = vadd.f32 %v4105, 1.0
        %v4234 = vadd.f32 %v4106, 1.0
        %v4235 = vadd.f32 %v4107, 1.0
        %v4236 = vadd.f32 %v4108, 1.0
        %v4237 = vadd.f32 %v4109, 1.0
        %v4238 = vmul.f32 %v4110, %v4174
        %v4239 = vmul.f32 %v4111, %v4175
        %v4240 = vmul.f32 %v4112, %v4176
        %v4241 = vmul.f32 %v4113, %v4177
        %v4242 = vmul.f32 %v4114, %v4178
        %v4243 = vmul.f32 %v4115, %v4179
        %v4244 = vmul.f32 %v4116, %v4180
        %v4245 = vmul.f32 %v4117, %v4181
        %v4246 = vmul.f32 %v4118, %v4182
        %v4247 = vmul.f32 %v4119, %v4183
        %v4248 = vmul.f32 %v4120, %v4184
        %v4249 = vmul.f32 %v4121, %v4185
        %v4250 = vmul.f32 %v4122, %v4186
        %v4251 = vmul.f32 %v4123, %v4187
        %v4252 = vmul.f32 %v4124, %v4188
        %v4253 = vmul.f32 %v4125, %v4189
        %v4254 = vmul.f32 %v4126, %v4190
        %v4255 = vmul.f32 %v4127, %v4191
        %v4256 = vmul.f32 %v4128, %v4192
        %v4257 = vmul.f32 %v4129, %v4193
        %v4258 = vmul.f32 %v4130, %v4194
        %v4259 = vmul.f32 %v4131, %v4195
        %v4260 = vmul.f32 %v4132, %v4196
        %v4261 = vmul.f32 %v4133, %v4197
        %v4262 = vmul.f32 %v4134, %v4198
        %v4263 = vmul.f32 %v4135, %v4199
        %v4264 = vmul.f32 %v4136, %v4200
        %v4265 = vmul.f32 %v4137, %v4201
        %v4266 = vmul.f32 %v4138, %v4202
        %v4267 = vmul.f32 %v4139, %v4203
        %v4268 = vmul.f32 %v4140, %v4204
        %v4269 = vmul.f32 %v4141, %v4205
        %v4270 = vmul.f32 %v4142, %v4206
        %v4271 = vmul.f32 %v4143, %v4207
        %v4272 = vmul.f32 %v4144, %v4208
        %v4273 = vmul.f32 %v4145, %v4209
        %v4274 = vmul.f32 %v4146, %v4210
        %v4275 = vmul.f32 %v4147, %v4211
        %v4276 = vmul.f32 %v4148, %v4212
        %v4277 = vmul.f32 %v4149, %v4213
        %v4278 = vmul.f32 %v4150, %v4214
        %v4279 = vmul.f32 %v4151, %v4215
        %v4280 = vmul.f32 %v4152, %v4216
        %v4281 = vmul.f32 %v4153, %v4217
        %v4282 = vmul.f32 %v4154, %v4218
        %v4283 = vmul.f32 %v4155, %v4219
        %v4284 = vmul.f32 %v4156, %v4220
        %v4285 = vmul.f32 %v4157, %v4221
        %v4286 = vmul.f32 %v4158, %v4222
        %v4287 = vmul.f32 %v4159, %v4223
        %v4288 = vmul.f32 %v4160, %v4224
        %v4289 = vmul.f32 %v4161, %v4225
        %v4290 = vmul.f32 %v4162, %v4226
        %v4291 = vmul.f32 %v4163, %v4227
        %v4292 = vmul.f32 %v4164, %v4228
        %v4293 = vmul.f32 %v4165, %v4229
        %v4294 = vmul.f32 %v4166, %v4230
        %v4295 = vmul.f32 %v4167, %v4231
        %v4296 = vmul.f32 %v4168, %v4232
        %v4297 = vmul.f32 %v4169, %v4233
        %v4298 = vmul.f32 %v4170, %v4234
        %v4299 = vmul.f32 %v4171, %v4235
        %v4300 = vmul.f32 %v4172, %v4236
        %v4301 = vmul.f32 %v4173, %v4237
        %4302 = vst [vmem:[%s429] sm:$0xff] %v4238
        %4303 = vst [vmem:[%s429 + $0x8] sm:$0xff] %v4239
        %4304 = vst [vmem:[%s429 + $0x10] sm:$0xff] %v4240
        %4305 = vst [vmem:[%s429 + $0x18] sm:$0xff] %v4241
        %4306 = vst [vmem:[%s429 + $0x20] sm:$0xff] %v4242
        %4307 = vst [vmem:[%s429 + $0x28] sm:$0xff] %v4243
        %4308 = vst [vmem:[%s429 + $0x30] sm:$0xff] %v4244
        %4309 = vst [vmem:[%s429 + $0x38] sm:$0xff] %v4245
        %4310 = vst [vmem:[%s429 + $0x40] sm:$0xff] %v4246
        %4311 = vst [vmem:[%s429 + $0x48] sm:$0xff] %v4247
        %4312 = vst [vmem:[%s429 + $0x50] sm:$0xff] %v4248
        %4313 = vst [vmem:[%s429 + $0x58] sm:$0xff] %v4249
        %4314 = vst [vmem:[%s429 + $0x60] sm:$0xff] %v4250
        %4315 = vst [vmem:[%s429 + $0x68] sm:$0xff] %v4251
        %4316 = vst [vmem:[%s429 + $0x70] sm:$0xff] %v4252
        %4317 = vst [vmem:[%s429 + $0x78] sm:$0xff] %v4253
        %4318 = vst [vmem:[%s429 + $0x80] sm:$0xff] %v4254
        %4319 = vst [vmem:[%s429 + $0x88] sm:$0xff] %v4255
        %4320 = vst [vmem:[%s429 + $0x90] sm:$0xff] %v4256
        %4321 = vst [vmem:[%s429 + $0x98] sm:$0xff] %v4257
        %4322 = vst [vmem:[%s429 + $0xa0] sm:$0xff] %v4258
        %4323 = vst [vmem:[%s429 + $0xa8] sm:$0xff] %v4259
        %4324 = vst [vmem:[%s429 + $0xb0] sm:$0xff] %v4260
        %4325 = vst [vmem:[%s429 + $0xb8] sm:$0xff] %v4261
        %4326 = vst [vmem:[%s429 + $0xc0] sm:$0xff] %v4262
        %4327 = vst [vmem:[%s429 + $0xc8] sm:$0xff] %v4263
        %4328 = vst [vmem:[%s429 + $0xd0] sm:$0xff] %v4264
        %4329 = vst [vmem:[%s429 + $0xd8] sm:$0xff] %v4265
        %4330 = vst [vmem:[%s429 + $0xe0] sm:$0xff] %v4266
        %4331 = vst [vmem:[%s429 + $0xe8] sm:$0xff] %v4267
        %4332 = vst [vmem:[%s429 + $0xf0] sm:$0xff] %v4268
        %4333 = vst [vmem:[%s429 + $0xf8] sm:$0xff] %v4269
        %4334 = vst [vmem:[%s429 + $0x100] sm:$0xff] %v4270
        %4335 = vst [vmem:[%s429 + $0x108] sm:$0xff] %v4271
        %4336 = vst [vmem:[%s429 + $0x110] sm:$0xff] %v4272
        %4337 = vst [vmem:[%s429 + $0x118] sm:$0xff] %v4273
        %4338 = vst [vmem:[%s429 + $0x120] sm:$0xff] %v4274
        %4339 = vst [vmem:[%s429 + $0x128] sm:$0xff] %v4275
        %4340 = vst [vmem:[%s429 + $0x130] sm:$0xff] %v4276
        %4341 = vst [vmem:[%s429 + $0x138] sm:$0xff] %v4277
        %4342 = vst [vmem:[%s429 + $0x140] sm:$0xff] %v4278
        %4343 = vst [vmem:[%s429 + $0x148] sm:$0xff] %v4279
        %4344 = vst [vmem:[%s429 + $0x150] sm:$0xff] %v4280
        %4345 = vst [vmem:[%s429 + $0x158] sm:$0xff] %v4281
        %4346 = vst [vmem:[%s429 + $0x160] sm:$0xff] %v4282
        %4347 = vst [vmem:[%s429 + $0x168] sm:$0xff] %v4283
        %4348 = vst [vmem:[%s429 + $0x170] sm:$0xff] %v4284
        %4349 = vst [vmem:[%s429 + $0x178] sm:$0xff] %v4285
        %4350 = vst [vmem:[%s429 + $0x180] sm:$0xff] %v4286
        %4351 = vst [vmem:[%s429 + $0x188] sm:$0xff] %v4287
        %4352 = vst [vmem:[%s429 + $0x190] sm:$0xff] %v4288
        %4353 = vst [vmem:[%s429 + $0x198] sm:$0xff] %v4289
        %4354 = vst [vmem:[%s429 + $0x1a0] sm:$0xff] %v4290
        %4355 = vst [vmem:[%s429 + $0x1a8] sm:$0xff] %v4291
        %4356 = vst [vmem:[%s429 + $0x1b0] sm:$0xff] %v4292
        %4357 = vst [vmem:[%s429 + $0x1b8] sm:$0xff] %v4293
        %4358 = vst [vmem:[%s429 + $0x1c0] sm:$0xff] %v4294
        %4359 = vst [vmem:[%s429 + $0x1c8] sm:$0xff] %v4295
        %4360 = vst [vmem:[%s429 + $0x1d0] sm:$0xff] %v4296
        %4361 = vst [vmem:[%s429 + $0x1d8] sm:$0xff] %v4297
        %4362 = vst [vmem:[%s429 + $0x1e0] sm:$0xff] %v4298
        %4363 = vst [vmem:[%s429 + $0x1e8] sm:$0xff] %v4299
        %4364 = vst [vmem:[%s429 + $0x1f0] sm:$0xff] %v4300
        %4365 = vst [vmem:[%s429 + $0x1f8] sm:$0xff] %v4301
        %s4366 = sand.u32 %s199, 1
        %s4367 = scalar_lea.sflag [#allocation4], %s4366
        %s4368 = sand.u32 %s199, 1
        %s4369 = smul.addr %s4368, 512
        %s4370 = scalar_lea.vmem [#allocation14], %s4369
        // Predicated region
        $region77: #{tpu_custom_call.1} parent=47 // pred_check
          %p4371 = pneg %p209
        $region78: #{tpu_custom_call.1} parent=47 // pred_check_branch
          %4373 = sbr.rel (%p4371) target = $region80
        $region79: #{tpu_custom_call.1} parent=47 // pred_region
          %s4374 = smul.u32 64, %s29
          %s4376 = ssub.s32 8192, 8192
          %4377 = vsyncadd %s4367, %s4376
          %s4378 = smul.addr %s4374, 128
          %s4379 = scalar_lea.hbm %s7, %s4378
          %s4380 = sshll.u32 %s4370, 4
          %s4381 = int_to_ptr.vmem [resolvable:$true] %s4380
          %4386 = dma.vmem_to_hbm [thread:$0]  %s4381, 8192, %s4379, %s4367, 128, 128, 8
        $region80: #{tpu_custom_call.1} parent=47 // pred_fallthru
          _
      $region48: #{tpu_custom_call.1} parent=5 // pred_fallthru
        _
      %p4387 = scmp.le.s32.totalorder 2, %s24
      // Predicated region
      $region81: #{tpu_custom_call.1} parent=5 // pred_check
        %p4388 = pneg %p4387
      $region82: #{tpu_custom_call.1} parent=5 // pred_check_branch
        %4390 = sbr.rel (%p4388) target = $region84
      $region83: #{tpu_custom_call.1} parent=5 // pred_region
        %s4391 = ssub.s32 %s24, 2
        // Predicated region
        $region85: #{tpu_custom_call.1} parent=83 // pred_check
          %p4392 = pneg %p215
        $region86: #{tpu_custom_call.1} parent=83 // pred_check_branch
          %4394 = sbr.rel (%p4392) target = $region88
        $region87: #{tpu_custom_call.1} parent=83 // pred_region
          %s4395 = sand.u32 %s200, 1
          %s4396 = scalar_lea.sflag [#allocation4], %s4395
          %s4397 = sand.u32 %s200, 1
          %s4398 = smul.addr %s4397, 512
          %s4399 = scalar_lea.vmem [#allocation14], %s4398
          %4400 = dma.done %s4396, 8192
        $region88: #{tpu_custom_call.1} parent=83 // pred_fallthru
          _
      $region84: #{tpu_custom_call.1} parent=5 // pred_fallthru
        _
    $region6: #{tpu_custom_call.1} parent=1 // loop_footer
      %s28 = sadd.s32 1, %s24
    $region7: #{tpu_custom_call.1} parent=1 // loop_footer_branch
      %23 = sbr.rel target = $region3
    $region8: #{tpu_custom_call.1} parent=1 // loop_exit
      _
    %4401 = vsyncpa [#allocation3], 1
    %s4402 = scalar_lea.sflag [#allocation3], 1
    %4403 = vsyncpa %s4402, 1
    %4404 = vsyncpa [#allocation6], 1
    %s4405 = scalar_lea.sflag [#allocation6], 1
    %4406 = vsyncpa %s4405, 1
    %4407 = vsyncpa [#allocation9], 1
    %4408 = vsyncpa [#allocation12], 1
    %4409 = vsyncpa [#allocation4], 1
    %s4410 = scalar_lea.sflag [#allocation4], 1
    %4411 = vsyncpa %s4410, 1

</llo_original>
